<compile_context>
chip_gen: v7x
topology: tpu7x:2x2x1
jax: 0.10.0
libtpu: 0.0.40
codegen_flags: <defaults>
</compile_context>

<pallas_src>
import functools

import jax
import jax.numpy as jnp
from jax.experimental import pallas as pl
from jax.experimental.pallas import tpu as pltpu


def _vmem_limit_bytes():
    """min(64 MiB, 3/4 of physical VMEM): 64 MiB on v5e/v6e, 48 MiB on v7x."""
    try:
        cap = int(pltpu.get_tpu_info().vmem_capacity_bytes)
    except Exception:  # info unavailable -> conservative default
        cap = 64 * 1024 * 1024
    return min(64 * 1024 * 1024, (cap * 3) // 4)


def _make_conv_stats_kernel(stride, Ho, Wo, Cin, Fp):
    """Per-image 3x3 conv (9 shifted bf16 matmuls, f32 MXU accumulation into a VMEM
    scratch) plus per-image, per-channel sum / sum-of-squares for BN statistics."""

    def kernel(xpad_ref, w_ref, y_ref, sum_ref, ssq_ref, acc_ref):
        acc_ref[...] = jnp.zeros_like(acc_ref)
        for kh in range(3):
            for kw in range(3):
                if stride == 1:
                    # Ref-sliced patch load: only the current window is materialized.
                    patch = xpad_ref[0, kh:kh + Ho, kw:kw + Wo, :]
                else:
                    # TODO(synk): polyphase-split in the wrapper instead of this
                    # in-VMEM strided gather (untested path for the toy shapes).
                    x = xpad_ref[0]
                    patch = jax.lax.slice(
                        x,
                        (kh, kw, 0),
                        (kh + (Ho - 1) * stride + 1, kw + (Wo - 1) * stride + 1, Cin),
                        (stride, stride, 1),
                    )
                acc_ref[...] += jnp.dot(patch.reshape(Ho * Wo, Cin), w_ref[kh, kw],
                                        preferred_element_type=jnp.float32)

        acc = acc_ref[...]
        y_ref[0] = acc.reshape(Ho, Wo, Fp).astype(jnp.bfloat16)   # bf16 intermediate
        # Per-image partial sums (f32) -> batch grid axis stays "parallel".
        sum_ref[...] = acc.sum(axis=0)[None, None, :]
        ssq_ref[...] = (acc * acc).sum(axis=0)[None, None, :]

    return kernel


def _make_bn_lrelu_kernel(count, eps, F):
    """Build BN scale/shift in-kernel from the batch sums, normalize (f32 math),
    LeakyReLU(0.2), and store the unpadded F channels."""
    inv_n = 1.0 / float(count)

    def kernel(y_ref, sum_ref, ssq_ref, gamma_ref, beta_ref, o_ref):
        mean = sum_ref[0] * inv_n                            # (Fp,)
        var = jnp.maximum(ssq_ref[0] * inv_n - mean * mean, 0.0)
        scale = gamma_ref[0] * jax.lax.rsqrt(var + eps)      # rsqrt -> EUP (free slot)
        shift = beta_ref[0] - mean * scale
        z = y_ref[0].astype(jnp.float32) * scale[None, None, :] + shift[None, None, :]
        z = jnp.maximum(z, 0.2 * z)                          # LeakyReLU(0.2), 2 VPU ops
        o_ref[0] = z[:, :, :F]                               # drop padded channels here

    return kernel


@functools.partial(jax.jit, static_argnames=("stride", "channels_last"))
def discriminator_block(x_nchw, w_oihw, bias, gamma, beta, stride, eps=1e-5,
                        channels_last=False):
    # Conv bias is affine and cancels exactly under training-mode BatchNorm; drop it.
    del bias
    N, Cin, H, W = x_nchw.shape
    F = w_oihw.shape[0]
    Ho = (H + 2 - 3) // stride + 1
    Wo = (W + 2 - 3) // stride + 1
    Fp = ((F + 127) // 128) * 128          # lane-dense feature dim for the MXU N-width
    vmem_limit = _vmem_limit_bytes()

    # Layout glue: NCHW -> NHWC, 1-px halo pad, bf16 cast (XLA fuses into one pass).
    x = jnp.transpose(x_nchw, (0, 2, 3, 1))
    xpad = jnp.pad(x, ((0, 0), (1, 1), (1, 1), (0, 0))).astype(jnp.bfloat16)

    # Conv weight: (F, Cin, 3, 3) -> (3, 3, Cin, Fp) bf16, zero-padded output channels.
    w = jnp.transpose(w_oihw, (2, 3, 1, 0))
    w = jnp.pad(w, ((0, 0), (0, 0), (0, 0), (0, Fp - F))).astype(jnp.bfloat16)

    conv_kernel = _make_conv_stats_kernel(stride, Ho, Wo, Cin, Fp)
    y, psum, pssq = pl.pallas_call(
        conv_kernel,
        out_shape=(jax.ShapeDtypeStruct((N, Ho, Wo, Fp), jnp.bfloat16),  # bf16 y
                   jax.ShapeDtypeStruct((N, 1, Fp), jnp.float32),
                   jax.ShapeDtypeStruct((N, 1, Fp), jnp.float32)),
        grid=(N,),
        in_specs=[
            pl.BlockSpec((1, H + 2, W + 2, Cin), lambda n: (n, 0, 0, 0)),
            pl.BlockSpec((3, 3, Cin, Fp), lambda n: (0, 0, 0, 0)),
        ],
        out_specs=(
            pl.BlockSpec((1, Ho, Wo, Fp), lambda n: (n, 0, 0, 0)),
            pl.BlockSpec((1, 1, Fp), lambda n: (n, 0, 0)),
            pl.BlockSpec((1, 1, Fp), lambda n: (n, 0, 0)),
        ),
        scratch_shapes=[pltpu.VMEM((Ho * Wo, Fp), jnp.float32)],
        compiler_params=pltpu.CompilerParams(
            dimension_semantics=("parallel",),
            vmem_limit_bytes=vmem_limit),
    )(xpad, w)

    # Tiny glue: reduce per-image partial sums; pad gamma/beta (zeros on padded channels).
    ssum = psum.sum(axis=0)                                 # (1, Fp)
    ssq = pssq.sum(axis=0)                                  # (1, Fp)
    gamma_p = jnp.pad(gamma.astype(jnp.float32), (0, Fp - F))[None, :]
    beta_p = jnp.pad(beta.astype(jnp.float32), (0, Fp - F))[None, :]

    bn_kernel = _make_bn_lrelu_kernel(N * Ho * Wo, eps, F)
    out_nhwc = pl.pallas_call(
        bn_kernel,
        out_shape=jax.ShapeDtypeStruct((N, Ho, Wo, F), jnp.float32),    # unpadded
        grid=(N,),
        in_specs=[
            pl.BlockSpec((1, Ho, Wo, Fp), lambda n: (n, 0, 0, 0)),
            pl.BlockSpec((1, Fp), lambda n: (0, 0)),
            pl.BlockSpec((1, Fp), lambda n: (0, 0)),
            pl.BlockSpec((1, Fp), lambda n: (0, 0)),
            pl.BlockSpec((1, Fp), lambda n: (0, 0)),
        ],
        out_specs=pl.BlockSpec((1, Ho, Wo, F), lambda n: (n, 0, 0, 0)),
        compiler_params=pltpu.CompilerParams(
            dimension_semantics=("parallel",),
            vmem_limit_bytes=vmem_limit),
    )(y, ssum, ssq, gamma_p, beta_p)

    if channels_last:
        return out_nhwc                                     # chainable NHWC, no epilogue
    return jnp.transpose(out_nhwc, (0, 3, 1, 2))            # module-faithful NCHW


if __name__ == "__main__":
    key = jax.random.PRNGKey(0)
    k1, k2, k3 = jax.random.split(key, 3)

    # Small shapes consistent with the module: DiscriminatorBlock(in_channels=4,
    # features=8, stride=1) applied to x of shape (N=2, C=4, H=16, W=16).
    N, Cin, H, W = 2, 4, 16, 16
    F, stride = 8, 1

    x = jax.random.normal(k1, (N, Cin, H, W), jnp.float32)

    fan_in = Cin * 3 * 3
    bound = 1.0 / (fan_in ** 0.5)
    w = jax.random.uniform(k2, (F, Cin, 3, 3), jnp.float32, -bound, bound)
    b = jax.random.uniform(k3, (F,), jnp.float32, -bound, bound)
    gamma = jnp.ones((F,), jnp.float32)
    beta = jnp.zeros((F,), jnp.float32)

    out = discriminator_block(x, w, b, gamma, beta, stride)
    out = jax.block_until_ready(out)

    # Pure-JAX reference: bf16 conv inputs (as in the kernel), f32 everywhere else;
    # semantics match the PyTorch module in training mode (bias included here — it
    # cancels under BN).  Tolerance 5e-3 accounts for the kernel's bf16 storage of the
    # intermediate conv output (intentional HBM-bandwidth optimization).
    ref_conv = jax.lax.conv_general_dilated(
        x.astype(jnp.bfloat16), w.astype(jnp.bfloat16), (stride, stride),
        ((1, 1), (1, 1)), dimension_numbers=("NCHW", "OIHW", "NCHW"),
        preferred_element_type=jnp.float32) + b[None, :, None, None]
    m = ref_conv.mean(axis=(0, 2, 3), keepdims=True)
    v = ref_conv.var(axis=(0, 2, 3), keepdims=True)
    ref = (ref_conv - m) * jax.lax.rsqrt(v + 1e-5)
    ref = ref * gamma[None, :, None, None] + beta[None, :, None, None]
    ref = jnp.where(ref > 0, ref, 0.2 * ref)

    assert out.shape == ref.shape
    assert jnp.allclose(out, ref, atol=5e-3, rtol=5e-3), "mismatch vs reference"
    print("KERNEL_OK")
</pallas_src>

<mosaic_0001>
module attributes {stable_mosaic.version = 11 : i64} {
  func.func @kernel(%arg0: i32, %arg1: memref<1x18x18x4xbf16, #tpu.memory_space<vmem>>, %arg2: memref<3x3x4x128xbf16, #tpu.memory_space<vmem>>, %arg3: memref<1x16x16x128xbf16, #tpu.memory_space<vmem>>, %arg4: memref<1x1x128xf32, #tpu.memory_space<vmem>>, %arg5: memref<1x1x128xf32, #tpu.memory_space<vmem>>, %arg6: memref<256x128xf32, #tpu.memory_space<vmem>>) attributes {dimension_semantics = [#tpu.dimension_semantics<parallel>], iteration_bounds = array<i64: 2>, scalar_prefetch = 0 : i64, scratch_operands = 1 : i64, tpu.core_type = #tpu.core_type<tc>, window_params = [{transform_indices = @transform_0, window_bounds = array<i64: 1, 18, 18, 4>}, {pipeline_mode = #tpu.pipeline_mode<synchronous>, transform_indices = @transform_1, window_bounds = array<i64: 3, 3, 4, 128>}, {transform_indices = @transform_2, window_bounds = array<i64: 1, 16, 16, 128>}, {transform_indices = @transform_3, window_bounds = array<i64: 1, 1, 128>}, {transform_indices = @transform_4, window_bounds = array<i64: 1, 1, 128>}]} {
    %cst = arith.constant 0.000000e+00 : f32
    %0 = vector.broadcast %cst : f32 to vector<256x128xf32>
    %c0 = arith.constant 0 : index
    %c0_0 = arith.constant 0 : index
    %1 = vector.load %arg6[%c0, %c0_0] : memref<256x128xf32, #tpu.memory_space<vmem>>, vector<256x128xf32>
    tpu.vector_store %arg6[%c0, %c0_0], %0 {strides = array<i32>} : memref<256x128xf32, #tpu.memory_space<vmem>>, vector<256x128xf32>,
    %c0_1 = arith.constant 0 : index
    %c0_2 = arith.constant 0 : index
    %c0_3 = arith.constant 0 : index
    %c0_4 = arith.constant 0 : index
    %2 = vector.load %arg1[%c0_1, %c0_2, %c0_3, %c0_4] : memref<1x18x18x4xbf16, #tpu.memory_space<vmem>>, vector<1x16x16x4xbf16>
    %3 = vector.shape_cast %2 : vector<1x16x16x4xbf16> to vector<16x16x4xbf16>
    %c0_5 = arith.constant 0 : index
    %c0_6 = arith.constant 0 : index
    %4 = vector.load %arg6[%c0_5, %c0_6] : memref<256x128xf32, #tpu.memory_space<vmem>>, vector<256x128xf32>
    %5 = vector.shape_cast %3 : vector<16x16x4xbf16> to vector<256x4xbf16>
    %c0_7 = arith.constant 0 : index
    %c0_8 = arith.constant 0 : index
    %c0_9 = arith.constant 0 : index
    %c0_10 = arith.constant 0 : index
    %6 = vector.load %arg2[%c0_7, %c0_8, %c0_9, %c0_10] : memref<3x3x4x128xbf16, #tpu.memory_space<vmem>>, vector<1x1x4x128xbf16>
    %7 = vector.shape_cast %6 : vector<1x1x4x128xbf16> to vector<4x128xbf16>
    %cst_11 = arith.constant dense<0.000000e+00> : vector<256x128xf32>
    %8 = tpu.matmul %5, %7, %cst_11 {dimension_numbers = #tpu.dot_dimension_numbers<[1], [0], [0], [1], [0, 0, 1, 1], [], []>} : vector<256x4xbf16>, vector<4x128xbf16>, vector<256x128xf32> -> vector<256x128xf32>
    %9 = arith.addf %4, %8 : vector<256x128xf32>
    %c0_12 = arith.constant 0 : index
    %c0_13 = arith.constant 0 : index
    %10 = vector.load %arg6[%c0_12, %c0_13] : memref<256x128xf32, #tpu.memory_space<vmem>>, vector<256x128xf32>
    tpu.vector_store %arg6[%c0_12, %c0_13], %9 {strides = array<i32>} : memref<256x128xf32, #tpu.memory_space<vmem>>, vector<256x128xf32>,
    %c0_14 = arith.constant 0 : index
    %c0_15 = arith.constant 0 : index
    %c1 = arith.constant 1 : index
    %c0_16 = arith.constant 0 : index
    %11 = vector.load %arg1[%c0_14, %c0_15, %c1, %c0_16] : memref<1x18x18x4xbf16, #tpu.memory_space<vmem>>, vector<1x16x16x4xbf16>
    %12 = vector.shape_cast %11 : vector<1x16x16x4xbf16> to vector<16x16x4xbf16>
    %c0_17 = arith.constant 0 : index
    %c0_18 = arith.constant 0 : index
    %13 = vector.load %arg6[%c0_17, %c0_18] : memref<256x128xf32, #tpu.memory_space<vmem>>, vector<256x128xf32>
    %14 = vector.shape_cast %12 : vector<16x16x4xbf16> to vector<256x4xbf16>
    %c0_19 = arith.constant 0 : index
    %c1_20 = arith.constant 1 : index
    %c0_21 = arith.constant 0 : index
    %c0_22 = arith.constant 0 : index
    %15 = vector.load %arg2[%c0_19, %c1_20, %c0_21, %c0_22] : memref<3x3x4x128xbf16, #tpu.memory_space<vmem>>, vector<1x1x4x128xbf16>
    %16 = vector.shape_cast %15 : vector<1x1x4x128xbf16> to vector<4x128xbf16>
    %cst_23 = arith.constant dense<0.000000e+00> : vector<256x128xf32>
    %17 = tpu.matmul %14, %16, %cst_23 {dimension_numbers = #tpu.dot_dimension_numbers<[1], [0], [0], [1], [0, 0, 1, 1], [], []>} : vector<256x4xbf16>, vector<4x128xbf16>, vector<256x128xf32> -> vector<256x128xf32>
    %18 = arith.addf %13, %17 : vector<256x128xf32>
    %c0_24 = arith.constant 0 : index
    %c0_25 = arith.constant 0 : index
    %19 = vector.load %arg6[%c0_24, %c0_25] : memref<256x128xf32, #tpu.memory_space<vmem>>, vector<256x128xf32>
    tpu.vector_store %arg6[%c0_24, %c0_25], %18 {strides = array<i32>} : memref<256x128xf32, #tpu.memory_space<vmem>>, vector<256x128xf32>,
    %c0_26 = arith.constant 0 : index
    %c0_27 = arith.constant 0 : index
    %c2 = arith.constant 2 : index
    %c0_28 = arith.constant 0 : index
    %20 = vector.load %arg1[%c0_26, %c0_27, %c2, %c0_28] : memref<1x18x18x4xbf16, #tpu.memory_space<vmem>>, vector<1x16x16x4xbf16>
    %21 = vector.shape_cast %20 : vector<1x16x16x4xbf16> to vector<16x16x4xbf16>
    %c0_29 = arith.constant 0 : index
    %c0_30 = arith.constant 0 : index
    %22 = vector.load %arg6[%c0_29, %c0_30] : memref<256x128xf32, #tpu.memory_space<vmem>>, vector<256x128xf32>
    %23 = vector.shape_cast %21 : vector<16x16x4xbf16> to vector<256x4xbf16>
    %c0_31 = arith.constant 0 : index
    %c2_32 = arith.constant 2 : index
    %c0_33 = arith.constant 0 : index
    %c0_34 = arith.constant 0 : index
    %24 = vector.load %arg2[%c0_31, %c2_32, %c0_33, %c0_34] : memref<3x3x4x128xbf16, #tpu.memory_space<vmem>>, vector<1x1x4x128xbf16>
    %25 = vector.shape_cast %24 : vector<1x1x4x128xbf16> to vector<4x128xbf16>
    %cst_35 = arith.constant dense<0.000000e+00> : vector<256x128xf32>
    %26 = tpu.matmul %23, %25, %cst_35 {dimension_numbers = #tpu.dot_dimension_numbers<[1], [0], [0], [1], [0, 0, 1, 1], [], []>} : vector<256x4xbf16>, vector<4x128xbf16>, vector<256x128xf32> -> vector<256x128xf32>
    %27 = arith.addf %22, %26 : vector<256x128xf32>
    %c0_36 = arith.constant 0 : index
    %c0_37 = arith.constant 0 : index
    %28 = vector.load %arg6[%c0_36, %c0_37] : memref<256x128xf32, #tpu.memory_space<vmem>>, vector<256x128xf32>
    tpu.vector_store %arg6[%c0_36, %c0_37], %27 {strides = array<i32>} : memref<256x128xf32, #tpu.memory_space<vmem>>, vector<256x128xf32>,
    %c0_38 = arith.constant 0 : index
    %c1_39 = arith.constant 1 : index
    %c0_40 = arith.constant 0 : index
    %c0_41 = arith.constant 0 : index
    %29 = vector.load %arg1[%c0_38, %c1_39, %c0_40, %c0_41] : memref<1x18x18x4xbf16, #tpu.memory_space<vmem>>, vector<1x16x16x4xbf16>
    %30 = vector.shape_cast %29 : vector<1x16x16x4xbf16> to vector<16x16x4xbf16>
    %c0_42 = arith.constant 0 : index
    %c0_43 = arith.constant 0 : index
    %31 = vector.load %arg6[%c0_42, %c0_43] : memref<256x128xf32, #tpu.memory_space<vmem>>, vector<256x128xf32>
    %32 = vector.shape_cast %30 : vector<16x16x4xbf16> to vector<256x4xbf16>
    %c1_44 = arith.constant 1 : index
    %c0_45 = arith.constant 0 : index
    %c0_46 = arith.constant 0 : index
    %c0_47 = arith.constant 0 : index
    %33 = vector.load %arg2[%c1_44, %c0_45, %c0_46, %c0_47] : memref<3x3x4x128xbf16, #tpu.memory_space<vmem>>, vector<1x1x4x128xbf16>
    %34 = vector.shape_cast %33 : vector<1x1x4x128xbf16> to vector<4x128xbf16>
    %cst_48 = arith.constant dense<0.000000e+00> : vector<256x128xf32>
    %35 = tpu.matmul %32, %34, %cst_48 {dimension_numbers = #tpu.dot_dimension_numbers<[1], [0], [0], [1], [0, 0, 1, 1], [], []>} : vector<256x4xbf16>, vector<4x128xbf16>, vector<256x128xf32> -> vector<256x128xf32>
    %36 = arith.addf %31, %35 : vector<256x128xf32>
    %c0_49 = arith.constant 0 : index
    %c0_50 = arith.constant 0 : index
    %37 = vector.load %arg6[%c0_49, %c0_50] : memref<256x128xf32, #tpu.memory_space<vmem>>, vector<256x128xf32>
    tpu.vector_store %arg6[%c0_49, %c0_50], %36 {strides = array<i32>} : memref<256x128xf32, #tpu.memory_space<vmem>>, vector<256x128xf32>,
    %c0_51 = arith.constant 0 : index
    %c1_52 = arith.constant 1 : index
    %c1_53 = arith.constant 1 : index
    %c0_54 = arith.constant 0 : index
    %38 = vector.load %arg1[%c0_51, %c1_52, %c1_53, %c0_54] : memref<1x18x18x4xbf16, #tpu.memory_space<vmem>>, vector<1x16x16x4xbf16>
    %39 = vector.shape_cast %38 : vector<1x16x16x4xbf16> to vector<16x16x4xbf16>
    %c0_55 = arith.constant 0 : index
    %c0_56 = arith.constant 0 : index
    %40 = vector.load %arg6[%c0_55, %c0_56] : memref<256x128xf32, #tpu.memory_space<vmem>>, vector<256x128xf32>
    %41 = vector.shape_cast %39 : vector<16x16x4xbf16> to vector<256x4xbf16>
    %c1_57 = arith.constant 1 : index
    %c1_58 = arith.constant 1 : index
    %c0_59 = arith.constant 0 : index
    %c0_60 = arith.constant 0 : index
    %42 = vector.load %arg2[%c1_57, %c1_58, %c0_59, %c0_60] : memref<3x3x4x128xbf16, #tpu.memory_space<vmem>>, vector<1x1x4x128xbf16>
    %43 = vector.shape_cast %42 : vector<1x1x4x128xbf16> to vector<4x128xbf16>
    %cst_61 = arith.constant dense<0.000000e+00> : vector<256x128xf32>
    %44 = tpu.matmul %41, %43, %cst_61 {dimension_numbers = #tpu.dot_dimension_numbers<[1], [0], [0], [1], [0, 0, 1, 1], [], []>} : vector<256x4xbf16>, vector<4x128xbf16>, vector<256x128xf32> -> vector<256x128xf32>
    %45 = arith.addf %40, %44 : vector<256x128xf32>
    %c0_62 = arith.constant 0 : index
    %c0_63 = arith.constant 0 : index
    %46 = vector.load %arg6[%c0_62, %c0_63] : memref<256x128xf32, #tpu.memory_space<vmem>>, vector<256x128xf32>
    tpu.vector_store %arg6[%c0_62, %c0_63], %45 {strides = array<i32>} : memref<256x128xf32, #tpu.memory_space<vmem>>, vector<256x128xf32>,
    %c0_64 = arith.constant 0 : index
    %c1_65 = arith.constant 1 : index
    %c2_66 = arith.constant 2 : index
    %c0_67 = arith.constant 0 : index
    %47 = vector.load %arg1[%c0_64, %c1_65, %c2_66, %c0_67] : memref<1x18x18x4xbf16, #tpu.memory_space<vmem>>, vector<1x16x16x4xbf16>
    %48 = vector.shape_cast %47 : vector<1x16x16x4xbf16> to vector<16x16x4xbf16>
    %c0_68 = arith.constant 0 : index
    %c0_69 = arith.constant 0 : index
    %49 = vector.load %arg6[%c0_68, %c0_69] : memref<256x128xf32, #tpu.memory_space<vmem>>, vector<256x128xf32>
    %50 = vector.shape_cast %48 : vector<16x16x4xbf16> to vector<256x4xbf16>
    %c1_70 = arith.constant 1 : index
    %c2_71 = arith.constant 2 : index
    %c0_72 = arith.constant 0 : index
    %c0_73 = arith.constant 0 : index
    %51 = vector.load %arg2[%c1_70, %c2_71, %c0_72, %c0_73] : memref<3x3x4x128xbf16, #tpu.memory_space<vmem>>, vector<1x1x4x128xbf16>
    %52 = vector.shape_cast %51 : vector<1x1x4x128xbf16> to vector<4x128xbf16>
    %cst_74 = arith.constant dense<0.000000e+00> : vector<256x128xf32>
    %53 = tpu.matmul %50, %52, %cst_74 {dimension_numbers = #tpu.dot_dimension_numbers<[1], [0], [0], [1], [0, 0, 1, 1], [], []>} : vector<256x4xbf16>, vector<4x128xbf16>, vector<256x128xf32> -> vector<256x128xf32>
    %54 = arith.addf %49, %53 : vector<256x128xf32>
    %c0_75 = arith.constant 0 : index
    %c0_76 = arith.constant 0 : index
    %55 = vector.load %arg6[%c0_75, %c0_76] : memref<256x128xf32, #tpu.memory_space<vmem>>, vector<256x128xf32>
    tpu.vector_store %arg6[%c0_75, %c0_76], %54 {strides = array<i32>} : memref<256x128xf32, #tpu.memory_space<vmem>>, vector<256x128xf32>,
    %c0_77 = arith.constant 0 : index
    %c2_78 = arith.constant 2 : index
    %c0_79 = arith.constant 0 : index
    %c0_80 = arith.constant 0 : index
    %56 = vector.load %arg1[%c0_77, %c2_78, %c0_79, %c0_80] : memref<1x18x18x4xbf16, #tpu.memory_space<vmem>>, vector<1x16x16x4xbf16>
    %57 = vector.shape_cast %56 : vector<1x16x16x4xbf16> to vector<16x16x4xbf16>
    %c0_81 = arith.constant 0 : index
    %c0_82 = arith.constant 0 : index
    %58 = vector.load %arg6[%c0_81, %c0_82] : memref<256x128xf32, #tpu.memory_space<vmem>>, vector<256x128xf32>
    %59 = vector.shape_cast %57 : vector<16x16x4xbf16> to vector<256x4xbf16>
    %c2_83 = arith.constant 2 : index
    %c0_84 = arith.constant 0 : index
    %c0_85 = arith.constant 0 : index
    %c0_86 = arith.constant 0 : index
    %60 = vector.load %arg2[%c2_83, %c0_84, %c0_85, %c0_86] : memref<3x3x4x128xbf16, #tpu.memory_space<vmem>>, vector<1x1x4x128xbf16>
    %61 = vector.shape_cast %60 : vector<1x1x4x128xbf16> to vector<4x128xbf16>
    %cst_87 = arith.constant dense<0.000000e+00> : vector<256x128xf32>
    %62 = tpu.matmul %59, %61, %cst_87 {dimension_numbers = #tpu.dot_dimension_numbers<[1], [0], [0], [1], [0, 0, 1, 1], [], []>} : vector<256x4xbf16>, vector<4x128xbf16>, vector<256x128xf32> -> vector<256x128xf32>
    %63 = arith.addf %58, %62 : vector<256x128xf32>
    %c0_88 = arith.constant 0 : index
    %c0_89 = arith.constant 0 : index
    %64 = vector.load %arg6[%c0_88, %c0_89] : memref<256x128xf32, #tpu.memory_space<vmem>>, vector<256x128xf32>
    tpu.vector_store %arg6[%c0_88, %c0_89], %63 {strides = array<i32>} : memref<256x128xf32, #tpu.memory_space<vmem>>, vector<256x128xf32>,
    %c0_90 = arith.constant 0 : index
    %c2_91 = arith.constant 2 : index
    %c1_92 = arith.constant 1 : index
    %c0_93 = arith.constant 0 : index
    %65 = vector.load %arg1[%c0_90, %c2_91, %c1_92, %c0_93] : memref<1x18x18x4xbf16, #tpu.memory_space<vmem>>, vector<1x16x16x4xbf16>
    %66 = vector.shape_cast %65 : vector<1x16x16x4xbf16> to vector<16x16x4xbf16>
    %c0_94 = arith.constant 0 : index
    %c0_95 = arith.constant 0 : index
    %67 = vector.load %arg6[%c0_94, %c0_95] : memref<256x128xf32, #tpu.memory_space<vmem>>, vector<256x128xf32>
    %68 = vector.shape_cast %66 : vector<16x16x4xbf16> to vector<256x4xbf16>
    %c2_96 = arith.constant 2 : index
    %c1_97 = arith.constant 1 : index
    %c0_98 = arith.constant 0 : index
    %c0_99 = arith.constant 0 : index
    %69 = vector.load %arg2[%c2_96, %c1_97, %c0_98, %c0_99] : memref<3x3x4x128xbf16, #tpu.memory_space<vmem>>, vector<1x1x4x128xbf16>
    %70 = vector.shape_cast %69 : vector<1x1x4x128xbf16> to vector<4x128xbf16>
    %cst_100 = arith.constant dense<0.000000e+00> : vector<256x128xf32>
    %71 = tpu.matmul %68, %70, %cst_100 {dimension_numbers = #tpu.dot_dimension_numbers<[1], [0], [0], [1], [0, 0, 1, 1], [], []>} : vector<256x4xbf16>, vector<4x128xbf16>, vector<256x128xf32> -> vector<256x128xf32>
    %72 = arith.addf %67, %71 : vector<256x128xf32>
    %c0_101 = arith.constant 0 : index
    %c0_102 = arith.constant 0 : index
    %73 = vector.load %arg6[%c0_101, %c0_102] : memref<256x128xf32, #tpu.memory_space<vmem>>, vector<256x128xf32>
    tpu.vector_store %arg6[%c0_101, %c0_102], %72 {strides = array<i32>} : memref<256x128xf32, #tpu.memory_space<vmem>>, vector<256x128xf32>,
    %c0_103 = arith.constant 0 : index
    %c2_104 = arith.constant 2 : index
    %c2_105 = arith.constant 2 : index
    %c0_106 = arith.constant 0 : index
    %74 = vector.load %arg1[%c0_103, %c2_104, %c2_105, %c0_106] : memref<1x18x18x4xbf16, #tpu.memory_space<vmem>>, vector<1x16x16x4xbf16>
    %75 = vector.shape_cast %74 : vector<1x16x16x4xbf16> to vector<16x16x4xbf16>
    %c0_107 = arith.constant 0 : index
    %c0_108 = arith.constant 0 : index
    %76 = vector.load %arg6[%c0_107, %c0_108] : memref<256x128xf32, #tpu.memory_space<vmem>>, vector<256x128xf32>
    %77 = vector.shape_cast %75 : vector<16x16x4xbf16> to vector<256x4xbf16>
    %c2_109 = arith.constant 2 : index
    %c2_110 = arith.constant 2 : index
    %c0_111 = arith.constant 0 : index
    %c0_112 = arith.constant 0 : index
    %78 = vector.load %arg2[%c2_109, %c2_110, %c0_111, %c0_112] : memref<3x3x4x128xbf16, #tpu.memory_space<vmem>>, vector<1x1x4x128xbf16>
    %79 = vector.shape_cast %78 : vector<1x1x4x128xbf16> to vector<4x128xbf16>
    %cst_113 = arith.constant dense<0.000000e+00> : vector<256x128xf32>
    %80 = tpu.matmul %77, %79, %cst_113 {dimension_numbers = #tpu.dot_dimension_numbers<[1], [0], [0], [1], [0, 0, 1, 1], [], []>} : vector<256x4xbf16>, vector<4x128xbf16>, vector<256x128xf32> -> vector<256x128xf32>
    %81 = arith.addf %76, %80 : vector<256x128xf32>
    %c0_114 = arith.constant 0 : index
    %c0_115 = arith.constant 0 : index
    %82 = vector.load %arg6[%c0_114, %c0_115] : memref<256x128xf32, #tpu.memory_space<vmem>>, vector<256x128xf32>
    tpu.vector_store %arg6[%c0_114, %c0_115], %81 {strides = array<i32>} : memref<256x128xf32, #tpu.memory_space<vmem>>, vector<256x128xf32>,
    %c0_116 = arith.constant 0 : index
    %c0_117 = arith.constant 0 : index
    %83 = vector.load %arg6[%c0_116, %c0_117] : memref<256x128xf32, #tpu.memory_space<vmem>>, vector<256x128xf32>
    %84 = vector.shape_cast %83 : vector<256x128xf32> to vector<16x16x128xf32>
    %85 = arith.truncf %84 : vector<16x16x128xf32> to vector<16x16x128xbf16>
    %c0_118 = arith.constant 0 : index
    %c0_119 = arith.constant 0 : index
    %c0_120 = arith.constant 0 : index
    %c0_121 = arith.constant 0 : index
    %86 = vector.load %arg3[%c0_118, %c0_119, %c0_120, %c0_121] : memref<1x16x16x128xbf16, #tpu.memory_space<vmem>>, vector<1x16x16x128xbf16>
    %87 = vector.shape_cast %86 : vector<1x16x16x128xbf16> to vector<16x16x128xbf16>
    %88 = vector.shape_cast %85 : vector<16x16x128xbf16> to vector<1x16x16x128xbf16>
    tpu.vector_store %arg3[%c0_118, %c0_119, %c0_120, %c0_121], %88 {strides = array<i32>} : memref<1x16x16x128xbf16, #tpu.memory_space<vmem>>, vector<1x16x16x128xbf16>,
    %cst_122 = arith.constant dense<0.000000e+00> : vector<128xf32>
    %89 = vector.multi_reduction <add>, %83, %cst_122 [0] : vector<256x128xf32> to vector<128xf32>
    %90 = vector.shape_cast %89 : vector<128xf32> to vector<1x1x128xf32>
    %c0_123 = arith.constant 0 : index
    %c0_124 = arith.constant 0 : index
    %c0_125 = arith.constant 0 : index
    %91 = vector.load %arg4[%c0_123, %c0_124, %c0_125] : memref<1x1x128xf32, #tpu.memory_space<vmem>>, vector<1x1x128xf32>
    tpu.vector_store %arg4[%c0_123, %c0_124, %c0_125], %90 {strides = array<i32>} : memref<1x1x128xf32, #tpu.memory_space<vmem>>, vector<1x1x128xf32>,
    %92 = arith.mulf %83, %83 : vector<256x128xf32>
    %cst_126 = arith.constant dense<0.000000e+00> : vector<128xf32>
    %93 = vector.multi_reduction <add>, %92, %cst_126 [0] : vector<256x128xf32> to vector<128xf32>
    %94 = vector.shape_cast %93 : vector<128xf32> to vector<1x1x128xf32>
    %c0_127 = arith.constant 0 : index
    %c0_128 = arith.constant 0 : index
    %c0_129 = arith.constant 0 : index
    %95 = vector.load %arg5[%c0_127, %c0_128, %c0_129] : memref<1x1x128xf32, #tpu.memory_space<vmem>>, vector<1x1x128xf32>
    tpu.vector_store %arg5[%c0_127, %c0_128, %c0_129], %94 {strides = array<i32>} : memref<1x1x128xf32, #tpu.memory_space<vmem>>, vector<1x1x128xf32>,
    return
  }
  func.func @transform_0(%arg0: i32) -> (i32, i32, i32, i32) {
    %c0_i32 = arith.constant 0 : i32
    %c0_i32_0 = arith.constant 0 : i32
    %c0_i32_1 = arith.constant 0 : i32
    %c0_i32_2 = arith.constant 0 : i32
    return %arg0, %c0_i32, %c0_i32_0, %c0_i32_1 : i32, i32, i32, i32
  }
  func.func @transform_1(%arg0: i32) -> (i32, i32, i32, i32) {
    %c0_i32 = arith.constant 0 : i32
    %c0_i32_0 = arith.constant 0 : i32
    %c0_i32_1 = arith.constant 0 : i32
    %c0_i32_2 = arith.constant 0 : i32
    %c0_i32_3 = arith.constant 0 : i32
    return %c0_i32, %c0_i32_0, %c0_i32_1, %c0_i32_2 : i32, i32, i32, i32
  }
  func.func @transform_2(%arg0: i32) -> (i32, i32, i32, i32) {
    %c0_i32 = arith.constant 0 : i32
    %c0_i32_0 = arith.constant 0 : i32
    %c0_i32_1 = arith.constant 0 : i32
    %c0_i32_2 = arith.constant 0 : i32
    return %arg0, %c0_i32, %c0_i32_0, %c0_i32_1 : i32, i32, i32, i32
  }
  func.func @transform_3(%arg0: i32) -> (i32, i32, i32) {
    %c0_i32 = arith.constant 0 : i32
    %c0_i32_0 = arith.constant 0 : i32
    %c0_i32_1 = arith.constant 0 : i32
    return %arg0, %c0_i32, %c0_i32_0 : i32, i32, i32
  }
  func.func @transform_4(%arg0: i32) -> (i32, i32, i32) {
    %c0_i32 = arith.constant 0 : i32
    %c0_i32_0 = arith.constant 0 : i32
    %c0_i32_1 = arith.constant 0 : i32
    return %arg0, %c0_i32, %c0_i32_0 : i32, i32, i32
  }
}

module attributes {stable_mosaic.version = 11 : i64} {
  func.func @kernel(%arg0: i32, %arg1: memref<1x16x16x128xbf16, #tpu.memory_space<vmem>>, %arg2: memref<1x128xf32, #tpu.memory_space<vmem>>, %arg3: memref<1x128xf32, #tpu.memory_space<vmem>>, %arg4: memref<1x128xf32, #tpu.memory_space<vmem>>, %arg5: memref<1x128xf32, #tpu.memory_space<vmem>>, %arg6: memref<1x16x16x8xf32, #tpu.memory_space<vmem>>) attributes {dimension_semantics = [#tpu.dimension_semantics<parallel>], iteration_bounds = array<i64: 2>, scalar_prefetch = 0 : i64, scratch_operands = 0 : i64, tpu.core_type = #tpu.core_type<tc>, window_params = [{transform_indices = @transform_0, window_bounds = array<i64: 1, 16, 16, 128>}, {pipeline_mode = #tpu.pipeline_mode<synchronous>, transform_indices = @transform_1, window_bounds = array<i64: 1, 128>}, {pipeline_mode = #tpu.pipeline_mode<synchronous>, transform_indices = @transform_2, window_bounds = array<i64: 1, 128>}, {pipeline_mode = #tpu.pipeline_mode<synchronous>, transform_indices = @transform_3, window_bounds = array<i64: 1, 128>}, {pipeline_mode = #tpu.pipeline_mode<synchronous>, transform_indices = @transform_4, window_bounds = array<i64: 1, 128>}, {transform_indices = @transform_5, window_bounds = array<i64: 1, 16, 16, 8>}]} {
    %c0 = arith.constant 0 : index
    %c0_0 = arith.constant 0 : index
    %0 = vector.load %arg2[%c0, %c0_0] : memref<1x128xf32, #tpu.memory_space<vmem>>, vector<1x128xf32>
    %1 = vector.shape_cast %0 : vector<1x128xf32> to vector<128xf32>
    %cst = arith.constant 0.001953125 : f32
    %2 = vector.broadcast %cst : f32 to vector<128xf32>
    %3 = arith.mulf %1, %2 : vector<128xf32>
    %c0_1 = arith.constant 0 : index
    %c0_2 = arith.constant 0 : index
    %4 = vector.load %arg3[%c0_1, %c0_2] : memref<1x128xf32, #tpu.memory_space<vmem>>, vector<1x128xf32>
    %5 = vector.shape_cast %4 : vector<1x128xf32> to vector<128xf32>
    %cst_3 = arith.constant 0.001953125 : f32
    %6 = vector.broadcast %cst_3 : f32 to vector<128xf32>
    %7 = arith.mulf %5, %6 : vector<128xf32>
    %8 = arith.mulf %3, %3 : vector<128xf32>
    %9 = arith.subf %7, %8 : vector<128xf32>
    %cst_4 = arith.constant 0.000000e+00 : f32
    %10 = vector.broadcast %cst_4 : f32 to vector<128xf32>
    %11 = arith.maximumf %9, %10 : vector<128xf32>
    %c0_5 = arith.constant 0 : index
    %c0_6 = arith.constant 0 : index
    %12 = vector.load %arg4[%c0_5, %c0_6] : memref<1x128xf32, #tpu.memory_space<vmem>>, vector<1x128xf32>
    %13 = vector.shape_cast %12 : vector<1x128xf32> to vector<128xf32>
    %cst_7 = arith.constant 9.99999974E-6 : f32
    %14 = vector.broadcast %cst_7 : f32 to vector<128xf32>
    %15 = arith.addf %11, %14 : vector<128xf32>
    %16 = math.rsqrt %15 : vector<128xf32>
    %17 = arith.mulf %13, %16 : vector<128xf32>
    %c0_8 = arith.constant 0 : index
    %c0_9 = arith.constant 0 : index
    %18 = vector.load %arg5[%c0_8, %c0_9] : memref<1x128xf32, #tpu.memory_space<vmem>>, vector<1x128xf32>
    %19 = vector.shape_cast %18 : vector<1x128xf32> to vector<128xf32>
    %20 = arith.mulf %3, %17 : vector<128xf32>
    %21 = arith.subf %19, %20 : vector<128xf32>
    %c0_10 = arith.constant 0 : index
    %c0_11 = arith.constant 0 : index
    %c0_12 = arith.constant 0 : index
    %c0_13 = arith.constant 0 : index
    %22 = vector.load %arg1[%c0_10, %c0_11, %c0_12, %c0_13] : memref<1x16x16x128xbf16, #tpu.memory_space<vmem>>, vector<1x16x16x128xbf16>
    %23 = vector.shape_cast %22 : vector<1x16x16x128xbf16> to vector<16x16x128xbf16>
    %24 = arith.extf %23 : vector<16x16x128xbf16> to vector<16x16x128xf32>
    %25 = vector.shape_cast %17 : vector<128xf32> to vector<1x1x128xf32>
    %26 = vector.broadcast %25 : vector<1x1x128xf32> to vector<16x16x128xf32>
    %27 = arith.mulf %24, %26 : vector<16x16x128xf32>
    %28 = vector.shape_cast %21 : vector<128xf32> to vector<1x1x128xf32>
    %29 = vector.broadcast %28 : vector<1x1x128xf32> to vector<16x16x128xf32>
    %30 = arith.addf %27, %29 : vector<16x16x128xf32>
    %cst_14 = arith.constant 2.000000e-01 : f32
    %31 = vector.broadcast %cst_14 : f32 to vector<16x16x128xf32>
    %32 = arith.mulf %31, %30 : vector<16x16x128xf32>
    %33 = arith.maximumf %30, %32 : vector<16x16x128xf32>
    %34 = vector.extract_strided_slice %33 {offsets = [0, 0, 0], sizes = [16, 16, 8], strides = [1, 1, 1]} : vector<16x16x128xf32> to vector<16x16x8xf32>
    %c0_15 = arith.constant 0 : index
    %c0_16 = arith.constant 0 : index
    %c0_17 = arith.constant 0 : index
    %c0_18 = arith.constant 0 : index
    %35 = vector.load %arg6[%c0_15, %c0_16, %c0_17, %c0_18] : memref<1x16x16x8xf32, #tpu.memory_space<vmem>>, vector<1x16x16x8xf32>
    %36 = vector.shape_cast %35 : vector<1x16x16x8xf32> to vector<16x16x8xf32>
    %37 = vector.shape_cast %34 : vector<16x16x8xf32> to vector<1x16x16x8xf32>
    tpu.vector_store %arg6[%c0_15, %c0_16, %c0_17, %c0_18], %37 {strides = array<i32>} : memref<1x16x16x8xf32, #tpu.memory_space<vmem>>, vector<1x16x16x8xf32>,
    return
  }
  func.func @transform_0(%arg0: i32) -> (i32, i32, i32, i32) {
    %c0_i32 = arith.constant 0 : i32
    %c0_i32_0 = arith.constant 0 : i32
    %c0_i32_1 = arith.constant 0 : i32
    %c0_i32_2 = arith.constant 0 : i32
    return %arg0, %c0_i32, %c0_i32_0, %c0_i32_1 : i32, i32, i32, i32
  }
  func.func @transform_1(%arg0: i32) -> (i32, i32) {
    %c0_i32 = arith.constant 0 : i32
    %c0_i32_0 = arith.constant 0 : i32
    %c0_i32_1 = arith.constant 0 : i32
    return %c0_i32, %c0_i32_0 : i32, i32
  }
  func.func @transform_2(%arg0: i32) -> (i32, i32) {
    %c0_i32 = arith.constant 0 : i32
    %c0_i32_0 = arith.constant 0 : i32
    %c0_i32_1 = arith.constant 0 : i32
    return %c0_i32, %c0_i32_0 : i32, i32
  }
  func.func @transform_3(%arg0: i32) -> (i32, i32) {
    %c0_i32 = arith.constant 0 : i32
    %c0_i32_0 = arith.constant 0 : i32
    %c0_i32_1 = arith.constant 0 : i32
    return %c0_i32, %c0_i32_0 : i32, i32
  }
  func.func @transform_4(%arg0: i32) -> (i32, i32) {
    %c0_i32 = arith.constant 0 : i32
    %c0_i32_0 = arith.constant 0 : i32
    %c0_i32_1 = arith.constant 0 : i32
    return %c0_i32, %c0_i32_0 : i32, i32
  }
  func.func @transform_5(%arg0: i32) -> (i32, i32, i32, i32) {
    %c0_i32 = arith.constant 0 : i32
    %c0_i32_0 = arith.constant 0 : i32
    %c0_i32_1 = arith.constant 0 : i32
    %c0_i32_2 = arith.constant 0 : i32
    return %arg0, %c0_i32, %c0_i32_0, %c0_i32_1 : i32, i32, i32, i32
  }
}

</mosaic_0001>

<llo_original>
// kernel: discriminator_block.3
$region0: #{discriminator_block.3}
  #allocation0 [shape = 'u32[]', space=smem, size = 0x4, offset = 0x4, fixed_abs, tag = 'smem constant byte address 0x4 - core index']
  #allocation1 [shape = 'u32[144,128]{1,0:T(1,128)}', space=vmem, size = 0x12000, scoped, tag = 'internal scratch']
  %s0 = inlined_call_operand.vmem [shape: bf16[2,16,16,128], index: 0, kind: input, shape index: {}]
  %s1 = inlined_call_operand.vmem [shape: f32[1,128], index: 1, kind: input, shape index: {}]
  %s2 = inlined_call_operand.vmem [shape: f32[1,128], index: 2, kind: input, shape index: {}]
  %s3 = inlined_call_operand.vmem [shape: f32[1,128], index: 3, kind: input, shape index: {}]
  %s4 = inlined_call_operand.vmem [shape: f32[1,128], index: 4, kind: input, shape index: {}]
  %s5 = inlined_call_operand.vmem [shape: f32[2,16,16,8], index: 5, kind: output, shape index: {}]
  %s6 = sld [smem:[#allocation0]]
  $region53: #{discriminator_block.3} parent=0
    _
  %s8 = ssub.s32 1, %s6
  %s9 = scalar_select 0, %s8, %s6
  loop: start=0, step=1, limit=4
  $region2: #{discriminator_block.3} parent=0 // loop_pre_header
    _
  $region3: #{discriminator_block.3} parent=0 // loop_header
    %s11 = sphi 0, %s15
    %p12 = scmp.ge.s32.totalorder %s11, 4
    %s21 = sphi 0, %s23
    %s24 = sphi 0, %s21
    %s25 = sphi 0, %s24
    %s41 = sphi 0, %s25
    %s45 = sphi 0, %s45
    %s47 = sphi 0, %s45
    %s48 = sphi 0, %s47
    %s62 = sphi 0, %s48
    %s66 = sphi 0, %s66
    %s68 = sphi 0, %s66
    %s69 = sphi 0, %s68
    %s83 = sphi 0, %s69
    %s87 = sphi 0, %s87
    %s89 = sphi 0, %s87
    %s90 = sphi 0, %s89
    %s104 = sphi 0, %s90
    %s108 = sphi 0, %s108
    %s110 = sphi 0, %s108
    %s111 = sphi 0, %s110
    %s125 = sphi 0, %s111
    %s131 = sphi 0, %s133
    %s134 = sphi 0, %s131
    %s135 = sphi 0, %s134
    %s151 = sphi 0, %s135
  $region4: #{discriminator_block.3} parent=0 // loop_header_branch
    %14 = sbr.rel (%p12) target = $region8
  $region5: #{discriminator_block.3} parent=0 // loop_body
    %s16 = ssub.s32 %s11, 1
    %s17 = ssub.s32 %s11, 2
    %s18 = sadd.s32 %s11, 1
    %s19 = ssub.s32 %s11, %s18
    %p20 = scmp.eq.s32.totalorder %s19, 0
    %s22 = sadd.s32 %s21, 1
    %s23 = scalar_select %p20, %s21, %s22
    %p26 = pneg %p20
    %p27 = scmp.eq.s32.totalorder %s11, 1
    %p28 = por %p26, %p27
    %p29 = scmp.ne.s32.totalorder %s21, %s24
    %p30 = scmp.eq.s32.totalorder %s11, 0
    %p31 = por %p29, %p30
    %p32 = scmp.ne.s32.totalorder %s21, %s24
    %p33 = scmp.eq.s32.totalorder %s16, 1
    %p34 = por %p32, %p33
    %p35 = scmp.ne.s32.totalorder %s24, %s25
    %p36 = scmp.eq.s32.totalorder %s16, 0
    %p37 = por %p35, %p36
    %p38 = scmp.ne.s32.totalorder %s24, %s25
    %p39 = scmp.eq.s32.totalorder %s17, 1
    %p40 = por %p38, %p39
    %p42 = scmp.ne.s32.totalorder %s25, %s41
    %p43 = scmp.eq.s32.totalorder %s17, 0
    %p44 = por %p42, %p43
    %s46 = sadd.s32 %s45, 1
    %p49 = scmp.eq.s32.totalorder %s11, 1
    %p50 = scmp.ne.s32.totalorder %s45, %s47
    %p51 = scmp.eq.s32.totalorder %s11, 0
    %p52 = por %p50, %p51
    %p53 = scmp.ne.s32.totalorder %s45, %s47
    %p54 = scmp.eq.s32.totalorder %s16, 1
    %p55 = por %p53, %p54
    %p56 = scmp.ne.s32.totalorder %s47, %s48
    %p57 = scmp.eq.s32.totalorder %s16, 0
    %p58 = por %p56, %p57
    %p59 = scmp.ne.s32.totalorder %s47, %s48
    %p60 = scmp.eq.s32.totalorder %s17, 1
    %p61 = por %p59, %p60
    %p63 = scmp.ne.s32.totalorder %s48, %s62
    %p64 = scmp.eq.s32.totalorder %s17, 0
    %p65 = por %p63, %p64
    %s67 = sadd.s32 %s66, 1
    %p70 = scmp.eq.s32.totalorder %s11, 1
    %p71 = scmp.ne.s32.totalorder %s66, %s68
    %p72 = scmp.eq.s32.totalorder %s11, 0
    %p73 = por %p71, %p72
    %p74 = scmp.ne.s32.totalorder %s66, %s68
    %p75 = scmp.eq.s32.totalorder %s16, 1
    %p76 = por %p74, %p75
    %p77 = scmp.ne.s32.totalorder %s68, %s69
    %p78 = scmp.eq.s32.totalorder %s16, 0
    %p79 = por %p77, %p78
    %p80 = scmp.ne.s32.totalorder %s68, %s69
    %p81 = scmp.eq.s32.totalorder %s17, 1
    %p82 = por %p80, %p81
    %p84 = scmp.ne.s32.totalorder %s69, %s83
    %p85 = scmp.eq.s32.totalorder %s17, 0
    %p86 = por %p84, %p85
    %s88 = sadd.s32 %s87, 1
    %p91 = scmp.eq.s32.totalorder %s11, 1
    %p92 = scmp.ne.s32.totalorder %s87, %s89
    %p93 = scmp.eq.s32.totalorder %s11, 0
    %p94 = por %p92, %p93
    %p95 = scmp.ne.s32.totalorder %s87, %s89
    %p96 = scmp.eq.s32.totalorder %s16, 1
    %p97 = por %p95, %p96
    %p98 = scmp.ne.s32.totalorder %s89, %s90
    %p99 = scmp.eq.s32.totalorder %s16, 0
    %p100 = por %p98, %p99
    %p101 = scmp.ne.s32.totalorder %s89, %s90
    %p102 = scmp.eq.s32.totalorder %s17, 1
    %p103 = por %p101, %p102
    %p105 = scmp.ne.s32.totalorder %s90, %s104
    %p106 = scmp.eq.s32.totalorder %s17, 0
    %p107 = por %p105, %p106
    %s109 = sadd.s32 %s108, 1
    %p112 = scmp.eq.s32.totalorder %s11, 1
    %p113 = scmp.ne.s32.totalorder %s108, %s110
    %p114 = scmp.eq.s32.totalorder %s11, 0
    %p115 = por %p113, %p114
    %p116 = scmp.ne.s32.totalorder %s108, %s110
    %p117 = scmp.eq.s32.totalorder %s16, 1
    %p118 = por %p116, %p117
    %p119 = scmp.ne.s32.totalorder %s110, %s111
    %p120 = scmp.eq.s32.totalorder %s16, 0
    %p121 = por %p119, %p120
    %p122 = scmp.ne.s32.totalorder %s110, %s111
    %p123 = scmp.eq.s32.totalorder %s17, 1
    %p124 = por %p122, %p123
    %p126 = scmp.ne.s32.totalorder %s111, %s125
    %p127 = scmp.eq.s32.totalorder %s17, 0
    %p128 = por %p126, %p127
    %s129 = ssub.s32 %s11, %s18
    %p130 = scmp.eq.s32.totalorder %s129, 0
    %s132 = sadd.s32 %s131, 1
    %s133 = scalar_select %p130, %s131, %s132
    %p136 = pneg %p130
    %p137 = scmp.eq.s32.totalorder %s11, 1
    %p138 = por %p136, %p137
    %p139 = scmp.ne.s32.totalorder %s131, %s134
    %p140 = scmp.eq.s32.totalorder %s11, 0
    %p141 = por %p139, %p140
    %p142 = scmp.ne.s32.totalorder %s131, %s134
    %p143 = scmp.eq.s32.totalorder %s16, 1
    %p144 = por %p142, %p143
    %p145 = scmp.ne.s32.totalorder %s134, %s135
    %p146 = scmp.eq.s32.totalorder %s16, 0
    %p147 = por %p145, %p146
    %p148 = scmp.ne.s32.totalorder %s134, %s135
    %p149 = scmp.eq.s32.totalorder %s17, 1
    %p150 = por %p148, %p149
    %p152 = scmp.ne.s32.totalorder %s135, %s151
    %p153 = scmp.eq.s32.totalorder %s17, 0
    %p154 = por %p152, %p153
    %p155 = scmp.le.s32.totalorder 1, %s11
    %p156 = scmp.lt.s32.totalorder %s11, 3
    %p157 = pnand %p155, %p156
    %p158 = pneg %p157
    // Predicated region
    $region9: #{discriminator_block.3} parent=5 // pred_check
      _
    $region10: #{discriminator_block.3} parent=5 // pred_check_branch
      %160 = sbr.rel (%p157) target = $region12
    $region11: #{discriminator_block.3} parent=5 // pred_region
      %s161 = ssub.s32 %s11, 1
      // Predicated region
      $region13: #{discriminator_block.3} parent=11 // pred_check
        %p162 = pneg %p58
      $region14: #{discriminator_block.3} parent=11 // pred_check_branch
        %164 = sbr.rel (%p162) target = $region16
      $region15: #{discriminator_block.3} parent=11 // pred_region
        _
      $region16: #{discriminator_block.3} parent=11 // pred_fallthru
        _
      // Predicated region
      $region17: #{discriminator_block.3} parent=11 // pred_check
        %p165 = pneg %p79
      $region18: #{discriminator_block.3} parent=11 // pred_check_branch
        %167 = sbr.rel (%p165) target = $region20
      $region19: #{discriminator_block.3} parent=11 // pred_region
        _
      $region20: #{discriminator_block.3} parent=11 // pred_fallthru
        _
      // Predicated region
      $region21: #{discriminator_block.3} parent=11 // pred_check
        %p168 = pneg %p100
      $region22: #{discriminator_block.3} parent=11 // pred_check_branch
        %170 = sbr.rel (%p168) target = $region24
      $region23: #{discriminator_block.3} parent=11 // pred_region
        _
      $region24: #{discriminator_block.3} parent=11 // pred_fallthru
        _
      // Predicated region
      $region25: #{discriminator_block.3} parent=11 // pred_check
        %p171 = pneg %p121
      $region26: #{discriminator_block.3} parent=11 // pred_check_branch
        %173 = sbr.rel (%p171) target = $region28
      $region27: #{discriminator_block.3} parent=11 // pred_region
        _
      $region28: #{discriminator_block.3} parent=11 // pred_fallthru
        _
    $region12: #{discriminator_block.3} parent=5 // pred_fallthru
      _
    %p174 = scmp.lt.s32.totalorder %s11, 2
    // Predicated region
    $region29: #{discriminator_block.3} parent=5 // pred_check
      %p175 = pneg %p174
    $region30: #{discriminator_block.3} parent=5 // pred_check_branch
      %177 = sbr.rel (%p175) target = $region32
    $region31: #{discriminator_block.3} parent=5 // pred_region
      // Predicated region
      $region33: #{discriminator_block.3} parent=31 // pred_check
        %p178 = pneg %p31
      $region34: #{discriminator_block.3} parent=31 // pred_check_branch
        %180 = sbr.rel (%p178) target = $region36
      $region35: #{discriminator_block.3} parent=31 // pred_region
        %p181 = scmp.lt.s32.totalorder %s11, 1
        %s182 = scalar_select %p181, %s11, 1
        %s183 = smul.addr %s182, 32
        %s184 = smul.addr %s183, 4
        %s185 = scalar_lea.vmem %s0, %s184
      $region36: #{discriminator_block.3} parent=31 // pred_fallthru
        _
    $region32: #{discriminator_block.3} parent=5 // pred_fallthru
      _
    %p186 = scmp.le.s32.totalorder 1, %s11
    %p187 = scmp.lt.s32.totalorder %s11, 3
    %p188 = pnand %p186, %p187
    %p189 = pneg %p188
    // Predicated region
    $region37: #{discriminator_block.3} parent=5 // pred_check
      _
    $region38: #{discriminator_block.3} parent=5 // pred_check_branch
      %191 = sbr.rel (%p188) target = $region40
    $region39: #{discriminator_block.3} parent=5 // pred_region
      %s192 = ssub.s32 %s11, 1
      %p193 = scmp.lt.s32.totalorder %s16, 1
      %s194 = scalar_select %p193, %s16, 1
      %s195 = smul.addr %s194, 32
      %s196 = smul.addr %s195, 4
      %s197 = scalar_lea.vmem %s0, %s196
      %p198 = pneg %p37
      %p199 = pneg %p34
      %p200 = pneg %p58
      %p201 = pneg %p55
      %p202 = pneg %p79
      %p203 = pneg %p76
      %p204 = pneg %p100
      %p205 = pneg %p97
      %p206 = pneg %p121
      %p207 = pneg %p118
      %p208 = pneg %p147
      %p209 = pneg %p144
      %p210 = scmp.lt.s32.totalorder %s16, 1
      %s211 = scalar_select %p210, %s16, 1
      %s212 = smul.addr %s211, 32
      %s213 = smul.addr %s212, 8
      %s214 = scalar_lea.vmem %s5, %s213
      %p215 = scmp.lt.s32.totalorder %s16, 1
      %s216 = scalar_select %p215, %s16, 1
      %s217 = smul.addr %s216, 32
      %s218 = smul.addr %s217, 4
      %s219 = scalar_lea.vmem %s0, %s218
      %p220 = scmp.lt.s32.totalorder %s16, 1
      %s221 = scalar_select %p220, %s16, 1
      %s222 = smul.addr %s221, 32
      %s223 = smul.addr %s222, 8
      %s224 = scalar_lea.vmem %s5, %s223
      %v225 = vld [vmem:[%s1] sm:$0x1]
      %v226 = vmul.f32 %v225, 0.001953125
      %v227 = vld [vmem:[%s2] sm:$0x1]
      %v228 = vmul.f32 %v227, 0.001953125
      %v229 = vmul.f32 %v226, %v226
      %v230 = vsub.f32 %v228, %v229
      %v231 = vmax.f32 %v230, 0.0
      %v232 = vld [vmem:[%s3] sm:$0x1]
      %v233 = vadd.f32 %v231, 1e-05
      %v234 = vrsqrt.pop %v233
      %v235 = vmul.f32 %v232, %v234
      %v236 = vld [vmem:[%s4] sm:$0x1]
      %v237 = vmul.f32 %v226, %v235
      %v238 = vsub.f32 %v236, %v237
      %v239 = vld [vmem:[%s219] sm:$0xf]
      %v240 = vld [vmem:[%s219 + $0x4] sm:$0xf]
      %v241 = vld [vmem:[%s219 + $0x8] sm:$0xf]
      %v242 = vld [vmem:[%s219 + $0xc] sm:$0xf]
      %v243 = vld [vmem:[%s219 + $0x10] sm:$0xf]
      %v244 = vld [vmem:[%s219 + $0x14] sm:$0xf]
      %v245 = vld [vmem:[%s219 + $0x18] sm:$0xf]
      %v246 = vld [vmem:[%s219 + $0x1c] sm:$0xf]
      %v247 = vld [vmem:[%s219 + $0x20] sm:$0xf]
      %v248 = vld [vmem:[%s219 + $0x24] sm:$0xf]
      %v249 = vld [vmem:[%s219 + $0x28] sm:$0xf]
      %v250 = vld [vmem:[%s219 + $0x2c] sm:$0xf]
      %v251 = vld [vmem:[%s219 + $0x30] sm:$0xf]
      %v252 = vld [vmem:[%s219 + $0x34] sm:$0xf]
      %v253 = vld [vmem:[%s219 + $0x38] sm:$0xf]
      %v254 = vld [vmem:[%s219 + $0x3c] sm:$0xf]
      %v255 = vld [vmem:[%s219 + $0x40] sm:$0xf]
      %v256 = vld [vmem:[%s219 + $0x44] sm:$0xf]
      %v257 = vld [vmem:[%s219 + $0x48] sm:$0xf]
      %v258 = vld [vmem:[%s219 + $0x4c] sm:$0xf]
      %v259 = vld [vmem:[%s219 + $0x50] sm:$0xf]
      %v260 = vld [vmem:[%s219 + $0x54] sm:$0xf]
      %v261 = vld [vmem:[%s219 + $0x58] sm:$0xf]
      %v262 = vld [vmem:[%s219 + $0x5c] sm:$0xf]
      %v263 = vld [vmem:[%s219 + $0x60] sm:$0xf]
      %v264 = vld [vmem:[%s219 + $0x64] sm:$0xf]
      %v265 = vld [vmem:[%s219 + $0x68] sm:$0xf]
      %v266 = vld [vmem:[%s219 + $0x6c] sm:$0xf]
      %v267 = vld [vmem:[%s219 + $0x70] sm:$0xf]
      %v268 = vld [vmem:[%s219 + $0x74] sm:$0xf]
      %v269 = vld [vmem:[%s219 + $0x78] sm:$0xf]
      %v270 = vld [vmem:[%s219 + $0x7c] sm:$0xf]
      %v271 = vunpack.c.l.bf16 %v239
      %v272 = vunpack.c.l.bf16 %v240
      %v273 = vunpack.c.l.bf16 %v241
      %v274 = vunpack.c.l.bf16 %v242
      %v275 = vunpack.c.l.bf16 %v243
      %v276 = vunpack.c.l.bf16 %v244
      %v277 = vunpack.c.l.bf16 %v245
      %v278 = vunpack.c.l.bf16 %v246
      %v279 = vunpack.c.l.bf16 %v247
      %v280 = vunpack.c.l.bf16 %v248
      %v281 = vunpack.c.l.bf16 %v249
      %v282 = vunpack.c.l.bf16 %v250
      %v283 = vunpack.c.l.bf16 %v251
      %v284 = vunpack.c.l.bf16 %v252
      %v285 = vunpack.c.l.bf16 %v253
      %v286 = vunpack.c.l.bf16 %v254
      %v287 = vunpack.c.l.bf16 %v255
      %v288 = vunpack.c.l.bf16 %v256
      %v289 = vunpack.c.l.bf16 %v257
      %v290 = vunpack.c.l.bf16 %v258
      %v291 = vunpack.c.l.bf16 %v259
      %v292 = vunpack.c.l.bf16 %v260
      %v293 = vunpack.c.l.bf16 %v261
      %v294 = vunpack.c.l.bf16 %v262
      %v295 = vunpack.c.l.bf16 %v263
      %v296 = vunpack.c.l.bf16 %v264
      %v297 = vunpack.c.l.bf16 %v265
      %v298 = vunpack.c.l.bf16 %v266
      %v299 = vunpack.c.l.bf16 %v267
      %v300 = vunpack.c.l.bf16 %v268
      %v301 = vunpack.c.l.bf16 %v269
      %v302 = vunpack.c.l.bf16 %v270
      %v304 = vlaneseq
      %v305 = vshrl.u32 %v304, 7
      %v306 = vsub.s32 0, %v305
      %v307 = vrot.slane %v235, %v306
      %v309 = vmul.f32 %v271, %v307
      %v310 = vmul.f32 %v272, %v307
      %v311 = vmul.f32 %v273, %v307
      %v312 = vmul.f32 %v274, %v307
      %v313 = vmul.f32 %v275, %v307
      %v314 = vmul.f32 %v276, %v307
      %v315 = vmul.f32 %v277, %v307
      %v316 = vmul.f32 %v278, %v307
      %v317 = vmul.f32 %v279, %v307
      %v318 = vmul.f32 %v280, %v307
      %v319 = vmul.f32 %v281, %v307
      %v320 = vmul.f32 %v282, %v307
      %v321 = vmul.f32 %v283, %v307
      %v322 = vmul.f32 %v284, %v307
      %v323 = vmul.f32 %v285, %v307
      %v324 = vmul.f32 %v286, %v307
      %v325 = vmul.f32 %v287, %v307
      %v326 = vmul.f32 %v288, %v307
      %v327 = vmul.f32 %v289, %v307
      %v328 = vmul.f32 %v290, %v307
      %v329 = vmul.f32 %v291, %v307
      %v330 = vmul.f32 %v292, %v307
      %v331 = vmul.f32 %v293, %v307
      %v332 = vmul.f32 %v294, %v307
      %v333 = vmul.f32 %v295, %v307
      %v334 = vmul.f32 %v296, %v307
      %v335 = vmul.f32 %v297, %v307
      %v336 = vmul.f32 %v298, %v307
      %v337 = vmul.f32 %v299, %v307
      %v338 = vmul.f32 %v300, %v307
      %v339 = vmul.f32 %v301, %v307
      %v340 = vmul.f32 %v302, %v307
      %v342 = vlaneseq
      %v343 = vshrl.u32 %v342, 7
      %v344 = vsub.s32 0, %v343
      %v345 = vrot.slane %v238, %v344
      %v347 = vadd.f32 %v309, %v345
      %v348 = vadd.f32 %v310, %v345
      %v349 = vadd.f32 %v311, %v345
      %v350 = vadd.f32 %v312, %v345
      %v351 = vadd.f32 %v313, %v345
      %v352 = vadd.f32 %v314, %v345
      %v353 = vadd.f32 %v315, %v345
      %v354 = vadd.f32 %v316, %v345
      %v355 = vadd.f32 %v317, %v345
      %v356 = vadd.f32 %v318, %v345
      %v357 = vadd.f32 %v319, %v345
      %v358 = vadd.f32 %v320, %v345
      %v359 = vadd.f32 %v321, %v345
      %v360 = vadd.f32 %v322, %v345
      %v361 = vadd.f32 %v323, %v345
      %v362 = vadd.f32 %v324, %v345
      %v363 = vadd.f32 %v325, %v345
      %v364 = vadd.f32 %v326, %v345
      %v365 = vadd.f32 %v327, %v345
      %v366 = vadd.f32 %v328, %v345
      %v367 = vadd.f32 %v329, %v345
      %v368 = vadd.f32 %v330, %v345
      %v369 = vadd.f32 %v331, %v345
      %v370 = vadd.f32 %v332, %v345
      %v371 = vadd.f32 %v333, %v345
      %v372 = vadd.f32 %v334, %v345
      %v373 = vadd.f32 %v335, %v345
      %v374 = vadd.f32 %v336, %v345
      %v375 = vadd.f32 %v337, %v345
      %v376 = vadd.f32 %v338, %v345
      %v377 = vadd.f32 %v339, %v345
      %v378 = vadd.f32 %v340, %v345
      %v379 = vmul.f32 %v347, 0.2
      %v380 = vmul.f32 %v348, 0.2
      %v381 = vmul.f32 %v349, 0.2
      %v382 = vmul.f32 %v350, 0.2
      %v383 = vmul.f32 %v351, 0.2
      %v384 = vmul.f32 %v352, 0.2
      %v385 = vmul.f32 %v353, 0.2
      %v386 = vmul.f32 %v354, 0.2
      %v387 = vmul.f32 %v355, 0.2
      %v388 = vmul.f32 %v356, 0.2
      %v389 = vmul.f32 %v357, 0.2
      %v390 = vmul.f32 %v358, 0.2
      %v391 = vmul.f32 %v359, 0.2
      %v392 = vmul.f32 %v360, 0.2
      %v393 = vmul.f32 %v361, 0.2
      %v394 = vmul.f32 %v362, 0.2
      %v395 = vmul.f32 %v363, 0.2
      %v396 = vmul.f32 %v364, 0.2
      %v397 = vmul.f32 %v365, 0.2
      %v398 = vmul.f32 %v366, 0.2
      %v399 = vmul.f32 %v367, 0.2
      %v400 = vmul.f32 %v368, 0.2
      %v401 = vmul.f32 %v369, 0.2
      %v402 = vmul.f32 %v370, 0.2
      %v403 = vmul.f32 %v371, 0.2
      %v404 = vmul.f32 %v372, 0.2
      %v405 = vmul.f32 %v373, 0.2
      %v406 = vmul.f32 %v374, 0.2
      %v407 = vmul.f32 %v375, 0.2
      %v408 = vmul.f32 %v376, 0.2
      %v409 = vmul.f32 %v377, 0.2
      %v410 = vmul.f32 %v378, 0.2
      %v411 = vmax.f32 %v347, %v379
      %v412 = vmax.f32 %v348, %v380
      %v413 = vmax.f32 %v349, %v381
      %v414 = vmax.f32 %v350, %v382
      %v415 = vmax.f32 %v351, %v383
      %v416 = vmax.f32 %v352, %v384
      %v417 = vmax.f32 %v353, %v385
      %v418 = vmax.f32 %v354, %v386
      %v419 = vmax.f32 %v355, %v387
      %v420 = vmax.f32 %v356, %v388
      %v421 = vmax.f32 %v357, %v389
      %v422 = vmax.f32 %v358, %v390
      %v423 = vmax.f32 %v359, %v391
      %v424 = vmax.f32 %v360, %v392
      %v425 = vmax.f32 %v361, %v393
      %v426 = vmax.f32 %v362, %v394
      %v427 = vmax.f32 %v363, %v395
      %v428 = vmax.f32 %v364, %v396
      %v429 = vmax.f32 %v365, %v397
      %v430 = vmax.f32 %v366, %v398
      %v431 = vmax.f32 %v367, %v399
      %v432 = vmax.f32 %v368, %v400
      %v433 = vmax.f32 %v369, %v401
      %v434 = vmax.f32 %v370, %v402
      %v435 = vmax.f32 %v371, %v403
      %v436 = vmax.f32 %v372, %v404
      %v437 = vmax.f32 %v373, %v405
      %v438 = vmax.f32 %v374, %v406
      %v439 = vmax.f32 %v375, %v407
      %v440 = vmax.f32 %v376, %v408
      %v441 = vmax.f32 %v377, %v409
      %v442 = vmax.f32 %v378, %v410
      %vm443 = vcmask 64512
      %444 = vst.msk [vmem:[%s224] sm:$0xff] %vm443, %v411
      %445 = vst.msk [vmem:[%s224 + $0x8] sm:$0xff] %vm443, %v412
      %446 = vst.msk [vmem:[%s224 + $0x10] sm:$0xff] %vm443, %v413
      %447 = vst.msk [vmem:[%s224 + $0x18] sm:$0xff] %vm443, %v414
      %448 = vst.msk [vmem:[%s224 + $0x20] sm:$0xff] %vm443, %v415
      %449 = vst.msk [vmem:[%s224 + $0x28] sm:$0xff] %vm443, %v416
      %450 = vst.msk [vmem:[%s224 + $0x30] sm:$0xff] %vm443, %v417
      %451 = vst.msk [vmem:[%s224 + $0x38] sm:$0xff] %vm443, %v418
      %452 = vst.msk [vmem:[%s224 + $0x40] sm:$0xff] %vm443, %v419
      %453 = vst.msk [vmem:[%s224 + $0x48] sm:$0xff] %vm443, %v420
      %454 = vst.msk [vmem:[%s224 + $0x50] sm:$0xff] %vm443, %v421
      %455 = vst.msk [vmem:[%s224 + $0x58] sm:$0xff] %vm443, %v422
      %456 = vst.msk [vmem:[%s224 + $0x60] sm:$0xff] %vm443, %v423
      %457 = vst.msk [vmem:[%s224 + $0x68] sm:$0xff] %vm443, %v424
      %458 = vst.msk [vmem:[%s224 + $0x70] sm:$0xff] %vm443, %v425
      %459 = vst.msk [vmem:[%s224 + $0x78] sm:$0xff] %vm443, %v426
      %460 = vst.msk [vmem:[%s224 + $0x80] sm:$0xff] %vm443, %v427
      %461 = vst.msk [vmem:[%s224 + $0x88] sm:$0xff] %vm443, %v428
      %462 = vst.msk [vmem:[%s224 + $0x90] sm:$0xff] %vm443, %v429
      %463 = vst.msk [vmem:[%s224 + $0x98] sm:$0xff] %vm443, %v430
      %464 = vst.msk [vmem:[%s224 + $0xa0] sm:$0xff] %vm443, %v431
      %465 = vst.msk [vmem:[%s224 + $0xa8] sm:$0xff] %vm443, %v432
      %466 = vst.msk [vmem:[%s224 + $0xb0] sm:$0xff] %vm443, %v433
      %467 = vst.msk [vmem:[%s224 + $0xb8] sm:$0xff] %vm443, %v434
      %468 = vst.msk [vmem:[%s224 + $0xc0] sm:$0xff] %vm443, %v435
      %469 = vst.msk [vmem:[%s224 + $0xc8] sm:$0xff] %vm443, %v436
      %470 = vst.msk [vmem:[%s224 + $0xd0] sm:$0xff] %vm443, %v437
      %471 = vst.msk [vmem:[%s224 + $0xd8] sm:$0xff] %vm443, %v438
      %472 = vst.msk [vmem:[%s224 + $0xe0] sm:$0xff] %vm443, %v439
      %473 = vst.msk [vmem:[%s224 + $0xe8] sm:$0xff] %vm443, %v440
      %474 = vst.msk [vmem:[%s224 + $0xf0] sm:$0xff] %vm443, %v441
      %475 = vst.msk [vmem:[%s224 + $0xf8] sm:$0xff] %vm443, %v442
      %p476 = scmp.lt.s32.totalorder %s16, 1
      %s477 = scalar_select %p476, %s16, 1
      %s478 = smul.addr %s477, 32
      %s479 = smul.addr %s478, 8
      %s480 = scalar_lea.vmem %s5, %s479
      // Predicated region
      $region41: #{discriminator_block.3} parent=39 // pred_check
        %p481 = pneg %p144
      $region42: #{discriminator_block.3} parent=39 // pred_check_branch
        %483 = sbr.rel (%p481) target = $region44
      $region43: #{discriminator_block.3} parent=39 // pred_region
        _
      $region44: #{discriminator_block.3} parent=39 // pred_fallthru
        _
    $region40: #{discriminator_block.3} parent=5 // pred_fallthru
      _
    %p484 = scmp.le.s32.totalorder 2, %s11
    // Predicated region
    $region45: #{discriminator_block.3} parent=5 // pred_check
      %p485 = pneg %p484
    $region46: #{discriminator_block.3} parent=5 // pred_check_branch
      %487 = sbr.rel (%p485) target = $region48
    $region47: #{discriminator_block.3} parent=5 // pred_region
      %s488 = ssub.s32 %s11, 2
      // Predicated region
      $region49: #{discriminator_block.3} parent=47 // pred_check
        %p489 = pneg %p150
      $region50: #{discriminator_block.3} parent=47 // pred_check_branch
        %491 = sbr.rel (%p489) target = $region52
      $region51: #{discriminator_block.3} parent=47 // pred_region
        %p492 = scmp.lt.s32.totalorder %s17, 1
        %s493 = scalar_select %p492, %s17, 1
        %s494 = smul.addr %s493, 32
        %s495 = smul.addr %s494, 8
        %s496 = scalar_lea.vmem %s5, %s495
      $region52: #{discriminator_block.3} parent=47 // pred_fallthru
        _
    $region48: #{discriminator_block.3} parent=5 // pred_fallthru
      _
  $region6: #{discriminator_block.3} parent=0 // loop_footer
    %s15 = sadd.s32 1, %s11
  $region7: #{discriminator_block.3} parent=0 // loop_footer_branch
    %10 = sbr.rel target = $region3
  $region8: #{discriminator_block.3} parent=0 // loop_exit
    _

// kernel: discriminator_block.2
$region0: #{discriminator_block.2}
  #allocation0 [shape = 'u32[]', space=smem, size = 0x4, offset = 0x4, fixed_abs, tag = 'smem constant byte address 0x4 - core index']
  #allocation1 [shape = 'u32[144,128]{1,0:T(1,128)}', space=vmem, size = 0x12000, scoped, tag = 'internal scratch']
  #allocation2 [shape = 'f32[256,128]{1,0:T(8,128)}', space=vmem, size = 0x20000, scoped, tag = 'scratch operand']
  %s0 = inlined_call_operand.vmem [shape: bf16[2,18,18,4], index: 0, kind: input, shape index: {}]
  %s1 = inlined_call_operand.vmem [shape: bf16[3,3,4,128], index: 1, kind: input, shape index: {}]
  %s2 = inlined_call_operand.vmem [shape: bf16[2,16,16,128], index: 2, kind: output, shape index: {0}]
  %s3 = inlined_call_operand.vmem [shape: f32[2,1,128], index: 3, kind: output, shape index: {1}]
  %s4 = inlined_call_operand.vmem [shape: f32[2,1,128], index: 4, kind: output, shape index: {2}]
  %5 = xla_tuple %s2, %s3, %s4
  %s6 = sld [smem:[#allocation0]]
  $region57: #{discriminator_block.2} parent=0
    _
  %s8 = ssub.s32 1, %s6
  %s9 = scalar_select 0, %s8, %s6
  loop: start=0, step=1, limit=4
  $region2: #{discriminator_block.2} parent=0 // loop_pre_header
    _
  $region3: #{discriminator_block.2} parent=0 // loop_header
    %s11 = sphi 0, %s15
    %p12 = scmp.ge.s32.totalorder %s11, 4
    %s21 = sphi 0, %s23
    %s24 = sphi 0, %s21
    %s25 = sphi 0, %s24
    %s41 = sphi 0, %s25
    %s45 = sphi 0, %s45
    %s47 = sphi 0, %s45
    %s48 = sphi 0, %s47
    %s62 = sphi 0, %s48
    %s68 = sphi 0, %s70
    %s71 = sphi 0, %s68
    %s72 = sphi 0, %s71
    %s88 = sphi 0, %s72
    %s94 = sphi 0, %s96
    %s97 = sphi 0, %s94
    %s98 = sphi 0, %s97
    %s114 = sphi 0, %s98
    %s120 = sphi 0, %s122
    %s123 = sphi 0, %s120
    %s124 = sphi 0, %s123
    %s140 = sphi 0, %s124
  $region4: #{discriminator_block.2} parent=0 // loop_header_branch
    %14 = sbr.rel (%p12) target = $region8
  $region5: #{discriminator_block.2} parent=0 // loop_body
    %s16 = ssub.s32 %s11, 1
    %s17 = ssub.s32 %s11, 2
    %s18 = sadd.s32 %s11, 1
    %s19 = ssub.s32 %s11, %s18
    %p20 = scmp.eq.s32.totalorder %s19, 0
    %s22 = sadd.s32 %s21, 1
    %s23 = scalar_select %p20, %s21, %s22
    %p26 = pneg %p20
    %p27 = scmp.eq.s32.totalorder %s11, 1
    %p28 = por %p26, %p27
    %p29 = scmp.ne.s32.totalorder %s21, %s24
    %p30 = scmp.eq.s32.totalorder %s11, 0
    %p31 = por %p29, %p30
    %p32 = scmp.ne.s32.totalorder %s21, %s24
    %p33 = scmp.eq.s32.totalorder %s16, 1
    %p34 = por %p32, %p33
    %p35 = scmp.ne.s32.totalorder %s24, %s25
    %p36 = scmp.eq.s32.totalorder %s16, 0
    %p37 = por %p35, %p36
    %p38 = scmp.ne.s32.totalorder %s24, %s25
    %p39 = scmp.eq.s32.totalorder %s17, 1
    %p40 = por %p38, %p39
    %p42 = scmp.ne.s32.totalorder %s25, %s41
    %p43 = scmp.eq.s32.totalorder %s17, 0
    %p44 = por %p42, %p43
    %s46 = sadd.s32 %s45, 1
    %p49 = scmp.eq.s32.totalorder %s11, 1
    %p50 = scmp.ne.s32.totalorder %s45, %s47
    %p51 = scmp.eq.s32.totalorder %s11, 0
    %p52 = por %p50, %p51
    %p53 = scmp.ne.s32.totalorder %s45, %s47
    %p54 = scmp.eq.s32.totalorder %s16, 1
    %p55 = por %p53, %p54
    %p56 = scmp.ne.s32.totalorder %s47, %s48
    %p57 = scmp.eq.s32.totalorder %s16, 0
    %p58 = por %p56, %p57
    %p59 = scmp.ne.s32.totalorder %s47, %s48
    %p60 = scmp.eq.s32.totalorder %s17, 1
    %p61 = por %p59, %p60
    %p63 = scmp.ne.s32.totalorder %s48, %s62
    %p64 = scmp.eq.s32.totalorder %s17, 0
    %p65 = por %p63, %p64
    %s66 = ssub.s32 %s11, %s18
    %p67 = scmp.eq.s32.totalorder %s66, 0
    %s69 = sadd.s32 %s68, 1
    %s70 = scalar_select %p67, %s68, %s69
    %p73 = pneg %p67
    %p74 = scmp.eq.s32.totalorder %s11, 1
    %p75 = por %p73, %p74
    %p76 = scmp.ne.s32.totalorder %s68, %s71
    %p77 = scmp.eq.s32.totalorder %s11, 0
    %p78 = por %p76, %p77
    %p79 = scmp.ne.s32.totalorder %s68, %s71
    %p80 = scmp.eq.s32.totalorder %s16, 1
    %p81 = por %p79, %p80
    %p82 = scmp.ne.s32.totalorder %s71, %s72
    %p83 = scmp.eq.s32.totalorder %s16, 0
    %p84 = por %p82, %p83
    %p85 = scmp.ne.s32.totalorder %s71, %s72
    %p86 = scmp.eq.s32.totalorder %s17, 1
    %p87 = por %p85, %p86
    %p89 = scmp.ne.s32.totalorder %s72, %s88
    %p90 = scmp.eq.s32.totalorder %s17, 0
    %p91 = por %p89, %p90
    %s92 = ssub.s32 %s11, %s18
    %p93 = scmp.eq.s32.totalorder %s92, 0
    %s95 = sadd.s32 %s94, 1
    %s96 = scalar_select %p93, %s94, %s95
    %p99 = pneg %p93
    %p100 = scmp.eq.s32.totalorder %s11, 1
    %p101 = por %p99, %p100
    %p102 = scmp.ne.s32.totalorder %s94, %s97
    %p103 = scmp.eq.s32.totalorder %s11, 0
    %p104 = por %p102, %p103
    %p105 = scmp.ne.s32.totalorder %s94, %s97
    %p106 = scmp.eq.s32.totalorder %s16, 1
    %p107 = por %p105, %p106
    %p108 = scmp.ne.s32.totalorder %s97, %s98
    %p109 = scmp.eq.s32.totalorder %s16, 0
    %p110 = por %p108, %p109
    %p111 = scmp.ne.s32.totalorder %s97, %s98
    %p112 = scmp.eq.s32.totalorder %s17, 1
    %p113 = por %p111, %p112
    %p115 = scmp.ne.s32.totalorder %s98, %s114
    %p116 = scmp.eq.s32.totalorder %s17, 0
    %p117 = por %p115, %p116
    %s118 = ssub.s32 %s11, %s18
    %p119 = scmp.eq.s32.totalorder %s118, 0
    %s121 = sadd.s32 %s120, 1
    %s122 = scalar_select %p119, %s120, %s121
    %p125 = pneg %p119
    %p126 = scmp.eq.s32.totalorder %s11, 1
    %p127 = por %p125, %p126
    %p128 = scmp.ne.s32.totalorder %s120, %s123
    %p129 = scmp.eq.s32.totalorder %s11, 0
    %p130 = por %p128, %p129
    %p131 = scmp.ne.s32.totalorder %s120, %s123
    %p132 = scmp.eq.s32.totalorder %s16, 1
    %p133 = por %p131, %p132
    %p134 = scmp.ne.s32.totalorder %s123, %s124
    %p135 = scmp.eq.s32.totalorder %s16, 0
    %p136 = por %p134, %p135
    %p137 = scmp.ne.s32.totalorder %s123, %s124
    %p138 = scmp.eq.s32.totalorder %s17, 1
    %p139 = por %p137, %p138
    %p141 = scmp.ne.s32.totalorder %s124, %s140
    %p142 = scmp.eq.s32.totalorder %s17, 0
    %p143 = por %p141, %p142
    %p144 = scmp.le.s32.totalorder 1, %s11
    %p145 = scmp.lt.s32.totalorder %s11, 3
    %p146 = pnand %p144, %p145
    %p147 = pneg %p146
    // Predicated region
    $region9: #{discriminator_block.2} parent=5 // pred_check
      _
    $region10: #{discriminator_block.2} parent=5 // pred_check_branch
      %149 = sbr.rel (%p146) target = $region12
    $region11: #{discriminator_block.2} parent=5 // pred_region
      %s150 = ssub.s32 %s11, 1
      // Predicated region
      $region13: #{discriminator_block.2} parent=11 // pred_check
        %p151 = pneg %p58
      $region14: #{discriminator_block.2} parent=11 // pred_check_branch
        %153 = sbr.rel (%p151) target = $region16
      $region15: #{discriminator_block.2} parent=11 // pred_region
        _
      $region16: #{discriminator_block.2} parent=11 // pred_fallthru
        _
    $region12: #{discriminator_block.2} parent=5 // pred_fallthru
      _
    %p154 = scmp.lt.s32.totalorder %s11, 2
    // Predicated region
    $region17: #{discriminator_block.2} parent=5 // pred_check
      %p155 = pneg %p154
    $region18: #{discriminator_block.2} parent=5 // pred_check_branch
      %157 = sbr.rel (%p155) target = $region20
    $region19: #{discriminator_block.2} parent=5 // pred_region
      // Predicated region
      $region21: #{discriminator_block.2} parent=19 // pred_check
        %p158 = pneg %p31
      $region22: #{discriminator_block.2} parent=19 // pred_check_branch
        %160 = sbr.rel (%p158) target = $region24
      $region23: #{discriminator_block.2} parent=19 // pred_region
        %p161 = scmp.lt.s32.totalorder %s11, 1
        %s162 = scalar_select %p161, %s11, 1
        %s163 = smul.addr %s162, 54
        %s164 = smul.addr %s163, 4
        %s165 = scalar_lea.vmem %s0, %s164
      $region24: #{discriminator_block.2} parent=19 // pred_fallthru
        _
    $region20: #{discriminator_block.2} parent=5 // pred_fallthru
      _
    %p166 = scmp.le.s32.totalorder 1, %s11
    %p167 = scmp.lt.s32.totalorder %s11, 3
    %p168 = pnand %p166, %p167
    %p169 = pneg %p168
    // Predicated region
    $region25: #{discriminator_block.2} parent=5 // pred_check
      _
    $region26: #{discriminator_block.2} parent=5 // pred_check_branch
      %171 = sbr.rel (%p168) target = $region28
    $region27: #{discriminator_block.2} parent=5 // pred_region
      %s172 = ssub.s32 %s11, 1
      %p173 = scmp.lt.s32.totalorder %s16, 1
      %s174 = scalar_select %p173, %s16, 1
      %s175 = smul.addr %s174, 54
      %s176 = smul.addr %s175, 4
      %s177 = scalar_lea.vmem %s0, %s176
      %p178 = pneg %p37
      %p179 = pneg %p34
      %p180 = pneg %p58
      %p181 = pneg %p55
      %p182 = pneg %p84
      %p183 = pneg %p81
      %p184 = scmp.lt.s32.totalorder %s16, 1
      %s185 = scalar_select %p184, %s16, 1
      %s186 = smul.addr %s185, 32
      %s187 = smul.addr %s186, 4
      %s188 = scalar_lea.vmem %s2, %s187
      %p189 = pneg %p110
      %p190 = pneg %p107
      %p191 = scmp.lt.s32.totalorder %s16, 1
      %s192 = scalar_select %p191, %s16, 1
      %s193 = scalar_lea.vmem %s3, %s192
      %p194 = pneg %p136
      %p195 = pneg %p133
      %p196 = scmp.lt.s32.totalorder %s16, 1
      %s197 = scalar_select %p196, %s16, 1
      %s198 = scalar_lea.vmem %s4, %s197
      %p199 = scmp.lt.s32.totalorder %s16, 1
      %s200 = scalar_select %p199, %s16, 1
      %s201 = smul.addr %s200, 54
      %s202 = smul.addr %s201, 4
      %s203 = scalar_lea.vmem %s0, %s202
      %p204 = scmp.lt.s32.totalorder %s16, 1
      %s205 = scalar_select %p204, %s16, 1
      %s206 = smul.addr %s205, 32
      %s207 = smul.addr %s206, 4
      %s208 = scalar_lea.vmem %s2, %s207
      %p209 = scmp.lt.s32.totalorder %s16, 1
      %s210 = scalar_select %p209, %s16, 1
      %s211 = scalar_lea.vmem %s3, %s210
      %p212 = scmp.lt.s32.totalorder %s16, 1
      %s213 = scalar_select %p212, %s16, 1
      %s214 = scalar_lea.vmem %s4, %s213
      %216 = vst [vmem:[#allocation2] sm:$0xff] 0.0
      %217 = vst [vmem:[#allocation2 + $0x8] sm:$0xff] 0.0
      %218 = vst [vmem:[#allocation2 + $0x10] sm:$0xff] 0.0
      %219 = vst [vmem:[#allocation2 + $0x18] sm:$0xff] 0.0
      %220 = vst [vmem:[#allocation2 + $0x20] sm:$0xff] 0.0
      %221 = vst [vmem:[#allocation2 + $0x28] sm:$0xff] 0.0
      %222 = vst [vmem:[#allocation2 + $0x30] sm:$0xff] 0.0
      %223 = vst [vmem:[#allocation2 + $0x38] sm:$0xff] 0.0
      %224 = vst [vmem:[#allocation2 + $0x40] sm:$0xff] 0.0
      %225 = vst [vmem:[#allocation2 + $0x48] sm:$0xff] 0.0
      %226 = vst [vmem:[#allocation2 + $0x50] sm:$0xff] 0.0
      %227 = vst [vmem:[#allocation2 + $0x58] sm:$0xff] 0.0
      %228 = vst [vmem:[#allocation2 + $0x60] sm:$0xff] 0.0
      %229 = vst [vmem:[#allocation2 + $0x68] sm:$0xff] 0.0
      %230 = vst [vmem:[#allocation2 + $0x70] sm:$0xff] 0.0
      %231 = vst [vmem:[#allocation2 + $0x78] sm:$0xff] 0.0
      %232 = vst [vmem:[#allocation2 + $0x80] sm:$0xff] 0.0
      %233 = vst [vmem:[#allocation2 + $0x88] sm:$0xff] 0.0
      %234 = vst [vmem:[#allocation2 + $0x90] sm:$0xff] 0.0
      %235 = vst [vmem:[#allocation2 + $0x98] sm:$0xff] 0.0
      %236 = vst [vmem:[#allocation2 + $0xa0] sm:$0xff] 0.0
      %237 = vst [vmem:[#allocation2 + $0xa8] sm:$0xff] 0.0
      %238 = vst [vmem:[#allocation2 + $0xb0] sm:$0xff] 0.0
      %239 = vst [vmem:[#allocation2 + $0xb8] sm:$0xff] 0.0
      %240 = vst [vmem:[#allocation2 + $0xc0] sm:$0xff] 0.0
      %241 = vst [vmem:[#allocation2 + $0xc8] sm:$0xff] 0.0
      %242 = vst [vmem:[#allocation2 + $0xd0] sm:$0xff] 0.0
      %243 = vst [vmem:[#allocation2 + $0xd8] sm:$0xff] 0.0
      %244 = vst [vmem:[#allocation2 + $0xe0] sm:$0xff] 0.0
      %245 = vst [vmem:[#allocation2 + $0xe8] sm:$0xff] 0.0
      %246 = vst [vmem:[#allocation2 + $0xf0] sm:$0xff] 0.0
      %247 = vst [vmem:[#allocation2 + $0xf8] sm:$0xff] 0.0
      %v248 = vld [vmem:[%s203] sm:$0xf]
      %v249 = vld [vmem:[%s203 + $0x4] sm:$0xf]
      %v250 = vld [vmem:[%s203 + $0xc] sm:$0xf]
      %v251 = vld [vmem:[%s203 + $0x10] sm:$0xf]
      %v252 = vld [vmem:[%s203 + $0x18] sm:$0xf]
      %v253 = vld [vmem:[%s203 + $0x1c] sm:$0xf]
      %v254 = vld [vmem:[%s203 + $0x24] sm:$0xf]
      %v255 = vld [vmem:[%s203 + $0x28] sm:$0xf]
      %v256 = vld [vmem:[%s203 + $0x30] sm:$0xf]
      %v257 = vld [vmem:[%s203 + $0x34] sm:$0xf]
      %v258 = vld [vmem:[%s203 + $0x3c] sm:$0xf]
      %v259 = vld [vmem:[%s203 + $0x40] sm:$0xf]
      %v260 = vld [vmem:[%s203 + $0x48] sm:$0xf]
      %v261 = vld [vmem:[%s203 + $0x4c] sm:$0xf]
      %v262 = vld [vmem:[%s203 + $0x54] sm:$0xf]
      %v263 = vld [vmem:[%s203 + $0x58] sm:$0xf]
      %v264 = vld [vmem:[%s203 + $0x60] sm:$0xf]
      %v265 = vld [vmem:[%s203 + $0x64] sm:$0xf]
      %v266 = vld [vmem:[%s203 + $0x6c] sm:$0xf]
      %v267 = vld [vmem:[%s203 + $0x70] sm:$0xf]
      %v268 = vld [vmem:[%s203 + $0x78] sm:$0xf]
      %v269 = vld [vmem:[%s203 + $0x7c] sm:$0xf]
      %v270 = vld [vmem:[%s203 + $0x84] sm:$0xf]
      %v271 = vld [vmem:[%s203 + $0x88] sm:$0xf]
      %v272 = vld [vmem:[%s203 + $0x90] sm:$0xf]
      %v273 = vld [vmem:[%s203 + $0x94] sm:$0xf]
      %v274 = vld [vmem:[%s203 + $0x9c] sm:$0xf]
      %v275 = vld [vmem:[%s203 + $0xa0] sm:$0xf]
      %v276 = vld [vmem:[%s203 + $0xa8] sm:$0xf]
      %v277 = vld [vmem:[%s203 + $0xac] sm:$0xf]
      %v278 = vld [vmem:[%s203 + $0xb4] sm:$0xf]
      %v279 = vld [vmem:[%s203 + $0xb8] sm:$0xf]
      %v280 = vld [vmem:[#allocation2] sm:$0xff]
      %v281 = vld [vmem:[#allocation2 + $0x8] sm:$0xff]
      %v282 = vld [vmem:[#allocation2 + $0x10] sm:$0xff]
      %v283 = vld [vmem:[#allocation2 + $0x18] sm:$0xff]
      %v284 = vld [vmem:[#allocation2 + $0x20] sm:$0xff]
      %v285 = vld [vmem:[#allocation2 + $0x28] sm:$0xff]
      %v286 = vld [vmem:[#allocation2 + $0x30] sm:$0xff]
      %v287 = vld [vmem:[#allocation2 + $0x38] sm:$0xff]
      %v288 = vld [vmem:[#allocation2 + $0x40] sm:$0xff]
      %v289 = vld [vmem:[#allocation2 + $0x48] sm:$0xff]
      %v290 = vld [vmem:[#allocation2 + $0x50] sm:$0xff]
      %v291 = vld [vmem:[#allocation2 + $0x58] sm:$0xff]
      %v292 = vld [vmem:[#allocation2 + $0x60] sm:$0xff]
      %v293 = vld [vmem:[#allocation2 + $0x68] sm:$0xff]
      %v294 = vld [vmem:[#allocation2 + $0x70] sm:$0xff]
      %v295 = vld [vmem:[#allocation2 + $0x78] sm:$0xff]
      %v296 = vld [vmem:[#allocation2 + $0x80] sm:$0xff]
      %v297 = vld [vmem:[#allocation2 + $0x88] sm:$0xff]
      %v298 = vld [vmem:[#allocation2 + $0x90] sm:$0xff]
      %v299 = vld [vmem:[#allocation2 + $0x98] sm:$0xff]
      %v300 = vld [vmem:[#allocation2 + $0xa0] sm:$0xff]
      %v301 = vld [vmem:[#allocation2 + $0xa8] sm:$0xff]
      %v302 = vld [vmem:[#allocation2 + $0xb0] sm:$0xff]
      %v303 = vld [vmem:[#allocation2 + $0xb8] sm:$0xff]
      %v304 = vld [vmem:[#allocation2 + $0xc0] sm:$0xff]
      %v305 = vld [vmem:[#allocation2 + $0xc8] sm:$0xff]
      %v306 = vld [vmem:[#allocation2 + $0xd0] sm:$0xff]
      %v307 = vld [vmem:[#allocation2 + $0xd8] sm:$0xff]
      %v308 = vld [vmem:[#allocation2 + $0xe0] sm:$0xff]
      %v309 = vld [vmem:[#allocation2 + $0xe8] sm:$0xff]
      %v310 = vld [vmem:[#allocation2 + $0xf0] sm:$0xff]
      %v311 = vld [vmem:[#allocation2 + $0xf8] sm:$0xff]
      %v312 = vld [vmem:[%s1] sm:$0x3]
      %v345 = vunpack.c.l.b16 %v248
      %v346 = vunpack.c.l.b16 %v249
      %v347 = vunpack.c.l.b16 %v250
      %v348 = vunpack.c.l.b16 %v251
      %v349 = vunpack.c.l.b16 %v252
      %v350 = vunpack.c.l.b16 %v253
      %v351 = vunpack.c.l.b16 %v254
      %v352 = vunpack.c.l.b16 %v255
      %v353 = vunpack.c.l.b16 %v256
      %v354 = vunpack.c.l.b16 %v257
      %v355 = vunpack.c.l.b16 %v258
      %v356 = vunpack.c.l.b16 %v259
      %v357 = vunpack.c.l.b16 %v260
      %v358 = vunpack.c.l.b16 %v261
      %v359 = vunpack.c.l.b16 %v262
      %v360 = vunpack.c.l.b16 %v263
      %v361 = vunpack.c.l.b16 %v264
      %v362 = vunpack.c.l.b16 %v265
      %v363 = vunpack.c.l.b16 %v266
      %v364 = vunpack.c.l.b16 %v267
      %v365 = vunpack.c.l.b16 %v268
      %v366 = vunpack.c.l.b16 %v269
      %v367 = vunpack.c.l.b16 %v270
      %v368 = vunpack.c.l.b16 %v271
      %v369 = vunpack.c.l.b16 %v272
      %v370 = vunpack.c.l.b16 %v273
      %v371 = vunpack.c.l.b16 %v274
      %v372 = vunpack.c.l.b16 %v275
      %v373 = vunpack.c.l.b16 %v276
      %v374 = vunpack.c.l.b16 %v277
      %v375 = vunpack.c.l.b16 %v278
      %v376 = vunpack.c.l.b16 %v279
      %v377 = vpack.c.b16 %v346, %v345
      %v378 = vpack.c.b16 %v348, %v347
      %v379 = vpack.c.b16 %v350, %v349
      %v380 = vpack.c.b16 %v352, %v351
      %v381 = vpack.c.b16 %v354, %v353
      %v382 = vpack.c.b16 %v356, %v355
      %v383 = vpack.c.b16 %v358, %v357
      %v384 = vpack.c.b16 %v360, %v359
      %v385 = vpack.c.b16 %v362, %v361
      %v386 = vpack.c.b16 %v364, %v363
      %v387 = vpack.c.b16 %v366, %v365
      %v388 = vpack.c.b16 %v368, %v367
      %v389 = vpack.c.b16 %v370, %v369
      %v390 = vpack.c.b16 %v372, %v371
      %v391 = vpack.c.b16 %v374, %v373
      %v392 = vpack.c.b16 %v376, %v375
      %vm393 = vcmask 31744
      %v395 = vsel %vm393, %v377, 0
      %v398 = vsel %vm393, %v378, 0
      %v401 = vsel %vm393, %v379, 0
      %v404 = vsel %vm393, %v380, 0
      %v407 = vsel %vm393, %v381, 0
      %v410 = vsel %vm393, %v382, 0
      %v413 = vsel %vm393, %v383, 0
      %v416 = vsel %vm393, %v384, 0
      %v419 = vsel %vm393, %v385, 0
      %v422 = vsel %vm393, %v386, 0
      %v425 = vsel %vm393, %v387, 0
      %v428 = vsel %vm393, %v388, 0
      %v431 = vsel %vm393, %v389, 0
      %v434 = vsel %vm393, %v390, 0
      %v437 = vsel %vm393, %v391, 0
      %v440 = vsel %vm393, %v392, 0
      %vm442 = vcmask 1041408
      %v444 = vsel %vm442, %v312, 0
      %446 = vmatprep.subr.bf16.mxu0 0
      %447 = vmatpush1.bf16.msra.mxu0 %v444
      %448 = vmatprep.subr.bf16.mxu0 0
      %449 = vmatpush1.bf16.msra.mxu0 0
      %450 = vmatprep.subr.bf16.mxu0 0
      %451 = vmatpush1.bf16.msra.mxu0 0
      %452 = vmatprep.subr.bf16.mxu0 0
      %453 = vmatpush1.bf16.msra.mxu0 0
      %454 = vmatprep.subr.bf16.mxu0 0
      %455 = vmatpush1.bf16.msra.mxu0 0
      %456 = vmatprep.subr.bf16.mxu0 0
      %457 = vmatpush1.bf16.msra.mxu0 0
      %458 = vmatprep.subr.bf16.mxu0 0
      %459 = vmatpush1.bf16.msra.mxu0 0
      %460 = vmatprep.subr.bf16.mxu0 0
      %461 = vmatpush1.bf16.msra.mxu0 0
      %462 = vmatprep.subr.bf16.mxu0 0
      %463 = vmatpush1.bf16.msra.mxu0 0
      %464 = vmatprep.subr.bf16.mxu0 0
      %465 = vmatpush1.bf16.msra.mxu0 0
      %466 = vmatprep.subr.bf16.mxu0 0
      %467 = vmatpush1.bf16.msra.mxu0 0
      %468 = vmatprep.subr.bf16.mxu0 0
      %469 = vmatpush1.bf16.msra.mxu0 0
      %470 = vmatprep.subr.bf16.mxu0 0
      %471 = vmatpush1.bf16.msra.mxu0 0
      %472 = vmatprep.subr.bf16.mxu0 0
      %473 = vmatpush1.bf16.msra.mxu0 0
      %474 = vmatprep.subr.bf16.mxu0 0
      %475 = vmatpush1.bf16.msra.mxu0 0
      %476 = vmatprep.subr.bf16.mxu0 0
      %477 = vmatpush1.bf16.msra.mxu0 0
      %478 = vmatprep.mubr.bf16.mxu0 0
      %479 = vmatmul.mubr.bf16.gmra.mrb[0].mxu0 %v395
      %v480 = vpop.f32.mrb[0].mxu0
      %v481 = vadd.f32 0.0, %v480
      %v482 = vpop.f32.mrb[0].mxu0
      %v483 = vpop.f32.mrb[0].mxu0
      %v484 = vadd.f32 0.0, %v483
      %v485 = vpop.f32.mrb[0].mxu0
      %486 = vmatprep.mubr.bf16.mxu0 0
      %487 = vmatmul.mubr.bf16.gmra.mrb[0].mxu0 %v398
      %v488 = vpop.f32.mrb[0].mxu0
      %v489 = vadd.f32 0.0, %v488
      %v490 = vpop.f32.mrb[0].mxu0
      %v491 = vpop.f32.mrb[0].mxu0
      %v492 = vadd.f32 0.0, %v491
      %v493 = vpop.f32.mrb[0].mxu0
      %494 = vmatprep.mubr.bf16.mxu0 0
      %495 = vmatmul.mubr.bf16.gmra.mrb[0].mxu0 %v401
      %v496 = vpop.f32.mrb[0].mxu0
      %v497 = vadd.f32 0.0, %v496
      %v498 = vpop.f32.mrb[0].mxu0
      %v499 = vpop.f32.mrb[0].mxu0
      %v500 = vadd.f32 0.0, %v499
      %v501 = vpop.f32.mrb[0].mxu0
      %502 = vmatprep.mubr.bf16.mxu0 0
      %503 = vmatmul.mubr.bf16.gmra.mrb[0].mxu0 %v404
      %v504 = vpop.f32.mrb[0].mxu0
      %v505 = vadd.f32 0.0, %v504
      %v506 = vpop.f32.mrb[0].mxu0
      %v507 = vpop.f32.mrb[0].mxu0
      %v508 = vadd.f32 0.0, %v507
      %v509 = vpop.f32.mrb[0].mxu0
      %510 = vmatprep.mubr.bf16.mxu0 0
      %511 = vmatmul.mubr.bf16.gmra.mrb[0].mxu0 %v407
      %v512 = vpop.f32.mrb[0].mxu0
      %v513 = vadd.f32 0.0, %v512
      %v514 = vpop.f32.mrb[0].mxu0
      %v515 = vpop.f32.mrb[0].mxu0
      %v516 = vadd.f32 0.0, %v515
      %v517 = vpop.f32.mrb[0].mxu0
      %518 = vmatprep.mubr.bf16.mxu0 0
      %519 = vmatmul.mubr.bf16.gmra.mrb[0].mxu0 %v410
      %v520 = vpop.f32.mrb[0].mxu0
      %v521 = vadd.f32 0.0, %v520
      %v522 = vpop.f32.mrb[0].mxu0
      %v523 = vpop.f32.mrb[0].mxu0
      %v524 = vadd.f32 0.0, %v523
      %v525 = vpop.f32.mrb[0].mxu0
      %526 = vmatprep.mubr.bf16.mxu0 0
      %527 = vmatmul.mubr.bf16.gmra.mrb[0].mxu0 %v413
      %v528 = vpop.f32.mrb[0].mxu0
      %v529 = vadd.f32 0.0, %v528
      %v530 = vpop.f32.mrb[0].mxu0
      %v531 = vpop.f32.mrb[0].mxu0
      %v532 = vadd.f32 0.0, %v531
      %v533 = vpop.f32.mrb[0].mxu0
      %534 = vmatprep.mubr.bf16.mxu0 0
      %535 = vmatmul.mubr.bf16.gmra.mrb[0].mxu0 %v416
      %v536 = vpop.f32.mrb[0].mxu0
      %v537 = vadd.f32 0.0, %v536
      %v538 = vpop.f32.mrb[0].mxu0
      %v539 = vpop.f32.mrb[0].mxu0
      %v540 = vadd.f32 0.0, %v539
      %v541 = vpop.f32.mrb[0].mxu0
      %542 = vmatprep.mubr.bf16.mxu0 0
      %543 = vmatmul.mubr.bf16.gmra.mrb[0].mxu0 %v419
      %v544 = vpop.f32.mrb[0].mxu0
      %v545 = vadd.f32 0.0, %v544
      %v546 = vpop.f32.mrb[0].mxu0
      %v547 = vpop.f32.mrb[0].mxu0
      %v548 = vadd.f32 0.0, %v547
      %v549 = vpop.f32.mrb[0].mxu0
      %550 = vmatprep.mubr.bf16.mxu0 0
      %551 = vmatmul.mubr.bf16.gmra.mrb[0].mxu0 %v422
      %v552 = vpop.f32.mrb[0].mxu0
      %v553 = vadd.f32 0.0, %v552
      %v554 = vpop.f32.mrb[0].mxu0
      %v555 = vpop.f32.mrb[0].mxu0
      %v556 = vadd.f32 0.0, %v555
      %v557 = vpop.f32.mrb[0].mxu0
      %558 = vmatprep.mubr.bf16.mxu0 0
      %559 = vmatmul.mubr.bf16.gmra.mrb[0].mxu0 %v425
      %v560 = vpop.f32.mrb[0].mxu0
      %v561 = vadd.f32 0.0, %v560
      %v562 = vpop.f32.mrb[0].mxu0
      %v563 = vpop.f32.mrb[0].mxu0
      %v564 = vadd.f32 0.0, %v563
      %v565 = vpop.f32.mrb[0].mxu0
      %566 = vmatprep.mubr.bf16.mxu0 0
      %567 = vmatmul.mubr.bf16.gmra.mrb[0].mxu0 %v428
      %v568 = vpop.f32.mrb[0].mxu0
      %v569 = vadd.f32 0.0, %v568
      %v570 = vpop.f32.mrb[0].mxu0
      %v571 = vpop.f32.mrb[0].mxu0
      %v572 = vadd.f32 0.0, %v571
      %v573 = vpop.f32.mrb[0].mxu0
      %574 = vmatprep.mubr.bf16.mxu0 0
      %575 = vmatmul.mubr.bf16.gmra.mrb[0].mxu0 %v431
      %v576 = vpop.f32.mrb[0].mxu0
      %v577 = vadd.f32 0.0, %v576
      %v578 = vpop.f32.mrb[0].mxu0
      %v579 = vpop.f32.mrb[0].mxu0
      %v580 = vadd.f32 0.0, %v579
      %v581 = vpop.f32.mrb[0].mxu0
      %582 = vmatprep.mubr.bf16.mxu0 0
      %583 = vmatmul.mubr.bf16.gmra.mrb[0].mxu0 %v434
      %v584 = vpop.f32.mrb[0].mxu0
      %v585 = vadd.f32 0.0, %v584
      %v586 = vpop.f32.mrb[0].mxu0
      %v587 = vpop.f32.mrb[0].mxu0
      %v588 = vadd.f32 0.0, %v587
      %v589 = vpop.f32.mrb[0].mxu0
      %590 = vmatprep.mubr.bf16.mxu0 0
      %591 = vmatmul.mubr.bf16.gmra.mrb[0].mxu0 %v437
      %v592 = vpop.f32.mrb[0].mxu0
      %v593 = vadd.f32 0.0, %v592
      %v594 = vpop.f32.mrb[0].mxu0
      %v595 = vpop.f32.mrb[0].mxu0
      %v596 = vadd.f32 0.0, %v595
      %v597 = vpop.f32.mrb[0].mxu0
      %598 = vmatprep.mubr.bf16.mxu0 0
      %599 = vmatmul.mubr.bf16.gmra.mrb[0].mxu0 %v440
      %v600 = vpop.f32.mrb[0].mxu0
      %v601 = vadd.f32 0.0, %v600
      %v602 = vpop.f32.mrb[0].mxu0
      %v603 = vpop.f32.mrb[0].mxu0
      %v604 = vadd.f32 0.0, %v603
      %v605 = vpop.f32.mrb[0].mxu0
      %606 = vdwg.mxu0
      %v607 = vadd.f32 %v280, %v481
      %v608 = vadd.f32 %v281, %v484
      %v609 = vadd.f32 %v282, %v489
      %v610 = vadd.f32 %v283, %v492
      %v611 = vadd.f32 %v284, %v497
      %v612 = vadd.f32 %v285, %v500
      %v613 = vadd.f32 %v286, %v505
      %v614 = vadd.f32 %v287, %v508
      %v615 = vadd.f32 %v288, %v513
      %v616 = vadd.f32 %v289, %v516
      %v617 = vadd.f32 %v290, %v521
      %v618 = vadd.f32 %v291, %v524
      %v619 = vadd.f32 %v292, %v529
      %v620 = vadd.f32 %v293, %v532
      %v621 = vadd.f32 %v294, %v537
      %v622 = vadd.f32 %v295, %v540
      %v623 = vadd.f32 %v296, %v545
      %v624 = vadd.f32 %v297, %v548
      %v625 = vadd.f32 %v298, %v553
      %v626 = vadd.f32 %v299, %v556
      %v627 = vadd.f32 %v300, %v561
      %v628 = vadd.f32 %v301, %v564
      %v629 = vadd.f32 %v302, %v569
      %v630 = vadd.f32 %v303, %v572
      %v631 = vadd.f32 %v304, %v577
      %v632 = vadd.f32 %v305, %v580
      %v633 = vadd.f32 %v306, %v585
      %v634 = vadd.f32 %v307, %v588
      %v635 = vadd.f32 %v308, %v593
      %v636 = vadd.f32 %v309, %v596
      %v637 = vadd.f32 %v310, %v601
      %v638 = vadd.f32 %v311, %v604
      %639 = vst [vmem:[#allocation2] sm:$0xff] %v607
      %640 = vst [vmem:[#allocation2 + $0x8] sm:$0xff] %v608
      %641 = vst [vmem:[#allocation2 + $0x10] sm:$0xff] %v609
      %642 = vst [vmem:[#allocation2 + $0x18] sm:$0xff] %v610
      %643 = vst [vmem:[#allocation2 + $0x20] sm:$0xff] %v611
      %644 = vst [vmem:[#allocation2 + $0x28] sm:$0xff] %v612
      %645 = vst [vmem:[#allocation2 + $0x30] sm:$0xff] %v613
      %646 = vst [vmem:[#allocation2 + $0x38] sm:$0xff] %v614
      %647 = vst [vmem:[#allocation2 + $0x40] sm:$0xff] %v615
      %648 = vst [vmem:[#allocation2 + $0x48] sm:$0xff] %v616
      %649 = vst [vmem:[#allocation2 + $0x50] sm:$0xff] %v617
      %650 = vst [vmem:[#allocation2 + $0x58] sm:$0xff] %v618
      %651 = vst [vmem:[#allocation2 + $0x60] sm:$0xff] %v619
      %652 = vst [vmem:[#allocation2 + $0x68] sm:$0xff] %v620
      %653 = vst [vmem:[#allocation2 + $0x70] sm:$0xff] %v621
      %654 = vst [vmem:[#allocation2 + $0x78] sm:$0xff] %v622
      %655 = vst [vmem:[#allocation2 + $0x80] sm:$0xff] %v623
      %656 = vst [vmem:[#allocation2 + $0x88] sm:$0xff] %v624
      %657 = vst [vmem:[#allocation2 + $0x90] sm:$0xff] %v625
      %658 = vst [vmem:[#allocation2 + $0x98] sm:$0xff] %v626
      %659 = vst [vmem:[#allocation2 + $0xa0] sm:$0xff] %v627
      %660 = vst [vmem:[#allocation2 + $0xa8] sm:$0xff] %v628
      %661 = vst [vmem:[#allocation2 + $0xb0] sm:$0xff] %v629
      %662 = vst [vmem:[#allocation2 + $0xb8] sm:$0xff] %v630
      %663 = vst [vmem:[#allocation2 + $0xc0] sm:$0xff] %v631
      %664 = vst [vmem:[#allocation2 + $0xc8] sm:$0xff] %v632
      %665 = vst [vmem:[#allocation2 + $0xd0] sm:$0xff] %v633
      %666 = vst [vmem:[#allocation2 + $0xd8] sm:$0xff] %v634
      %667 = vst [vmem:[#allocation2 + $0xe0] sm:$0xff] %v635
      %668 = vst [vmem:[#allocation2 + $0xe8] sm:$0xff] %v636
      %669 = vst [vmem:[#allocation2 + $0xf0] sm:$0xff] %v637
      %670 = vst [vmem:[#allocation2 + $0xf8] sm:$0xff] %v638
      %v671 = vld [vmem:[%s203] sm:$0xf]
      %v672 = vld [vmem:[%s203 + $0x4] sm:$0xf]
      %v673 = vld [vmem:[%s203 + $0x8] sm:$0x1]
      %v674 = vld [vmem:[%s203 + $0xc] sm:$0xf]
      %v675 = vld [vmem:[%s203 + $0x10] sm:$0xf]
      %v676 = vld [vmem:[%s203 + $0x14] sm:$0x1]
      %v677 = vld [vmem:[%s203 + $0x18] sm:$0xf]
      %v678 = vld [vmem:[%s203 + $0x1c] sm:$0xf]
      %v679 = vld [vmem:[%s203 + $0x20] sm:$0x1]
      %v680 = vld [vmem:[%s203 + $0x24] sm:$0xf]
      %v681 = vld [vmem:[%s203 + $0x28] sm:$0xf]
      %v682 = vld [vmem:[%s203 + $0x2c] sm:$0x1]
      %v683 = vld [vmem:[%s203 + $0x30] sm:$0xf]
      %v684 = vld [vmem:[%s203 + $0x34] sm:$0xf]
      %v685 = vld [vmem:[%s203 + $0x38] sm:$0x1]
      %v686 = vld [vmem:[%s203 + $0x3c] sm:$0xf]
      %v687 = vld [vmem:[%s203 + $0x40] sm:$0xf]
      %v688 = vld [vmem:[%s203 + $0x44] sm:$0x1]
      %v689 = vld [vmem:[%s203 + $0x48] sm:$0xf]
      %v690 = vld [vmem:[%s203 + $0x4c] sm:$0xf]
      %v691 = vld [vmem:[%s203 + $0x50] sm:$0x1]
      %v692 = vld [vmem:[%s203 + $0x54] sm:$0xf]
      %v693 = vld [vmem:[%s203 + $0x58] sm:$0xf]
      %v694 = vld [vmem:[%s203 + $0x5c] sm:$0x1]
      %v695 = vld [vmem:[%s203 + $0x60] sm:$0xf]
      %v696 = vld [vmem:[%s203 + $0x64] sm:$0xf]
      %v697 = vld [vmem:[%s203 + $0x68] sm:$0x1]
      %v698 = vld [vmem:[%s203 + $0x6c] sm:$0xf]
      %v699 = vld [vmem:[%s203 + $0x70] sm:$0xf]
      %v700 = vld [vmem:[%s203 + $0x74] sm:$0x1]
      %v701 = vld [vmem:[%s203 + $0x78] sm:$0xf]
      %v702 = vld [vmem:[%s203 + $0x7c] sm:$0xf]
      %v703 = vld [vmem:[%s203 + $0x80] sm:$0x1]
      %v704 = vld [vmem:[%s203 + $0x84] sm:$0xf]
      %v705 = vld [vmem:[%s203 + $0x88] sm:$0xf]
      %v706 = vld [vmem:[%s203 + $0x8c] sm:$0x1]
      %v707 = vld [vmem:[%s203 + $0x90] sm:$0xf]
      %v708 = vld [vmem:[%s203 + $0x94] sm:$0xf]
      %v709 = vld [vmem:[%s203 + $0x98] sm:$0x1]
      %v710 = vld [vmem:[%s203 + $0x9c] sm:$0xf]
      %v711 = vld [vmem:[%s203 + $0xa0] sm:$0xf]
      %v712 = vld [vmem:[%s203 + $0xa4] sm:$0x1]
      %v713 = vld [vmem:[%s203 + $0xa8] sm:$0xf]
      %v714 = vld [vmem:[%s203 + $0xac] sm:$0xf]
      %v715 = vld [vmem:[%s203 + $0xb0] sm:$0x1]
      %v716 = vld [vmem:[%s203 + $0xb4] sm:$0xf]
      %v717 = vld [vmem:[%s203 + $0xb8] sm:$0xf]
      %v718 = vld [vmem:[%s203 + $0xbc] sm:$0x1]
      %v719 = vld [vmem:[#allocation2] sm:$0xff]
      %v720 = vld [vmem:[#allocation2 + $0x8] sm:$0xff]
      %v721 = vld [vmem:[#allocation2 + $0x10] sm:$0xff]
      %v722 = vld [vmem:[#allocation2 + $0x18] sm:$0xff]
      %v723 = vld [vmem:[#allocation2 + $0x20] sm:$0xff]
      %v724 = vld [vmem:[#allocation2 + $0x28] sm:$0xff]
      %v725 = vld [vmem:[#allocation2 + $0x30] sm:$0xff]
      %v726 = vld [vmem:[#allocation2 + $0x38] sm:$0xff]
      %v727 = vld [vmem:[#allocation2 + $0x40] sm:$0xff]
      %v728 = vld [vmem:[#allocation2 + $0x48] sm:$0xff]
      %v729 = vld [vmem:[#allocation2 + $0x50] sm:$0xff]
      %v730 = vld [vmem:[#allocation2 + $0x58] sm:$0xff]
      %v731 = vld [vmem:[#allocation2 + $0x60] sm:$0xff]
      %v732 = vld [vmem:[#allocation2 + $0x68] sm:$0xff]
      %v733 = vld [vmem:[#allocation2 + $0x70] sm:$0xff]
      %v734 = vld [vmem:[#allocation2 + $0x78] sm:$0xff]
      %v735 = vld [vmem:[#allocation2 + $0x80] sm:$0xff]
      %v736 = vld [vmem:[#allocation2 + $0x88] sm:$0xff]
      %v737 = vld [vmem:[#allocation2 + $0x90] sm:$0xff]
      %v738 = vld [vmem:[#allocation2 + $0x98] sm:$0xff]
      %v739 = vld [vmem:[#allocation2 + $0xa0] sm:$0xff]
      %v740 = vld [vmem:[#allocation2 + $0xa8] sm:$0xff]
      %v741 = vld [vmem:[#allocation2 + $0xb0] sm:$0xff]
      %v742 = vld [vmem:[#allocation2 + $0xb8] sm:$0xff]
      %v743 = vld [vmem:[#allocation2 + $0xc0] sm:$0xff]
      %v744 = vld [vmem:[#allocation2 + $0xc8] sm:$0xff]
      %v745 = vld [vmem:[#allocation2 + $0xd0] sm:$0xff]
      %v746 = vld [vmem:[#allocation2 + $0xd8] sm:$0xff]
      %v747 = vld [vmem:[#allocation2 + $0xe0] sm:$0xff]
      %v748 = vld [vmem:[#allocation2 + $0xe8] sm:$0xff]
      %v749 = vld [vmem:[#allocation2 + $0xf0] sm:$0xff]
      %v750 = vld [vmem:[#allocation2 + $0xf8] sm:$0xff]
      %vm751 = vsmask.f32 3328
      %vm752 = vsmask.f32 7440
      %vm753 = vmor %vm751, %vm752
      %v755 = vshrl.u32 %v671, 16
      %v757 = vrot.slane %v755, 4
      %v758 = vshll.u32 %v671, 16
      %v760 = vrot.slane %v758, 5
      %v761 = vor.u32 %v757, %v760
      %v762 = vrot.slane %v761, 4
      %v764 = vshll.u32 %v672, 16
      %v766 = vrot.slane %v764, 5
      %v767 = vsel %vm753, %v762, %v766
      %v768 = vshrl.u32 %v672, 16
      %v770 = vrot.slane %v768, 4
      %v771 = vor.u32 %v770, %v766
      %v772 = vrot.slane %v771, 4
      %v774 = vshll.u32 %v673, 16
      %v776 = vrot.slane %v774, 5
      %v777 = vsel %vm753, %v772, %v776
      %v779 = vshrl.u32 %v674, 16
      %v781 = vrot.slane %v779, 4
      %v782 = vshll.u32 %v674, 16
      %v784 = vrot.slane %v782, 5
      %v785 = vor.u32 %v781, %v784
      %v786 = vrot.slane %v785, 4
      %v788 = vshll.u32 %v675, 16
      %v790 = vrot.slane %v788, 5
      %v791 = vsel %vm753, %v786, %v790
      %v792 = vshrl.u32 %v675, 16
      %v794 = vrot.slane %v792, 4
      %v795 = vor.u32 %v794, %v790
      %v796 = vrot.slane %v795, 4
      %v798 = vshll.u32 %v676, 16
      %v800 = vrot.slane %v798, 5
      %v801 = vsel %vm753, %v796, %v800
      %v803 = vshrl.u32 %v677, 16
      %v805 = vrot.slane %v803, 4
      %v806 = vshll.u32 %v677, 16
      %v808 = vrot.slane %v806, 5
      %v809 = vor.u32 %v805, %v808
      %v810 = vrot.slane %v809, 4
      %v812 = vshll.u32 %v678, 16
      %v814 = vrot.slane %v812, 5
      %v815 = vsel %vm753, %v810, %v814
      %v816 = vshrl.u32 %v678, 16
      %v818 = vrot.slane %v816, 4
      %v819 = vor.u32 %v818, %v814
      %v820 = vrot.slane %v819, 4
      %v822 = vshll.u32 %v679, 16
      %v824 = vrot.slane %v822, 5
      %v825 = vsel %vm753, %v820, %v824
      %v827 = vshrl.u32 %v680, 16
      %v829 = vrot.slane %v827, 4
      %v830 = vshll.u32 %v680, 16
      %v832 = vrot.slane %v830, 5
      %v833 = vor.u32 %v829, %v832
      %v834 = vrot.slane %v833, 4
      %v836 = vshll.u32 %v681, 16
      %v838 = vrot.slane %v836, 5
      %v839 = vsel %vm753, %v834, %v838
      %v840 = vshrl.u32 %v681, 16
      %v842 = vrot.slane %v840, 4
      %v843 = vor.u32 %v842, %v838
      %v844 = vrot.slane %v843, 4
      %v846 = vshll.u32 %v682, 16
      %v848 = vrot.slane %v846, 5
      %v849 = vsel %vm753, %v844, %v848
      %v851 = vshrl.u32 %v683, 16
      %v853 = vrot.slane %v851, 4
      %v854 = vshll.u32 %v683, 16
      %v856 = vrot.slane %v854, 5
      %v857 = vor.u32 %v853, %v856
      %v858 = vrot.slane %v857, 4
      %v860 = vshll.u32 %v684, 16
      %v862 = vrot.slane %v860, 5
      %v863 = vsel %vm753, %v858, %v862
      %v864 = vshrl.u32 %v684, 16
      %v866 = vrot.slane %v864, 4
      %v867 = vor.u32 %v866, %v862
      %v868 = vrot.slane %v867, 4
      %v870 = vshll.u32 %v685, 16
      %v872 = vrot.slane %v870, 5
      %v873 = vsel %vm753, %v868, %v872
      %v875 = vshrl.u32 %v686, 16
      %v877 = vrot.slane %v875, 4
      %v878 = vshll.u32 %v686, 16
      %v880 = vrot.slane %v878, 5
      %v881 = vor.u32 %v877, %v880
      %v882 = vrot.slane %v881, 4
      %v884 = vshll.u32 %v687, 16
      %v886 = vrot.slane %v884, 5
      %v887 = vsel %vm753, %v882, %v886
      %v888 = vshrl.u32 %v687, 16
      %v890 = vrot.slane %v888, 4
      %v891 = vor.u32 %v890, %v886
      %v892 = vrot.slane %v891, 4
      %v894 = vshll.u32 %v688, 16
      %v896 = vrot.slane %v894, 5
      %v897 = vsel %vm753, %v892, %v896
      %v899 = vshrl.u32 %v689, 16
      %v901 = vrot.slane %v899, 4
      %v902 = vshll.u32 %v689, 16
      %v904 = vrot.slane %v902, 5
      %v905 = vor.u32 %v901, %v904
      %v906 = vrot.slane %v905, 4
      %v908 = vshll.u32 %v690, 16
      %v910 = vrot.slane %v908, 5
      %v911 = vsel %vm753, %v906, %v910
      %v912 = vshrl.u32 %v690, 16
      %v914 = vrot.slane %v912, 4
      %v915 = vor.u32 %v914, %v910
      %v916 = vrot.slane %v915, 4
      %v918 = vshll.u32 %v691, 16
      %v920 = vrot.slane %v918, 5
      %v921 = vsel %vm753, %v916, %v920
      %v923 = vshrl.u32 %v692, 16
      %v925 = vrot.slane %v923, 4
      %v926 = vshll.u32 %v692, 16
      %v928 = vrot.slane %v926, 5
      %v929 = vor.u32 %v925, %v928
      %v930 = vrot.slane %v929, 4
      %v932 = vshll.u32 %v693, 16
      %v934 = vrot.slane %v932, 5
      %v935 = vsel %vm753, %v930, %v934
      %v936 = vshrl.u32 %v693, 16
      %v938 = vrot.slane %v936, 4
      %v939 = vor.u32 %v938, %v934
      %v940 = vrot.slane %v939, 4
      %v942 = vshll.u32 %v694, 16
      %v944 = vrot.slane %v942, 5
      %v945 = vsel %vm753, %v940, %v944
      %v947 = vshrl.u32 %v695, 16
      %v949 = vrot.slane %v947, 4
      %v950 = vshll.u32 %v695, 16
      %v952 = vrot.slane %v950, 5
      %v953 = vor.u32 %v949, %v952
      %v954 = vrot.slane %v953, 4
      %v956 = vshll.u32 %v696, 16
      %v958 = vrot.slane %v956, 5
      %v959 = vsel %vm753, %v954, %v958
      %v960 = vshrl.u32 %v696, 16
      %v962 = vrot.slane %v960, 4
      %v963 = vor.u32 %v962, %v958
      %v964 = vrot.slane %v963, 4
      %v966 = vshll.u32 %v697, 16
      %v968 = vrot.slane %v966, 5
      %v969 = vsel %vm753, %v964, %v968
      %v971 = vshrl.u32 %v698, 16
      %v973 = vrot.slane %v971, 4
      %v974 = vshll.u32 %v698, 16
      %v976 = vrot.slane %v974, 5
      %v977 = vor.u32 %v973, %v976
      %v978 = vrot.slane %v977, 4
      %v980 = vshll.u32 %v699, 16
      %v982 = vrot.slane %v980, 5
      %v983 = vsel %vm753, %v978, %v982
      %v984 = vshrl.u32 %v699, 16
      %v986 = vrot.slane %v984, 4
      %v987 = vor.u32 %v986, %v982
      %v988 = vrot.slane %v987, 4
      %v990 = vshll.u32 %v700, 16
      %v992 = vrot.slane %v990, 5
      %v993 = vsel %vm753, %v988, %v992
      %v995 = vshrl.u32 %v701, 16
      %v997 = vrot.slane %v995, 4
      %v998 = vshll.u32 %v701, 16
      %v1000 = vrot.slane %v998, 5
      %v1001 = vor.u32 %v997, %v1000
      %v1002 = vrot.slane %v1001, 4
      %v1004 = vshll.u32 %v702, 16
      %v1006 = vrot.slane %v1004, 5
      %v1007 = vsel %vm753, %v1002, %v1006
      %v1008 = vshrl.u32 %v702, 16
      %v1010 = vrot.slane %v1008, 4
      %v1011 = vor.u32 %v1010, %v1006
      %v1012 = vrot.slane %v1011, 4
      %v1014 = vshll.u32 %v703, 16
      %v1016 = vrot.slane %v1014, 5
      %v1017 = vsel %vm753, %v1012, %v1016
      %v1019 = vshrl.u32 %v704, 16
      %v1021 = vrot.slane %v1019, 4
      %v1022 = vshll.u32 %v704, 16
      %v1024 = vrot.slane %v1022, 5
      %v1025 = vor.u32 %v1021, %v1024
      %v1026 = vrot.slane %v1025, 4
      %v1028 = vshll.u32 %v705, 16
      %v1030 = vrot.slane %v1028, 5
      %v1031 = vsel %vm753, %v1026, %v1030
      %v1032 = vshrl.u32 %v705, 16
      %v1034 = vrot.slane %v1032, 4
      %v1035 = vor.u32 %v1034, %v1030
      %v1036 = vrot.slane %v1035, 4
      %v1038 = vshll.u32 %v706, 16
      %v1040 = vrot.slane %v1038, 5
      %v1041 = vsel %vm753, %v1036, %v1040
      %v1043 = vshrl.u32 %v707, 16
      %v1045 = vrot.slane %v1043, 4
      %v1046 = vshll.u32 %v707, 16
      %v1048 = vrot.slane %v1046, 5
      %v1049 = vor.u32 %v1045, %v1048
      %v1050 = vrot.slane %v1049, 4
      %v1052 = vshll.u32 %v708, 16
      %v1054 = vrot.slane %v1052, 5
      %v1055 = vsel %vm753, %v1050, %v1054
      %v1056 = vshrl.u32 %v708, 16
      %v1058 = vrot.slane %v1056, 4
      %v1059 = vor.u32 %v1058, %v1054
      %v1060 = vrot.slane %v1059, 4
      %v1062 = vshll.u32 %v709, 16
      %v1064 = vrot.slane %v1062, 5
      %v1065 = vsel %vm753, %v1060, %v1064
      %v1067 = vshrl.u32 %v710, 16
      %v1069 = vrot.slane %v1067, 4
      %v1070 = vshll.u32 %v710, 16
      %v1072 = vrot.slane %v1070, 5
      %v1073 = vor.u32 %v1069, %v1072
      %v1074 = vrot.slane %v1073, 4
      %v1076 = vshll.u32 %v711, 16
      %v1078 = vrot.slane %v1076, 5
      %v1079 = vsel %vm753, %v1074, %v1078
      %v1080 = vshrl.u32 %v711, 16
      %v1082 = vrot.slane %v1080, 4
      %v1083 = vor.u32 %v1082, %v1078
      %v1084 = vrot.slane %v1083, 4
      %v1086 = vshll.u32 %v712, 16
      %v1088 = vrot.slane %v1086, 5
      %v1089 = vsel %vm753, %v1084, %v1088
      %v1091 = vshrl.u32 %v713, 16
      %v1093 = vrot.slane %v1091, 4
      %v1094 = vshll.u32 %v713, 16
      %v1096 = vrot.slane %v1094, 5
      %v1097 = vor.u32 %v1093, %v1096
      %v1098 = vrot.slane %v1097, 4
      %v1100 = vshll.u32 %v714, 16
      %v1102 = vrot.slane %v1100, 5
      %v1103 = vsel %vm753, %v1098, %v1102
      %v1104 = vshrl.u32 %v714, 16
      %v1106 = vrot.slane %v1104, 4
      %v1107 = vor.u32 %v1106, %v1102
      %v1108 = vrot.slane %v1107, 4
      %v1110 = vshll.u32 %v715, 16
      %v1112 = vrot.slane %v1110, 5
      %v1113 = vsel %vm753, %v1108, %v1112
      %v1115 = vshrl.u32 %v716, 16
      %v1117 = vrot.slane %v1115, 4
      %v1118 = vshll.u32 %v716, 16
      %v1120 = vrot.slane %v1118, 5
      %v1121 = vor.u32 %v1117, %v1120
      %v1122 = vrot.slane %v1121, 4
      %v1124 = vshll.u32 %v717, 16
      %v1126 = vrot.slane %v1124, 5
      %v1127 = vsel %vm753, %v1122, %v1126
      %v1128 = vshrl.u32 %v717, 16
      %v1130 = vrot.slane %v1128, 4
      %v1131 = vor.u32 %v1130, %v1126
      %v1132 = vrot.slane %v1131, 4
      %v1134 = vshll.u32 %v718, 16
      %v1136 = vrot.slane %v1134, 5
      %v1137 = vsel %vm753, %v1132, %v1136
      %s1138 = scalar_lea.vmem %s1, 2
      %v1139 = vld [vmem:[%s1138] sm:$0x3]
      %v1140 = vunpack.c.l.b16 %v767
      %v1141 = vunpack.c.l.b16 %v777
      %v1142 = vunpack.c.l.b16 %v791
      %v1143 = vunpack.c.l.b16 %v801
      %v1144 = vunpack.c.l.b16 %v815
      %v1145 = vunpack.c.l.b16 %v825
      %v1146 = vunpack.c.l.b16 %v839
      %v1147 = vunpack.c.l.b16 %v849
      %v1148 = vunpack.c.l.b16 %v863
      %v1149 = vunpack.c.l.b16 %v873
      %v1150 = vunpack.c.l.b16 %v887
      %v1151 = vunpack.c.l.b16 %v897
      %v1152 = vunpack.c.l.b16 %v911
      %v1153 = vunpack.c.l.b16 %v921
      %v1154 = vunpack.c.l.b16 %v935
      %v1155 = vunpack.c.l.b16 %v945
      %v1156 = vunpack.c.l.b16 %v959
      %v1157 = vunpack.c.l.b16 %v969
      %v1158 = vunpack.c.l.b16 %v983
      %v1159 = vunpack.c.l.b16 %v993
      %v1160 = vunpack.c.l.b16 %v1007
      %v1161 = vunpack.c.l.b16 %v1017
      %v1162 = vunpack.c.l.b16 %v1031
      %v1163 = vunpack.c.l.b16 %v1041
      %v1164 = vunpack.c.l.b16 %v1055
      %v1165 = vunpack.c.l.b16 %v1065
      %v1166 = vunpack.c.l.b16 %v1079
      %v1167 = vunpack.c.l.b16 %v1089
      %v1168 = vunpack.c.l.b16 %v1103
      %v1169 = vunpack.c.l.b16 %v1113
      %v1170 = vunpack.c.l.b16 %v1127
      %v1171 = vunpack.c.l.b16 %v1137
      %v1172 = vpack.c.b16 %v1141, %v1140
      %v1173 = vpack.c.b16 %v1143, %v1142
      %v1174 = vpack.c.b16 %v1145, %v1144
      %v1175 = vpack.c.b16 %v1147, %v1146
      %v1176 = vpack.c.b16 %v1149, %v1148
      %v1177 = vpack.c.b16 %v1151, %v1150
      %v1178 = vpack.c.b16 %v1153, %v1152
      %v1179 = vpack.c.b16 %v1155, %v1154
      %v1180 = vpack.c.b16 %v1157, %v1156
      %v1181 = vpack.c.b16 %v1159, %v1158
      %v1182 = vpack.c.b16 %v1161, %v1160
      %v1183 = vpack.c.b16 %v1163, %v1162
      %v1184 = vpack.c.b16 %v1165, %v1164
      %v1185 = vpack.c.b16 %v1167, %v1166
      %v1186 = vpack.c.b16 %v1169, %v1168
      %v1187 = vpack.c.b16 %v1171, %v1170
      %v1189 = vsel %vm393, %v1172, 0
      %v1192 = vsel %vm393, %v1173, 0
      %v1195 = vsel %vm393, %v1174, 0
      %v1198 = vsel %vm393, %v1175, 0
      %v1201 = vsel %vm393, %v1176, 0
      %v1204 = vsel %vm393, %v1177, 0
      %v1207 = vsel %vm393, %v1178, 0
      %v1210 = vsel %vm393, %v1179, 0
      %v1213 = vsel %vm393, %v1180, 0
      %v1216 = vsel %vm393, %v1181, 0
      %v1219 = vsel %vm393, %v1182, 0
      %v1222 = vsel %vm393, %v1183, 0
      %v1225 = vsel %vm393, %v1184, 0
      %v1228 = vsel %vm393, %v1185, 0
      %v1231 = vsel %vm393, %v1186, 0
      %v1234 = vsel %vm393, %v1187, 0
      %v1237 = vsel %vm442, %v1139, 0
      %1239 = vmatprep.subr.bf16.mxu0 0
      %1240 = vmatpush1.bf16.msra.mxu0 %v1237
      %1241 = vmatprep.subr.bf16.mxu0 0
      %1242 = vmatpush1.bf16.msra.mxu0 0
      %1243 = vmatprep.subr.bf16.mxu0 0
      %1244 = vmatpush1.bf16.msra.mxu0 0
      %1245 = vmatprep.subr.bf16.mxu0 0
      %1246 = vmatpush1.bf16.msra.mxu0 0
      %1247 = vmatprep.subr.bf16.mxu0 0
      %1248 = vmatpush1.bf16.msra.mxu0 0
      %1249 = vmatprep.subr.bf16.mxu0 0
      %1250 = vmatpush1.bf16.msra.mxu0 0
      %1251 = vmatprep.subr.bf16.mxu0 0
      %1252 = vmatpush1.bf16.msra.mxu0 0
      %1253 = vmatprep.subr.bf16.mxu0 0
      %1254 = vmatpush1.bf16.msra.mxu0 0
      %1255 = vmatprep.subr.bf16.mxu0 0
      %1256 = vmatpush1.bf16.msra.mxu0 0
      %1257 = vmatprep.subr.bf16.mxu0 0
      %1258 = vmatpush1.bf16.msra.mxu0 0
      %1259 = vmatprep.subr.bf16.mxu0 0
      %1260 = vmatpush1.bf16.msra.mxu0 0
      %1261 = vmatprep.subr.bf16.mxu0 0
      %1262 = vmatpush1.bf16.msra.mxu0 0
      %1263 = vmatprep.subr.bf16.mxu0 0
      %1264 = vmatpush1.bf16.msra.mxu0 0
      %1265 = vmatprep.subr.bf16.mxu0 0
      %1266 = vmatpush1.bf16.msra.mxu0 0
      %1267 = vmatprep.subr.bf16.mxu0 0
      %1268 = vmatpush1.bf16.msra.mxu0 0
      %1269 = vmatprep.subr.bf16.mxu0 0
      %1270 = vmatpush1.bf16.msra.mxu0 0
      %1271 = vmatprep.mubr.bf16.mxu0 0
      %1272 = vmatmul.mubr.bf16.gmra.mrb[0].mxu0 %v1189
      %v1273 = vpop.f32.mrb[0].mxu0
      %v1274 = vadd.f32 0.0, %v1273
      %v1275 = vpop.f32.mrb[0].mxu0
      %v1276 = vpop.f32.mrb[0].mxu0
      %v1277 = vadd.f32 0.0, %v1276
      %v1278 = vpop.f32.mrb[0].mxu0
      %1279 = vmatprep.mubr.bf16.mxu0 0
      %1280 = vmatmul.mubr.bf16.gmra.mrb[0].mxu0 %v1192
      %v1281 = vpop.f32.mrb[0].mxu0
      %v1282 = vadd.f32 0.0, %v1281
      %v1283 = vpop.f32.mrb[0].mxu0
      %v1284 = vpop.f32.mrb[0].mxu0
      %v1285 = vadd.f32 0.0, %v1284
      %v1286 = vpop.f32.mrb[0].mxu0
      %1287 = vmatprep.mubr.bf16.mxu0 0
      %1288 = vmatmul.mubr.bf16.gmra.mrb[0].mxu0 %v1195
      %v1289 = vpop.f32.mrb[0].mxu0
      %v1290 = vadd.f32 0.0, %v1289
      %v1291 = vpop.f32.mrb[0].mxu0
      %v1292 = vpop.f32.mrb[0].mxu0
      %v1293 = vadd.f32 0.0, %v1292
      %v1294 = vpop.f32.mrb[0].mxu0
      %1295 = vmatprep.mubr.bf16.mxu0 0
      %1296 = vmatmul.mubr.bf16.gmra.mrb[0].mxu0 %v1198
      %v1297 = vpop.f32.mrb[0].mxu0
      %v1298 = vadd.f32 0.0, %v1297
      %v1299 = vpop.f32.mrb[0].mxu0
      %v1300 = vpop.f32.mrb[0].mxu0
      %v1301 = vadd.f32 0.0, %v1300
      %v1302 = vpop.f32.mrb[0].mxu0
      %1303 = vmatprep.mubr.bf16.mxu0 0
      %1304 = vmatmul.mubr.bf16.gmra.mrb[0].mxu0 %v1201
      %v1305 = vpop.f32.mrb[0].mxu0
      %v1306 = vadd.f32 0.0, %v1305
      %v1307 = vpop.f32.mrb[0].mxu0
      %v1308 = vpop.f32.mrb[0].mxu0
      %v1309 = vadd.f32 0.0, %v1308
      %v1310 = vpop.f32.mrb[0].mxu0
      %1311 = vmatprep.mubr.bf16.mxu0 0
      %1312 = vmatmul.mubr.bf16.gmra.mrb[0].mxu0 %v1204
      %v1313 = vpop.f32.mrb[0].mxu0
      %v1314 = vadd.f32 0.0, %v1313
      %v1315 = vpop.f32.mrb[0].mxu0
      %v1316 = vpop.f32.mrb[0].mxu0
      %v1317 = vadd.f32 0.0, %v1316
      %v1318 = vpop.f32.mrb[0].mxu0
      %1319 = vmatprep.mubr.bf16.mxu0 0
      %1320 = vmatmul.mubr.bf16.gmra.mrb[0].mxu0 %v1207
      %v1321 = vpop.f32.mrb[0].mxu0
      %v1322 = vadd.f32 0.0, %v1321
      %v1323 = vpop.f32.mrb[0].mxu0
      %v1324 = vpop.f32.mrb[0].mxu0
      %v1325 = vadd.f32 0.0, %v1324
      %v1326 = vpop.f32.mrb[0].mxu0
      %1327 = vmatprep.mubr.bf16.mxu0 0
      %1328 = vmatmul.mubr.bf16.gmra.mrb[0].mxu0 %v1210
      %v1329 = vpop.f32.mrb[0].mxu0
      %v1330 = vadd.f32 0.0, %v1329
      %v1331 = vpop.f32.mrb[0].mxu0
      %v1332 = vpop.f32.mrb[0].mxu0
      %v1333 = vadd.f32 0.0, %v1332
      %v1334 = vpop.f32.mrb[0].mxu0
      %1335 = vmatprep.mubr.bf16.mxu0 0
      %1336 = vmatmul.mubr.bf16.gmra.mrb[0].mxu0 %v1213
      %v1337 = vpop.f32.mrb[0].mxu0
      %v1338 = vadd.f32 0.0, %v1337
      %v1339 = vpop.f32.mrb[0].mxu0
      %v1340 = vpop.f32.mrb[0].mxu0
      %v1341 = vadd.f32 0.0, %v1340
      %v1342 = vpop.f32.mrb[0].mxu0
      %1343 = vmatprep.mubr.bf16.mxu0 0
      %1344 = vmatmul.mubr.bf16.gmra.mrb[0].mxu0 %v1216
      %v1345 = vpop.f32.mrb[0].mxu0
      %v1346 = vadd.f32 0.0, %v1345
      %v1347 = vpop.f32.mrb[0].mxu0
      %v1348 = vpop.f32.mrb[0].mxu0
      %v1349 = vadd.f32 0.0, %v1348
      %v1350 = vpop.f32.mrb[0].mxu0
      %1351 = vmatprep.mubr.bf16.mxu0 0
      %1352 = vmatmul.mubr.bf16.gmra.mrb[0].mxu0 %v1219
      %v1353 = vpop.f32.mrb[0].mxu0
      %v1354 = vadd.f32 0.0, %v1353
      %v1355 = vpop.f32.mrb[0].mxu0
      %v1356 = vpop.f32.mrb[0].mxu0
      %v1357 = vadd.f32 0.0, %v1356
      %v1358 = vpop.f32.mrb[0].mxu0
      %1359 = vmatprep.mubr.bf16.mxu0 0
      %1360 = vmatmul.mubr.bf16.gmra.mrb[0].mxu0 %v1222
      %v1361 = vpop.f32.mrb[0].mxu0
      %v1362 = vadd.f32 0.0, %v1361
      %v1363 = vpop.f32.mrb[0].mxu0
      %v1364 = vpop.f32.mrb[0].mxu0
      %v1365 = vadd.f32 0.0, %v1364
      %v1366 = vpop.f32.mrb[0].mxu0
      %1367 = vmatprep.mubr.bf16.mxu0 0
      %1368 = vmatmul.mubr.bf16.gmra.mrb[0].mxu0 %v1225
      %v1369 = vpop.f32.mrb[0].mxu0
      %v1370 = vadd.f32 0.0, %v1369
      %v1371 = vpop.f32.mrb[0].mxu0
      %v1372 = vpop.f32.mrb[0].mxu0
      %v1373 = vadd.f32 0.0, %v1372
      %v1374 = vpop.f32.mrb[0].mxu0
      %1375 = vmatprep.mubr.bf16.mxu0 0
      %1376 = vmatmul.mubr.bf16.gmra.mrb[0].mxu0 %v1228
      %v1377 = vpop.f32.mrb[0].mxu0
      %v1378 = vadd.f32 0.0, %v1377
      %v1379 = vpop.f32.mrb[0].mxu0
      %v1380 = vpop.f32.mrb[0].mxu0
      %v1381 = vadd.f32 0.0, %v1380
      %v1382 = vpop.f32.mrb[0].mxu0
      %1383 = vmatprep.mubr.bf16.mxu0 0
      %1384 = vmatmul.mubr.bf16.gmra.mrb[0].mxu0 %v1231
      %v1385 = vpop.f32.mrb[0].mxu0
      %v1386 = vadd.f32 0.0, %v1385
      %v1387 = vpop.f32.mrb[0].mxu0
      %v1388 = vpop.f32.mrb[0].mxu0
      %v1389 = vadd.f32 0.0, %v1388
      %v1390 = vpop.f32.mrb[0].mxu0
      %1391 = vmatprep.mubr.bf16.mxu0 0
      %1392 = vmatmul.mubr.bf16.gmra.mrb[0].mxu0 %v1234
      %v1393 = vpop.f32.mrb[0].mxu0
      %v1394 = vadd.f32 0.0, %v1393
      %v1395 = vpop.f32.mrb[0].mxu0
      %v1396 = vpop.f32.mrb[0].mxu0
      %v1397 = vadd.f32 0.0, %v1396
      %v1398 = vpop.f32.mrb[0].mxu0
      %1399 = vdwg.mxu0
      %v1400 = vadd.f32 %v719, %v1274
      %v1401 = vadd.f32 %v720, %v1277
      %v1402 = vadd.f32 %v721, %v1282
      %v1403 = vadd.f32 %v722, %v1285
      %v1404 = vadd.f32 %v723, %v1290
      %v1405 = vadd.f32 %v724, %v1293
      %v1406 = vadd.f32 %v725, %v1298
      %v1407 = vadd.f32 %v726, %v1301
      %v1408 = vadd.f32 %v727, %v1306
      %v1409 = vadd.f32 %v728, %v1309
      %v1410 = vadd.f32 %v729, %v1314
      %v1411 = vadd.f32 %v730, %v1317
      %v1412 = vadd.f32 %v731, %v1322
      %v1413 = vadd.f32 %v732, %v1325
      %v1414 = vadd.f32 %v733, %v1330
      %v1415 = vadd.f32 %v734, %v1333
      %v1416 = vadd.f32 %v735, %v1338
      %v1417 = vadd.f32 %v736, %v1341
      %v1418 = vadd.f32 %v737, %v1346
      %v1419 = vadd.f32 %v738, %v1349
      %v1420 = vadd.f32 %v739, %v1354
      %v1421 = vadd.f32 %v740, %v1357
      %v1422 = vadd.f32 %v741, %v1362
      %v1423 = vadd.f32 %v742, %v1365
      %v1424 = vadd.f32 %v743, %v1370
      %v1425 = vadd.f32 %v744, %v1373
      %v1426 = vadd.f32 %v745, %v1378
      %v1427 = vadd.f32 %v746, %v1381
      %v1428 = vadd.f32 %v747, %v1386
      %v1429 = vadd.f32 %v748, %v1389
      %v1430 = vadd.f32 %v749, %v1394
      %v1431 = vadd.f32 %v750, %v1397
      %1432 = vst [vmem:[#allocation2] sm:$0xff] %v1400
      %1433 = vst [vmem:[#allocation2 + $0x8] sm:$0xff] %v1401
      %1434 = vst [vmem:[#allocation2 + $0x10] sm:$0xff] %v1402
      %1435 = vst [vmem:[#allocation2 + $0x18] sm:$0xff] %v1403
      %1436 = vst [vmem:[#allocation2 + $0x20] sm:$0xff] %v1404
      %1437 = vst [vmem:[#allocation2 + $0x28] sm:$0xff] %v1405
      %1438 = vst [vmem:[#allocation2 + $0x30] sm:$0xff] %v1406
      %1439 = vst [vmem:[#allocation2 + $0x38] sm:$0xff] %v1407
      %1440 = vst [vmem:[#allocation2 + $0x40] sm:$0xff] %v1408
      %1441 = vst [vmem:[#allocation2 + $0x48] sm:$0xff] %v1409
      %1442 = vst [vmem:[#allocation2 + $0x50] sm:$0xff] %v1410
      %1443 = vst [vmem:[#allocation2 + $0x58] sm:$0xff] %v1411
      %1444 = vst [vmem:[#allocation2 + $0x60] sm:$0xff] %v1412
      %1445 = vst [vmem:[#allocation2 + $0x68] sm:$0xff] %v1413
      %1446 = vst [vmem:[#allocation2 + $0x70] sm:$0xff] %v1414
      %1447 = vst [vmem:[#allocation2 + $0x78] sm:$0xff] %v1415
      %1448 = vst [vmem:[#allocation2 + $0x80] sm:$0xff] %v1416
      %1449 = vst [vmem:[#allocation2 + $0x88] sm:$0xff] %v1417
      %1450 = vst [vmem:[#allocation2 + $0x90] sm:$0xff] %v1418
      %1451 = vst [vmem:[#allocation2 + $0x98] sm:$0xff] %v1419
      %1452 = vst [vmem:[#allocation2 + $0xa0] sm:$0xff] %v1420
      %1453 = vst [vmem:[#allocation2 + $0xa8] sm:$0xff] %v1421
      %1454 = vst [vmem:[#allocation2 + $0xb0] sm:$0xff] %v1422
      %1455 = vst [vmem:[#allocation2 + $0xb8] sm:$0xff] %v1423
      %1456 = vst [vmem:[#allocation2 + $0xc0] sm:$0xff] %v1424
      %1457 = vst [vmem:[#allocation2 + $0xc8] sm:$0xff] %v1425
      %1458 = vst [vmem:[#allocation2 + $0xd0] sm:$0xff] %v1426
      %1459 = vst [vmem:[#allocation2 + $0xd8] sm:$0xff] %v1427
      %1460 = vst [vmem:[#allocation2 + $0xe0] sm:$0xff] %v1428
      %1461 = vst [vmem:[#allocation2 + $0xe8] sm:$0xff] %v1429
      %1462 = vst [vmem:[#allocation2 + $0xf0] sm:$0xff] %v1430
      %1463 = vst [vmem:[#allocation2 + $0xf8] sm:$0xff] %v1431
      %v1464 = vld [vmem:[%s203] sm:$0xe]
      %v1465 = vld [vmem:[%s203 + $0x4] sm:$0xf]
      %v1466 = vld [vmem:[%s203 + $0x8] sm:$0x1]
      %v1467 = vld [vmem:[%s203 + $0xc] sm:$0xe]
      %v1468 = vld [vmem:[%s203 + $0x10] sm:$0xf]
      %v1469 = vld [vmem:[%s203 + $0x14] sm:$0x1]
      %v1470 = vld [vmem:[%s203 + $0x18] sm:$0xe]
      %v1471 = vld [vmem:[%s203 + $0x1c] sm:$0xf]
      %v1472 = vld [vmem:[%s203 + $0x20] sm:$0x1]
      %v1473 = vld [vmem:[%s203 + $0x24] sm:$0xe]
      %v1474 = vld [vmem:[%s203 + $0x28] sm:$0xf]
      %v1475 = vld [vmem:[%s203 + $0x2c] sm:$0x1]
      %v1476 = vld [vmem:[%s203 + $0x30] sm:$0xe]
      %v1477 = vld [vmem:[%s203 + $0x34] sm:$0xf]
      %v1478 = vld [vmem:[%s203 + $0x38] sm:$0x1]
      %v1479 = vld [vmem:[%s203 + $0x3c] sm:$0xe]
      %v1480 = vld [vmem:[%s203 + $0x40] sm:$0xf]
      %v1481 = vld [vmem:[%s203 + $0x44] sm:$0x1]
      %v1482 = vld [vmem:[%s203 + $0x48] sm:$0xe]
      %v1483 = vld [vmem:[%s203 + $0x4c] sm:$0xf]
      %v1484 = vld [vmem:[%s203 + $0x50] sm:$0x1]
      %v1485 = vld [vmem:[%s203 + $0x54] sm:$0xe]
      %v1486 = vld [vmem:[%s203 + $0x58] sm:$0xf]
      %v1487 = vld [vmem:[%s203 + $0x5c] sm:$0x1]
      %v1488 = vld [vmem:[%s203 + $0x60] sm:$0xe]
      %v1489 = vld [vmem:[%s203 + $0x64] sm:$0xf]
      %v1490 = vld [vmem:[%s203 + $0x68] sm:$0x1]
      %v1491 = vld [vmem:[%s203 + $0x6c] sm:$0xe]
      %v1492 = vld [vmem:[%s203 + $0x70] sm:$0xf]
      %v1493 = vld [vmem:[%s203 + $0x74] sm:$0x1]
      %v1494 = vld [vmem:[%s203 + $0x78] sm:$0xe]
      %v1495 = vld [vmem:[%s203 + $0x7c] sm:$0xf]
      %v1496 = vld [vmem:[%s203 + $0x80] sm:$0x1]
      %v1497 = vld [vmem:[%s203 + $0x84] sm:$0xe]
      %v1498 = vld [vmem:[%s203 + $0x88] sm:$0xf]
      %v1499 = vld [vmem:[%s203 + $0x8c] sm:$0x1]
      %v1500 = vld [vmem:[%s203 + $0x90] sm:$0xe]
      %v1501 = vld [vmem:[%s203 + $0x94] sm:$0xf]
      %v1502 = vld [vmem:[%s203 + $0x98] sm:$0x1]
      %v1503 = vld [vmem:[%s203 + $0x9c] sm:$0xe]
      %v1504 = vld [vmem:[%s203 + $0xa0] sm:$0xf]
      %v1505 = vld [vmem:[%s203 + $0xa4] sm:$0x1]
      %v1506 = vld [vmem:[%s203 + $0xa8] sm:$0xe]
      %v1507 = vld [vmem:[%s203 + $0xac] sm:$0xf]
      %v1508 = vld [vmem:[%s203 + $0xb0] sm:$0x1]
      %v1509 = vld [vmem:[%s203 + $0xb4] sm:$0xe]
      %v1510 = vld [vmem:[%s203 + $0xb8] sm:$0xf]
      %v1511 = vld [vmem:[%s203 + $0xbc] sm:$0x1]
      %v1512 = vld [vmem:[#allocation2] sm:$0xff]
      %v1513 = vld [vmem:[#allocation2 + $0x8] sm:$0xff]
      %v1514 = vld [vmem:[#allocation2 + $0x10] sm:$0xff]
      %v1515 = vld [vmem:[#allocation2 + $0x18] sm:$0xff]
      %v1516 = vld [vmem:[#allocation2 + $0x20] sm:$0xff]
      %v1517 = vld [vmem:[#allocation2 + $0x28] sm:$0xff]
      %v1518 = vld [vmem:[#allocation2 + $0x30] sm:$0xff]
      %v1519 = vld [vmem:[#allocation2 + $0x38] sm:$0xff]
      %v1520 = vld [vmem:[#allocation2 + $0x40] sm:$0xff]
      %v1521 = vld [vmem:[#allocation2 + $0x48] sm:$0xff]
      %v1522 = vld [vmem:[#allocation2 + $0x50] sm:$0xff]
      %v1523 = vld [vmem:[#allocation2 + $0x58] sm:$0xff]
      %v1524 = vld [vmem:[#allocation2 + $0x60] sm:$0xff]
      %v1525 = vld [vmem:[#allocation2 + $0x68] sm:$0xff]
      %v1526 = vld [vmem:[#allocation2 + $0x70] sm:$0xff]
      %v1527 = vld [vmem:[#allocation2 + $0x78] sm:$0xff]
      %v1528 = vld [vmem:[#allocation2 + $0x80] sm:$0xff]
      %v1529 = vld [vmem:[#allocation2 + $0x88] sm:$0xff]
      %v1530 = vld [vmem:[#allocation2 + $0x90] sm:$0xff]
      %v1531 = vld [vmem:[#allocation2 + $0x98] sm:$0xff]
      %v1532 = vld [vmem:[#allocation2 + $0xa0] sm:$0xff]
      %v1533 = vld [vmem:[#allocation2 + $0xa8] sm:$0xff]
      %v1534 = vld [vmem:[#allocation2 + $0xb0] sm:$0xff]
      %v1535 = vld [vmem:[#allocation2 + $0xb8] sm:$0xff]
      %v1536 = vld [vmem:[#allocation2 + $0xc0] sm:$0xff]
      %v1537 = vld [vmem:[#allocation2 + $0xc8] sm:$0xff]
      %v1538 = vld [vmem:[#allocation2 + $0xd0] sm:$0xff]
      %v1539 = vld [vmem:[#allocation2 + $0xd8] sm:$0xff]
      %v1540 = vld [vmem:[#allocation2 + $0xe0] sm:$0xff]
      %v1541 = vld [vmem:[#allocation2 + $0xe8] sm:$0xff]
      %v1542 = vld [vmem:[#allocation2 + $0xf0] sm:$0xff]
      %v1543 = vld [vmem:[#allocation2 + $0xf8] sm:$0xff]
      %vm1592 = vcmask 1042432
      %vm1593 = vcmask 1046532
      %vm1594 = vmor %vm1592, %vm1593
      %v1595 = vrot.slane %v1464, 5
      %v1596 = vrot.slane %v1595, 4
      %v1597 = vrot.slane %v1465, 5
      %v1598 = vsel %vm1594, %v1596, %v1597
      %v1599 = vrot.slane %v1597, 4
      %v1600 = vrot.slane %v1466, 5
      %v1601 = vsel %vm1594, %v1599, %v1600
      %v1602 = vrot.slane %v1467, 5
      %v1603 = vrot.slane %v1602, 4
      %v1604 = vrot.slane %v1468, 5
      %v1605 = vsel %vm1594, %v1603, %v1604
      %v1606 = vrot.slane %v1604, 4
      %v1607 = vrot.slane %v1469, 5
      %v1608 = vsel %vm1594, %v1606, %v1607
      %v1609 = vrot.slane %v1470, 5
      %v1610 = vrot.slane %v1609, 4
      %v1611 = vrot.slane %v1471, 5
      %v1612 = vsel %vm1594, %v1610, %v1611
      %v1613 = vrot.slane %v1611, 4
      %v1614 = vrot.slane %v1472, 5
      %v1615 = vsel %vm1594, %v1613, %v1614
      %v1616 = vrot.slane %v1473, 5
      %v1617 = vrot.slane %v1616, 4
      %v1618 = vrot.slane %v1474, 5
      %v1619 = vsel %vm1594, %v1617, %v1618
      %v1620 = vrot.slane %v1618, 4
      %v1621 = vrot.slane %v1475, 5
      %v1622 = vsel %vm1594, %v1620, %v1621
      %v1623 = vrot.slane %v1476, 5
      %v1624 = vrot.slane %v1623, 4
      %v1625 = vrot.slane %v1477, 5
      %v1626 = vsel %vm1594, %v1624, %v1625
      %v1627 = vrot.slane %v1625, 4
      %v1628 = vrot.slane %v1478, 5
      %v1629 = vsel %vm1594, %v1627, %v1628
      %v1630 = vrot.slane %v1479, 5
      %v1631 = vrot.slane %v1630, 4
      %v1632 = vrot.slane %v1480, 5
      %v1633 = vsel %vm1594, %v1631, %v1632
      %v1634 = vrot.slane %v1632, 4
      %v1635 = vrot.slane %v1481, 5
      %v1636 = vsel %vm1594, %v1634, %v1635
      %v1637 = vrot.slane %v1482, 5
      %v1638 = vrot.slane %v1637, 4
      %v1639 = vrot.slane %v1483, 5
      %v1640 = vsel %vm1594, %v1638, %v1639
      %v1641 = vrot.slane %v1639, 4
      %v1642 = vrot.slane %v1484, 5
      %v1643 = vsel %vm1594, %v1641, %v1642
      %v1644 = vrot.slane %v1485, 5
      %v1645 = vrot.slane %v1644, 4
      %v1646 = vrot.slane %v1486, 5
      %v1647 = vsel %vm1594, %v1645, %v1646
      %v1648 = vrot.slane %v1646, 4
      %v1649 = vrot.slane %v1487, 5
      %v1650 = vsel %vm1594, %v1648, %v1649
      %v1651 = vrot.slane %v1488, 5
      %v1652 = vrot.slane %v1651, 4
      %v1653 = vrot.slane %v1489, 5
      %v1654 = vsel %vm1594, %v1652, %v1653
      %v1655 = vrot.slane %v1653, 4
      %v1656 = vrot.slane %v1490, 5
      %v1657 = vsel %vm1594, %v1655, %v1656
      %v1658 = vrot.slane %v1491, 5
      %v1659 = vrot.slane %v1658, 4
      %v1660 = vrot.slane %v1492, 5
      %v1661 = vsel %vm1594, %v1659, %v1660
      %v1662 = vrot.slane %v1660, 4
      %v1663 = vrot.slane %v1493, 5
      %v1664 = vsel %vm1594, %v1662, %v1663
      %v1665 = vrot.slane %v1494, 5
      %v1666 = vrot.slane %v1665, 4
      %v1667 = vrot.slane %v1495, 5
      %v1668 = vsel %vm1594, %v1666, %v1667
      %v1669 = vrot.slane %v1667, 4
      %v1670 = vrot.slane %v1496, 5
      %v1671 = vsel %vm1594, %v1669, %v1670
      %v1672 = vrot.slane %v1497, 5
      %v1673 = vrot.slane %v1672, 4
      %v1674 = vrot.slane %v1498, 5
      %v1675 = vsel %vm1594, %v1673, %v1674
      %v1676 = vrot.slane %v1674, 4
      %v1677 = vrot.slane %v1499, 5
      %v1678 = vsel %vm1594, %v1676, %v1677
      %v1679 = vrot.slane %v1500, 5
      %v1680 = vrot.slane %v1679, 4
      %v1681 = vrot.slane %v1501, 5
      %v1682 = vsel %vm1594, %v1680, %v1681
      %v1683 = vrot.slane %v1681, 4
      %v1684 = vrot.slane %v1502, 5
      %v1685 = vsel %vm1594, %v1683, %v1684
      %v1686 = vrot.slane %v1503, 5
      %v1687 = vrot.slane %v1686, 4
      %v1688 = vrot.slane %v1504, 5
      %v1689 = vsel %vm1594, %v1687, %v1688
      %v1690 = vrot.slane %v1688, 4
      %v1691 = vrot.slane %v1505, 5
      %v1692 = vsel %vm1594, %v1690, %v1691
      %v1693 = vrot.slane %v1506, 5
      %v1694 = vrot.slane %v1693, 4
      %v1695 = vrot.slane %v1507, 5
      %v1696 = vsel %vm1594, %v1694, %v1695
      %v1697 = vrot.slane %v1695, 4
      %v1698 = vrot.slane %v1508, 5
      %v1699 = vsel %vm1594, %v1697, %v1698
      %v1700 = vrot.slane %v1509, 5
      %v1701 = vrot.slane %v1700, 4
      %v1702 = vrot.slane %v1510, 5
      %v1703 = vsel %vm1594, %v1701, %v1702
      %v1704 = vrot.slane %v1702, 4
      %v1705 = vrot.slane %v1511, 5
      %v1706 = vsel %vm1594, %v1704, %v1705
      %s1707 = scalar_lea.vmem %s1, 4
      %v1708 = vld [vmem:[%s1707] sm:$0x3]
      %v1709 = vunpack.c.l.b16 %v1598
      %v1710 = vunpack.c.l.b16 %v1601
      %v1711 = vunpack.c.l.b16 %v1605
      %v1712 = vunpack.c.l.b16 %v1608
      %v1713 = vunpack.c.l.b16 %v1612
      %v1714 = vunpack.c.l.b16 %v1615
      %v1715 = vunpack.c.l.b16 %v1619
      %v1716 = vunpack.c.l.b16 %v1622
      %v1717 = vunpack.c.l.b16 %v1626
      %v1718 = vunpack.c.l.b16 %v1629
      %v1719 = vunpack.c.l.b16 %v1633
      %v1720 = vunpack.c.l.b16 %v1636
      %v1721 = vunpack.c.l.b16 %v1640
      %v1722 = vunpack.c.l.b16 %v1643
      %v1723 = vunpack.c.l.b16 %v1647
      %v1724 = vunpack.c.l.b16 %v1650
      %v1725 = vunpack.c.l.b16 %v1654
      %v1726 = vunpack.c.l.b16 %v1657
      %v1727 = vunpack.c.l.b16 %v1661
      %v1728 = vunpack.c.l.b16 %v1664
      %v1729 = vunpack.c.l.b16 %v1668
      %v1730 = vunpack.c.l.b16 %v1671
      %v1731 = vunpack.c.l.b16 %v1675
      %v1732 = vunpack.c.l.b16 %v1678
      %v1733 = vunpack.c.l.b16 %v1682
      %v1734 = vunpack.c.l.b16 %v1685
      %v1735 = vunpack.c.l.b16 %v1689
      %v1736 = vunpack.c.l.b16 %v1692
      %v1737 = vunpack.c.l.b16 %v1696
      %v1738 = vunpack.c.l.b16 %v1699
      %v1739 = vunpack.c.l.b16 %v1703
      %v1740 = vunpack.c.l.b16 %v1706
      %v1741 = vpack.c.b16 %v1710, %v1709
      %v1742 = vpack.c.b16 %v1712, %v1711
      %v1743 = vpack.c.b16 %v1714, %v1713
      %v1744 = vpack.c.b16 %v1716, %v1715
      %v1745 = vpack.c.b16 %v1718, %v1717
      %v1746 = vpack.c.b16 %v1720, %v1719
      %v1747 = vpack.c.b16 %v1722, %v1721
      %v1748 = vpack.c.b16 %v1724, %v1723
      %v1749 = vpack.c.b16 %v1726, %v1725
      %v1750 = vpack.c.b16 %v1728, %v1727
      %v1751 = vpack.c.b16 %v1730, %v1729
      %v1752 = vpack.c.b16 %v1732, %v1731
      %v1753 = vpack.c.b16 %v1734, %v1733
      %v1754 = vpack.c.b16 %v1736, %v1735
      %v1755 = vpack.c.b16 %v1738, %v1737
      %v1756 = vpack.c.b16 %v1740, %v1739
      %v1758 = vsel %vm393, %v1741, 0
      %v1761 = vsel %vm393, %v1742, 0
      %v1764 = vsel %vm393, %v1743, 0
      %v1767 = vsel %vm393, %v1744, 0
      %v1770 = vsel %vm393, %v1745, 0
      %v1773 = vsel %vm393, %v1746, 0
      %v1776 = vsel %vm393, %v1747, 0
      %v1779 = vsel %vm393, %v1748, 0
      %v1782 = vsel %vm393, %v1749, 0
      %v1785 = vsel %vm393, %v1750, 0
      %v1788 = vsel %vm393, %v1751, 0
      %v1791 = vsel %vm393, %v1752, 0
      %v1794 = vsel %vm393, %v1753, 0
      %v1797 = vsel %vm393, %v1754, 0
      %v1800 = vsel %vm393, %v1755, 0
      %v1803 = vsel %vm393, %v1756, 0
      %v1806 = vsel %vm442, %v1708, 0
      %1808 = vmatprep.subr.bf16.mxu0 0
      %1809 = vmatpush1.bf16.msra.mxu0 %v1806
      %1810 = vmatprep.subr.bf16.mxu0 0
      %1811 = vmatpush1.bf16.msra.mxu0 0
      %1812 = vmatprep.subr.bf16.mxu0 0
      %1813 = vmatpush1.bf16.msra.mxu0 0
      %1814 = vmatprep.subr.bf16.mxu0 0
      %1815 = vmatpush1.bf16.msra.mxu0 0
      %1816 = vmatprep.subr.bf16.mxu0 0
      %1817 = vmatpush1.bf16.msra.mxu0 0
      %1818 = vmatprep.subr.bf16.mxu0 0
      %1819 = vmatpush1.bf16.msra.mxu0 0
      %1820 = vmatprep.subr.bf16.mxu0 0
      %1821 = vmatpush1.bf16.msra.mxu0 0
      %1822 = vmatprep.subr.bf16.mxu0 0
      %1823 = vmatpush1.bf16.msra.mxu0 0
      %1824 = vmatprep.subr.bf16.mxu0 0
      %1825 = vmatpush1.bf16.msra.mxu0 0
      %1826 = vmatprep.subr.bf16.mxu0 0
      %1827 = vmatpush1.bf16.msra.mxu0 0
      %1828 = vmatprep.subr.bf16.mxu0 0
      %1829 = vmatpush1.bf16.msra.mxu0 0
      %1830 = vmatprep.subr.bf16.mxu0 0
      %1831 = vmatpush1.bf16.msra.mxu0 0
      %1832 = vmatprep.subr.bf16.mxu0 0
      %1833 = vmatpush1.bf16.msra.mxu0 0
      %1834 = vmatprep.subr.bf16.mxu0 0
      %1835 = vmatpush1.bf16.msra.mxu0 0
      %1836 = vmatprep.subr.bf16.mxu0 0
      %1837 = vmatpush1.bf16.msra.mxu0 0
      %1838 = vmatprep.subr.bf16.mxu0 0
      %1839 = vmatpush1.bf16.msra.mxu0 0
      %1840 = vmatprep.mubr.bf16.mxu0 0
      %1841 = vmatmul.mubr.bf16.gmra.mrb[0].mxu0 %v1758
      %v1842 = vpop.f32.mrb[0].mxu0
      %v1843 = vadd.f32 0.0, %v1842
      %v1844 = vpop.f32.mrb[0].mxu0
      %v1845 = vpop.f32.mrb[0].mxu0
      %v1846 = vadd.f32 0.0, %v1845
      %v1847 = vpop.f32.mrb[0].mxu0
      %1848 = vmatprep.mubr.bf16.mxu0 0
      %1849 = vmatmul.mubr.bf16.gmra.mrb[0].mxu0 %v1761
      %v1850 = vpop.f32.mrb[0].mxu0
      %v1851 = vadd.f32 0.0, %v1850
      %v1852 = vpop.f32.mrb[0].mxu0
      %v1853 = vpop.f32.mrb[0].mxu0
      %v1854 = vadd.f32 0.0, %v1853
      %v1855 = vpop.f32.mrb[0].mxu0
      %1856 = vmatprep.mubr.bf16.mxu0 0
      %1857 = vmatmul.mubr.bf16.gmra.mrb[0].mxu0 %v1764
      %v1858 = vpop.f32.mrb[0].mxu0
      %v1859 = vadd.f32 0.0, %v1858
      %v1860 = vpop.f32.mrb[0].mxu0
      %v1861 = vpop.f32.mrb[0].mxu0
      %v1862 = vadd.f32 0.0, %v1861
      %v1863 = vpop.f32.mrb[0].mxu0
      %1864 = vmatprep.mubr.bf16.mxu0 0
      %1865 = vmatmul.mubr.bf16.gmra.mrb[0].mxu0 %v1767
      %v1866 = vpop.f32.mrb[0].mxu0
      %v1867 = vadd.f32 0.0, %v1866
      %v1868 = vpop.f32.mrb[0].mxu0
      %v1869 = vpop.f32.mrb[0].mxu0
      %v1870 = vadd.f32 0.0, %v1869
      %v1871 = vpop.f32.mrb[0].mxu0
      %1872 = vmatprep.mubr.bf16.mxu0 0
      %1873 = vmatmul.mubr.bf16.gmra.mrb[0].mxu0 %v1770
      %v1874 = vpop.f32.mrb[0].mxu0
      %v1875 = vadd.f32 0.0, %v1874
      %v1876 = vpop.f32.mrb[0].mxu0
      %v1877 = vpop.f32.mrb[0].mxu0
      %v1878 = vadd.f32 0.0, %v1877
      %v1879 = vpop.f32.mrb[0].mxu0
      %1880 = vmatprep.mubr.bf16.mxu0 0
      %1881 = vmatmul.mubr.bf16.gmra.mrb[0].mxu0 %v1773
      %v1882 = vpop.f32.mrb[0].mxu0
      %v1883 = vadd.f32 0.0, %v1882
      %v1884 = vpop.f32.mrb[0].mxu0
      %v1885 = vpop.f32.mrb[0].mxu0
      %v1886 = vadd.f32 0.0, %v1885
      %v1887 = vpop.f32.mrb[0].mxu0
      %1888 = vmatprep.mubr.bf16.mxu0 0
      %1889 = vmatmul.mubr.bf16.gmra.mrb[0].mxu0 %v1776
      %v1890 = vpop.f32.mrb[0].mxu0
      %v1891 = vadd.f32 0.0, %v1890
      %v1892 = vpop.f32.mrb[0].mxu0
      %v1893 = vpop.f32.mrb[0].mxu0
      %v1894 = vadd.f32 0.0, %v1893
      %v1895 = vpop.f32.mrb[0].mxu0
      %1896 = vmatprep.mubr.bf16.mxu0 0
      %1897 = vmatmul.mubr.bf16.gmra.mrb[0].mxu0 %v1779
      %v1898 = vpop.f32.mrb[0].mxu0
      %v1899 = vadd.f32 0.0, %v1898
      %v1900 = vpop.f32.mrb[0].mxu0
      %v1901 = vpop.f32.mrb[0].mxu0
      %v1902 = vadd.f32 0.0, %v1901
      %v1903 = vpop.f32.mrb[0].mxu0
      %1904 = vmatprep.mubr.bf16.mxu0 0
      %1905 = vmatmul.mubr.bf16.gmra.mrb[0].mxu0 %v1782
      %v1906 = vpop.f32.mrb[0].mxu0
      %v1907 = vadd.f32 0.0, %v1906
      %v1908 = vpop.f32.mrb[0].mxu0
      %v1909 = vpop.f32.mrb[0].mxu0
      %v1910 = vadd.f32 0.0, %v1909
      %v1911 = vpop.f32.mrb[0].mxu0
      %1912 = vmatprep.mubr.bf16.mxu0 0
      %1913 = vmatmul.mubr.bf16.gmra.mrb[0].mxu0 %v1785
      %v1914 = vpop.f32.mrb[0].mxu0
      %v1915 = vadd.f32 0.0, %v1914
      %v1916 = vpop.f32.mrb[0].mxu0
      %v1917 = vpop.f32.mrb[0].mxu0
      %v1918 = vadd.f32 0.0, %v1917
      %v1919 = vpop.f32.mrb[0].mxu0
      %1920 = vmatprep.mubr.bf16.mxu0 0
      %1921 = vmatmul.mubr.bf16.gmra.mrb[0].mxu0 %v1788
      %v1922 = vpop.f32.mrb[0].mxu0
      %v1923 = vadd.f32 0.0, %v1922
      %v1924 = vpop.f32.mrb[0].mxu0
      %v1925 = vpop.f32.mrb[0].mxu0
      %v1926 = vadd.f32 0.0, %v1925
      %v1927 = vpop.f32.mrb[0].mxu0
      %1928 = vmatprep.mubr.bf16.mxu0 0
      %1929 = vmatmul.mubr.bf16.gmra.mrb[0].mxu0 %v1791
      %v1930 = vpop.f32.mrb[0].mxu0
      %v1931 = vadd.f32 0.0, %v1930
      %v1932 = vpop.f32.mrb[0].mxu0
      %v1933 = vpop.f32.mrb[0].mxu0
      %v1934 = vadd.f32 0.0, %v1933
      %v1935 = vpop.f32.mrb[0].mxu0
      %1936 = vmatprep.mubr.bf16.mxu0 0
      %1937 = vmatmul.mubr.bf16.gmra.mrb[0].mxu0 %v1794
      %v1938 = vpop.f32.mrb[0].mxu0
      %v1939 = vadd.f32 0.0, %v1938
      %v1940 = vpop.f32.mrb[0].mxu0
      %v1941 = vpop.f32.mrb[0].mxu0
      %v1942 = vadd.f32 0.0, %v1941
      %v1943 = vpop.f32.mrb[0].mxu0
      %1944 = vmatprep.mubr.bf16.mxu0 0
      %1945 = vmatmul.mubr.bf16.gmra.mrb[0].mxu0 %v1797
      %v1946 = vpop.f32.mrb[0].mxu0
      %v1947 = vadd.f32 0.0, %v1946
      %v1948 = vpop.f32.mrb[0].mxu0
      %v1949 = vpop.f32.mrb[0].mxu0
      %v1950 = vadd.f32 0.0, %v1949
      %v1951 = vpop.f32.mrb[0].mxu0
      %1952 = vmatprep.mubr.bf16.mxu0 0
      %1953 = vmatmul.mubr.bf16.gmra.mrb[0].mxu0 %v1800
      %v1954 = vpop.f32.mrb[0].mxu0
      %v1955 = vadd.f32 0.0, %v1954
      %v1956 = vpop.f32.mrb[0].mxu0
      %v1957 = vpop.f32.mrb[0].mxu0
      %v1958 = vadd.f32 0.0, %v1957
      %v1959 = vpop.f32.mrb[0].mxu0
      %1960 = vmatprep.mubr.bf16.mxu0 0
      %1961 = vmatmul.mubr.bf16.gmra.mrb[0].mxu0 %v1803
      %v1962 = vpop.f32.mrb[0].mxu0
      %v1963 = vadd.f32 0.0, %v1962
      %v1964 = vpop.f32.mrb[0].mxu0
      %v1965 = vpop.f32.mrb[0].mxu0
      %v1966 = vadd.f32 0.0, %v1965
      %v1967 = vpop.f32.mrb[0].mxu0
      %1968 = vdwg.mxu0
      %v1969 = vadd.f32 %v1512, %v1843
      %v1970 = vadd.f32 %v1513, %v1846
      %v1971 = vadd.f32 %v1514, %v1851
      %v1972 = vadd.f32 %v1515, %v1854
      %v1973 = vadd.f32 %v1516, %v1859
      %v1974 = vadd.f32 %v1517, %v1862
      %v1975 = vadd.f32 %v1518, %v1867
      %v1976 = vadd.f32 %v1519, %v1870
      %v1977 = vadd.f32 %v1520, %v1875
      %v1978 = vadd.f32 %v1521, %v1878
      %v1979 = vadd.f32 %v1522, %v1883
      %v1980 = vadd.f32 %v1523, %v1886
      %v1981 = vadd.f32 %v1524, %v1891
      %v1982 = vadd.f32 %v1525, %v1894
      %v1983 = vadd.f32 %v1526, %v1899
      %v1984 = vadd.f32 %v1527, %v1902
      %v1985 = vadd.f32 %v1528, %v1907
      %v1986 = vadd.f32 %v1529, %v1910
      %v1987 = vadd.f32 %v1530, %v1915
      %v1988 = vadd.f32 %v1531, %v1918
      %v1989 = vadd.f32 %v1532, %v1923
      %v1990 = vadd.f32 %v1533, %v1926
      %v1991 = vadd.f32 %v1534, %v1931
      %v1992 = vadd.f32 %v1535, %v1934
      %v1993 = vadd.f32 %v1536, %v1939
      %v1994 = vadd.f32 %v1537, %v1942
      %v1995 = vadd.f32 %v1538, %v1947
      %v1996 = vadd.f32 %v1539, %v1950
      %v1997 = vadd.f32 %v1540, %v1955
      %v1998 = vadd.f32 %v1541, %v1958
      %v1999 = vadd.f32 %v1542, %v1963
      %v2000 = vadd.f32 %v1543, %v1966
      %2001 = vst [vmem:[#allocation2] sm:$0xff] %v1969
      %2002 = vst [vmem:[#allocation2 + $0x8] sm:$0xff] %v1970
      %2003 = vst [vmem:[#allocation2 + $0x10] sm:$0xff] %v1971
      %2004 = vst [vmem:[#allocation2 + $0x18] sm:$0xff] %v1972
      %2005 = vst [vmem:[#allocation2 + $0x20] sm:$0xff] %v1973
      %2006 = vst [vmem:[#allocation2 + $0x28] sm:$0xff] %v1974
      %2007 = vst [vmem:[#allocation2 + $0x30] sm:$0xff] %v1975
      %2008 = vst [vmem:[#allocation2 + $0x38] sm:$0xff] %v1976
      %2009 = vst [vmem:[#allocation2 + $0x40] sm:$0xff] %v1977
      %2010 = vst [vmem:[#allocation2 + $0x48] sm:$0xff] %v1978
      %2011 = vst [vmem:[#allocation2 + $0x50] sm:$0xff] %v1979
      %2012 = vst [vmem:[#allocation2 + $0x58] sm:$0xff] %v1980
      %2013 = vst [vmem:[#allocation2 + $0x60] sm:$0xff] %v1981
      %2014 = vst [vmem:[#allocation2 + $0x68] sm:$0xff] %v1982
      %2015 = vst [vmem:[#allocation2 + $0x70] sm:$0xff] %v1983
      %2016 = vst [vmem:[#allocation2 + $0x78] sm:$0xff] %v1984
      %2017 = vst [vmem:[#allocation2 + $0x80] sm:$0xff] %v1985
      %2018 = vst [vmem:[#allocation2 + $0x88] sm:$0xff] %v1986
      %2019 = vst [vmem:[#allocation2 + $0x90] sm:$0xff] %v1987
      %2020 = vst [vmem:[#allocation2 + $0x98] sm:$0xff] %v1988
      %2021 = vst [vmem:[#allocation2 + $0xa0] sm:$0xff] %v1989
      %2022 = vst [vmem:[#allocation2 + $0xa8] sm:$0xff] %v1990
      %2023 = vst [vmem:[#allocation2 + $0xb0] sm:$0xff] %v1991
      %2024 = vst [vmem:[#allocation2 + $0xb8] sm:$0xff] %v1992
      %2025 = vst [vmem:[#allocation2 + $0xc0] sm:$0xff] %v1993
      %2026 = vst [vmem:[#allocation2 + $0xc8] sm:$0xff] %v1994
      %2027 = vst [vmem:[#allocation2 + $0xd0] sm:$0xff] %v1995
      %2028 = vst [vmem:[#allocation2 + $0xd8] sm:$0xff] %v1996
      %2029 = vst [vmem:[#allocation2 + $0xe0] sm:$0xff] %v1997
      %2030 = vst [vmem:[#allocation2 + $0xe8] sm:$0xff] %v1998
      %2031 = vst [vmem:[#allocation2 + $0xf0] sm:$0xff] %v1999
      %2032 = vst [vmem:[#allocation2 + $0xf8] sm:$0xff] %v2000
      %s2033 = scalar_lea.vmem %s203, 12
      %v2034 = vld [vmem:[%s2033] sm:$0xf]
      %v2035 = vld [vmem:[%s2033 + $0x4] sm:$0xf]
      %v2036 = vld [vmem:[%s2033 + $0xc] sm:$0xf]
      %v2037 = vld [vmem:[%s2033 + $0x10] sm:$0xf]
      %v2038 = vld [vmem:[%s2033 + $0x18] sm:$0xf]
      %v2039 = vld [vmem:[%s2033 + $0x1c] sm:$0xf]
      %v2040 = vld [vmem:[%s2033 + $0x24] sm:$0xf]
      %v2041 = vld [vmem:[%s2033 + $0x28] sm:$0xf]
      %v2042 = vld [vmem:[%s2033 + $0x30] sm:$0xf]
      %v2043 = vld [vmem:[%s2033 + $0x34] sm:$0xf]
      %v2044 = vld [vmem:[%s2033 + $0x3c] sm:$0xf]
      %v2045 = vld [vmem:[%s2033 + $0x40] sm:$0xf]
      %v2046 = vld [vmem:[%s2033 + $0x48] sm:$0xf]
      %v2047 = vld [vmem:[%s2033 + $0x4c] sm:$0xf]
      %v2048 = vld [vmem:[%s2033 + $0x54] sm:$0xf]
      %v2049 = vld [vmem:[%s2033 + $0x58] sm:$0xf]
      %v2050 = vld [vmem:[%s2033 + $0x60] sm:$0xf]
      %v2051 = vld [vmem:[%s2033 + $0x64] sm:$0xf]
      %v2052 = vld [vmem:[%s2033 + $0x6c] sm:$0xf]
      %v2053 = vld [vmem:[%s2033 + $0x70] sm:$0xf]
      %v2054 = vld [vmem:[%s2033 + $0x78] sm:$0xf]
      %v2055 = vld [vmem:[%s2033 + $0x7c] sm:$0xf]
      %v2056 = vld [vmem:[%s2033 + $0x84] sm:$0xf]
      %v2057 = vld [vmem:[%s2033 + $0x88] sm:$0xf]
      %v2058 = vld [vmem:[%s2033 + $0x90] sm:$0xf]
      %v2059 = vld [vmem:[%s2033 + $0x94] sm:$0xf]
      %v2060 = vld [vmem:[%s2033 + $0x9c] sm:$0xf]
      %v2061 = vld [vmem:[%s2033 + $0xa0] sm:$0xf]
      %v2062 = vld [vmem:[%s2033 + $0xa8] sm:$0xf]
      %v2063 = vld [vmem:[%s2033 + $0xac] sm:$0xf]
      %v2064 = vld [vmem:[%s2033 + $0xb4] sm:$0xf]
      %v2065 = vld [vmem:[%s2033 + $0xb8] sm:$0xf]
      %v2066 = vld [vmem:[#allocation2] sm:$0xff]
      %v2067 = vld [vmem:[#allocation2 + $0x8] sm:$0xff]
      %v2068 = vld [vmem:[#allocation2 + $0x10] sm:$0xff]
      %v2069 = vld [vmem:[#allocation2 + $0x18] sm:$0xff]
      %v2070 = vld [vmem:[#allocation2 + $0x20] sm:$0xff]
      %v2071 = vld [vmem:[#allocation2 + $0x28] sm:$0xff]
      %v2072 = vld [vmem:[#allocation2 + $0x30] sm:$0xff]
      %v2073 = vld [vmem:[#allocation2 + $0x38] sm:$0xff]
      %v2074 = vld [vmem:[#allocation2 + $0x40] sm:$0xff]
      %v2075 = vld [vmem:[#allocation2 + $0x48] sm:$0xff]
      %v2076 = vld [vmem:[#allocation2 + $0x50] sm:$0xff]
      %v2077 = vld [vmem:[#allocation2 + $0x58] sm:$0xff]
      %v2078 = vld [vmem:[#allocation2 + $0x60] sm:$0xff]
      %v2079 = vld [vmem:[#allocation2 + $0x68] sm:$0xff]
      %v2080 = vld [vmem:[#allocation2 + $0x70] sm:$0xff]
      %v2081 = vld [vmem:[#allocation2 + $0x78] sm:$0xff]
      %v2082 = vld [vmem:[#allocation2 + $0x80] sm:$0xff]
      %v2083 = vld [vmem:[#allocation2 + $0x88] sm:$0xff]
      %v2084 = vld [vmem:[#allocation2 + $0x90] sm:$0xff]
      %v2085 = vld [vmem:[#allocation2 + $0x98] sm:$0xff]
      %v2086 = vld [vmem:[#allocation2 + $0xa0] sm:$0xff]
      %v2087 = vld [vmem:[#allocation2 + $0xa8] sm:$0xff]
      %v2088 = vld [vmem:[#allocation2 + $0xb0] sm:$0xff]
      %v2089 = vld [vmem:[#allocation2 + $0xb8] sm:$0xff]
      %v2090 = vld [vmem:[#allocation2 + $0xc0] sm:$0xff]
      %v2091 = vld [vmem:[#allocation2 + $0xc8] sm:$0xff]
      %v2092 = vld [vmem:[#allocation2 + $0xd0] sm:$0xff]
      %v2093 = vld [vmem:[#allocation2 + $0xd8] sm:$0xff]
      %v2094 = vld [vmem:[#allocation2 + $0xe0] sm:$0xff]
      %v2095 = vld [vmem:[#allocation2 + $0xe8] sm:$0xff]
      %v2096 = vld [vmem:[#allocation2 + $0xf0] sm:$0xff]
      %v2097 = vld [vmem:[#allocation2 + $0xf8] sm:$0xff]
      %s2098 = scalar_lea.vmem %s1, 6
      %v2099 = vld [vmem:[%s2098] sm:$0x3]
      %v2132 = vunpack.c.l.b16 %v2034
      %v2133 = vunpack.c.l.b16 %v2035
      %v2134 = vunpack.c.l.b16 %v2036
      %v2135 = vunpack.c.l.b16 %v2037
      %v2136 = vunpack.c.l.b16 %v2038
      %v2137 = vunpack.c.l.b16 %v2039
      %v2138 = vunpack.c.l.b16 %v2040
      %v2139 = vunpack.c.l.b16 %v2041
      %v2140 = vunpack.c.l.b16 %v2042
      %v2141 = vunpack.c.l.b16 %v2043
      %v2142 = vunpack.c.l.b16 %v2044
      %v2143 = vunpack.c.l.b16 %v2045
      %v2144 = vunpack.c.l.b16 %v2046
      %v2145 = vunpack.c.l.b16 %v2047
      %v2146 = vunpack.c.l.b16 %v2048
      %v2147 = vunpack.c.l.b16 %v2049
      %v2148 = vunpack.c.l.b16 %v2050
      %v2149 = vunpack.c.l.b16 %v2051
      %v2150 = vunpack.c.l.b16 %v2052
      %v2151 = vunpack.c.l.b16 %v2053
      %v2152 = vunpack.c.l.b16 %v2054
      %v2153 = vunpack.c.l.b16 %v2055
      %v2154 = vunpack.c.l.b16 %v2056
      %v2155 = vunpack.c.l.b16 %v2057
      %v2156 = vunpack.c.l.b16 %v2058
      %v2157 = vunpack.c.l.b16 %v2059
      %v2158 = vunpack.c.l.b16 %v2060
      %v2159 = vunpack.c.l.b16 %v2061
      %v2160 = vunpack.c.l.b16 %v2062
      %v2161 = vunpack.c.l.b16 %v2063
      %v2162 = vunpack.c.l.b16 %v2064
      %v2163 = vunpack.c.l.b16 %v2065
      %v2164 = vpack.c.b16 %v2133, %v2132
      %v2165 = vpack.c.b16 %v2135, %v2134
      %v2166 = vpack.c.b16 %v2137, %v2136
      %v2167 = vpack.c.b16 %v2139, %v2138
      %v2168 = vpack.c.b16 %v2141, %v2140
      %v2169 = vpack.c.b16 %v2143, %v2142
      %v2170 = vpack.c.b16 %v2145, %v2144
      %v2171 = vpack.c.b16 %v2147, %v2146
      %v2172 = vpack.c.b16 %v2149, %v2148
      %v2173 = vpack.c.b16 %v2151, %v2150
      %v2174 = vpack.c.b16 %v2153, %v2152
      %v2175 = vpack.c.b16 %v2155, %v2154
      %v2176 = vpack.c.b16 %v2157, %v2156
      %v2177 = vpack.c.b16 %v2159, %v2158
      %v2178 = vpack.c.b16 %v2161, %v2160
      %v2179 = vpack.c.b16 %v2163, %v2162
      %v2181 = vsel %vm393, %v2164, 0
      %v2184 = vsel %vm393, %v2165, 0
      %v2187 = vsel %vm393, %v2166, 0
      %v2190 = vsel %vm393, %v2167, 0
      %v2193 = vsel %vm393, %v2168, 0
      %v2196 = vsel %vm393, %v2169, 0
      %v2199 = vsel %vm393, %v2170, 0
      %v2202 = vsel %vm393, %v2171, 0
      %v2205 = vsel %vm393, %v2172, 0
      %v2208 = vsel %vm393, %v2173, 0
      %v2211 = vsel %vm393, %v2174, 0
      %v2214 = vsel %vm393, %v2175, 0
      %v2217 = vsel %vm393, %v2176, 0
      %v2220 = vsel %vm393, %v2177, 0
      %v2223 = vsel %vm393, %v2178, 0
      %v2226 = vsel %vm393, %v2179, 0
      %v2229 = vsel %vm442, %v2099, 0
      %2231 = vmatprep.subr.bf16.mxu0 0
      %2232 = vmatpush1.bf16.msra.mxu0 %v2229
      %2233 = vmatprep.subr.bf16.mxu0 0
      %2234 = vmatpush1.bf16.msra.mxu0 0
      %2235 = vmatprep.subr.bf16.mxu0 0
      %2236 = vmatpush1.bf16.msra.mxu0 0
      %2237 = vmatprep.subr.bf16.mxu0 0
      %2238 = vmatpush1.bf16.msra.mxu0 0
      %2239 = vmatprep.subr.bf16.mxu0 0
      %2240 = vmatpush1.bf16.msra.mxu0 0
      %2241 = vmatprep.subr.bf16.mxu0 0
      %2242 = vmatpush1.bf16.msra.mxu0 0
      %2243 = vmatprep.subr.bf16.mxu0 0
      %2244 = vmatpush1.bf16.msra.mxu0 0
      %2245 = vmatprep.subr.bf16.mxu0 0
      %2246 = vmatpush1.bf16.msra.mxu0 0
      %2247 = vmatprep.subr.bf16.mxu0 0
      %2248 = vmatpush1.bf16.msra.mxu0 0
      %2249 = vmatprep.subr.bf16.mxu0 0
      %2250 = vmatpush1.bf16.msra.mxu0 0
      %2251 = vmatprep.subr.bf16.mxu0 0
      %2252 = vmatpush1.bf16.msra.mxu0 0
      %2253 = vmatprep.subr.bf16.mxu0 0
      %2254 = vmatpush1.bf16.msra.mxu0 0
      %2255 = vmatprep.subr.bf16.mxu0 0
      %2256 = vmatpush1.bf16.msra.mxu0 0
      %2257 = vmatprep.subr.bf16.mxu0 0
      %2258 = vmatpush1.bf16.msra.mxu0 0
      %2259 = vmatprep.subr.bf16.mxu0 0
      %2260 = vmatpush1.bf16.msra.mxu0 0
      %2261 = vmatprep.subr.bf16.mxu0 0
      %2262 = vmatpush1.bf16.msra.mxu0 0
      %2263 = vmatprep.mubr.bf16.mxu0 0
      %2264 = vmatmul.mubr.bf16.gmra.mrb[0].mxu0 %v2181
      %v2265 = vpop.f32.mrb[0].mxu0
      %v2266 = vadd.f32 0.0, %v2265
      %v2267 = vpop.f32.mrb[0].mxu0
      %v2268 = vpop.f32.mrb[0].mxu0
      %v2269 = vadd.f32 0.0, %v2268
      %v2270 = vpop.f32.mrb[0].mxu0
      %2271 = vmatprep.mubr.bf16.mxu0 0
      %2272 = vmatmul.mubr.bf16.gmra.mrb[0].mxu0 %v2184
      %v2273 = vpop.f32.mrb[0].mxu0
      %v2274 = vadd.f32 0.0, %v2273
      %v2275 = vpop.f32.mrb[0].mxu0
      %v2276 = vpop.f32.mrb[0].mxu0
      %v2277 = vadd.f32 0.0, %v2276
      %v2278 = vpop.f32.mrb[0].mxu0
      %2279 = vmatprep.mubr.bf16.mxu0 0
      %2280 = vmatmul.mubr.bf16.gmra.mrb[0].mxu0 %v2187
      %v2281 = vpop.f32.mrb[0].mxu0
      %v2282 = vadd.f32 0.0, %v2281
      %v2283 = vpop.f32.mrb[0].mxu0
      %v2284 = vpop.f32.mrb[0].mxu0
      %v2285 = vadd.f32 0.0, %v2284
      %v2286 = vpop.f32.mrb[0].mxu0
      %2287 = vmatprep.mubr.bf16.mxu0 0
      %2288 = vmatmul.mubr.bf16.gmra.mrb[0].mxu0 %v2190
      %v2289 = vpop.f32.mrb[0].mxu0
      %v2290 = vadd.f32 0.0, %v2289
      %v2291 = vpop.f32.mrb[0].mxu0
      %v2292 = vpop.f32.mrb[0].mxu0
      %v2293 = vadd.f32 0.0, %v2292
      %v2294 = vpop.f32.mrb[0].mxu0
      %2295 = vmatprep.mubr.bf16.mxu0 0
      %2296 = vmatmul.mubr.bf16.gmra.mrb[0].mxu0 %v2193
      %v2297 = vpop.f32.mrb[0].mxu0
      %v2298 = vadd.f32 0.0, %v2297
      %v2299 = vpop.f32.mrb[0].mxu0
      %v2300 = vpop.f32.mrb[0].mxu0
      %v2301 = vadd.f32 0.0, %v2300
      %v2302 = vpop.f32.mrb[0].mxu0
      %2303 = vmatprep.mubr.bf16.mxu0 0
      %2304 = vmatmul.mubr.bf16.gmra.mrb[0].mxu0 %v2196
      %v2305 = vpop.f32.mrb[0].mxu0
      %v2306 = vadd.f32 0.0, %v2305
      %v2307 = vpop.f32.mrb[0].mxu0
      %v2308 = vpop.f32.mrb[0].mxu0
      %v2309 = vadd.f32 0.0, %v2308
      %v2310 = vpop.f32.mrb[0].mxu0
      %2311 = vmatprep.mubr.bf16.mxu0 0
      %2312 = vmatmul.mubr.bf16.gmra.mrb[0].mxu0 %v2199
      %v2313 = vpop.f32.mrb[0].mxu0
      %v2314 = vadd.f32 0.0, %v2313
      %v2315 = vpop.f32.mrb[0].mxu0
      %v2316 = vpop.f32.mrb[0].mxu0
      %v2317 = vadd.f32 0.0, %v2316
      %v2318 = vpop.f32.mrb[0].mxu0
      %2319 = vmatprep.mubr.bf16.mxu0 0
      %2320 = vmatmul.mubr.bf16.gmra.mrb[0].mxu0 %v2202
      %v2321 = vpop.f32.mrb[0].mxu0
      %v2322 = vadd.f32 0.0, %v2321
      %v2323 = vpop.f32.mrb[0].mxu0
      %v2324 = vpop.f32.mrb[0].mxu0
      %v2325 = vadd.f32 0.0, %v2324
      %v2326 = vpop.f32.mrb[0].mxu0
      %2327 = vmatprep.mubr.bf16.mxu0 0
      %2328 = vmatmul.mubr.bf16.gmra.mrb[0].mxu0 %v2205
      %v2329 = vpop.f32.mrb[0].mxu0
      %v2330 = vadd.f32 0.0, %v2329
      %v2331 = vpop.f32.mrb[0].mxu0
      %v2332 = vpop.f32.mrb[0].mxu0
      %v2333 = vadd.f32 0.0, %v2332
      %v2334 = vpop.f32.mrb[0].mxu0
      %2335 = vmatprep.mubr.bf16.mxu0 0
      %2336 = vmatmul.mubr.bf16.gmra.mrb[0].mxu0 %v2208
      %v2337 = vpop.f32.mrb[0].mxu0
      %v2338 = vadd.f32 0.0, %v2337
      %v2339 = vpop.f32.mrb[0].mxu0
      %v2340 = vpop.f32.mrb[0].mxu0
      %v2341 = vadd.f32 0.0, %v2340
      %v2342 = vpop.f32.mrb[0].mxu0
      %2343 = vmatprep.mubr.bf16.mxu0 0
      %2344 = vmatmul.mubr.bf16.gmra.mrb[0].mxu0 %v2211
      %v2345 = vpop.f32.mrb[0].mxu0
      %v2346 = vadd.f32 0.0, %v2345
      %v2347 = vpop.f32.mrb[0].mxu0
      %v2348 = vpop.f32.mrb[0].mxu0
      %v2349 = vadd.f32 0.0, %v2348
      %v2350 = vpop.f32.mrb[0].mxu0
      %2351 = vmatprep.mubr.bf16.mxu0 0
      %2352 = vmatmul.mubr.bf16.gmra.mrb[0].mxu0 %v2214
      %v2353 = vpop.f32.mrb[0].mxu0
      %v2354 = vadd.f32 0.0, %v2353
      %v2355 = vpop.f32.mrb[0].mxu0
      %v2356 = vpop.f32.mrb[0].mxu0
      %v2357 = vadd.f32 0.0, %v2356
      %v2358 = vpop.f32.mrb[0].mxu0
      %2359 = vmatprep.mubr.bf16.mxu0 0
      %2360 = vmatmul.mubr.bf16.gmra.mrb[0].mxu0 %v2217
      %v2361 = vpop.f32.mrb[0].mxu0
      %v2362 = vadd.f32 0.0, %v2361
      %v2363 = vpop.f32.mrb[0].mxu0
      %v2364 = vpop.f32.mrb[0].mxu0
      %v2365 = vadd.f32 0.0, %v2364
      %v2366 = vpop.f32.mrb[0].mxu0
      %2367 = vmatprep.mubr.bf16.mxu0 0
      %2368 = vmatmul.mubr.bf16.gmra.mrb[0].mxu0 %v2220
      %v2369 = vpop.f32.mrb[0].mxu0
      %v2370 = vadd.f32 0.0, %v2369
      %v2371 = vpop.f32.mrb[0].mxu0
      %v2372 = vpop.f32.mrb[0].mxu0
      %v2373 = vadd.f32 0.0, %v2372
      %v2374 = vpop.f32.mrb[0].mxu0
      %2375 = vmatprep.mubr.bf16.mxu0 0
      %2376 = vmatmul.mubr.bf16.gmra.mrb[0].mxu0 %v2223
      %v2377 = vpop.f32.mrb[0].mxu0
      %v2378 = vadd.f32 0.0, %v2377
      %v2379 = vpop.f32.mrb[0].mxu0
      %v2380 = vpop.f32.mrb[0].mxu0
      %v2381 = vadd.f32 0.0, %v2380
      %v2382 = vpop.f32.mrb[0].mxu0
      %2383 = vmatprep.mubr.bf16.mxu0 0
      %2384 = vmatmul.mubr.bf16.gmra.mrb[0].mxu0 %v2226
      %v2385 = vpop.f32.mrb[0].mxu0
      %v2386 = vadd.f32 0.0, %v2385
      %v2387 = vpop.f32.mrb[0].mxu0
      %v2388 = vpop.f32.mrb[0].mxu0
      %v2389 = vadd.f32 0.0, %v2388
      %v2390 = vpop.f32.mrb[0].mxu0
      %2391 = vdwg.mxu0
      %v2392 = vadd.f32 %v2066, %v2266
      %v2393 = vadd.f32 %v2067, %v2269
      %v2394 = vadd.f32 %v2068, %v2274
      %v2395 = vadd.f32 %v2069, %v2277
      %v2396 = vadd.f32 %v2070, %v2282
      %v2397 = vadd.f32 %v2071, %v2285
      %v2398 = vadd.f32 %v2072, %v2290
      %v2399 = vadd.f32 %v2073, %v2293
      %v2400 = vadd.f32 %v2074, %v2298
      %v2401 = vadd.f32 %v2075, %v2301
      %v2402 = vadd.f32 %v2076, %v2306
      %v2403 = vadd.f32 %v2077, %v2309
      %v2404 = vadd.f32 %v2078, %v2314
      %v2405 = vadd.f32 %v2079, %v2317
      %v2406 = vadd.f32 %v2080, %v2322
      %v2407 = vadd.f32 %v2081, %v2325
      %v2408 = vadd.f32 %v2082, %v2330
      %v2409 = vadd.f32 %v2083, %v2333
      %v2410 = vadd.f32 %v2084, %v2338
      %v2411 = vadd.f32 %v2085, %v2341
      %v2412 = vadd.f32 %v2086, %v2346
      %v2413 = vadd.f32 %v2087, %v2349
      %v2414 = vadd.f32 %v2088, %v2354
      %v2415 = vadd.f32 %v2089, %v2357
      %v2416 = vadd.f32 %v2090, %v2362
      %v2417 = vadd.f32 %v2091, %v2365
      %v2418 = vadd.f32 %v2092, %v2370
      %v2419 = vadd.f32 %v2093, %v2373
      %v2420 = vadd.f32 %v2094, %v2378
      %v2421 = vadd.f32 %v2095, %v2381
      %v2422 = vadd.f32 %v2096, %v2386
      %v2423 = vadd.f32 %v2097, %v2389
      %2424 = vst [vmem:[#allocation2] sm:$0xff] %v2392
      %2425 = vst [vmem:[#allocation2 + $0x8] sm:$0xff] %v2393
      %2426 = vst [vmem:[#allocation2 + $0x10] sm:$0xff] %v2394
      %2427 = vst [vmem:[#allocation2 + $0x18] sm:$0xff] %v2395
      %2428 = vst [vmem:[#allocation2 + $0x20] sm:$0xff] %v2396
      %2429 = vst [vmem:[#allocation2 + $0x28] sm:$0xff] %v2397
      %2430 = vst [vmem:[#allocation2 + $0x30] sm:$0xff] %v2398
      %2431 = vst [vmem:[#allocation2 + $0x38] sm:$0xff] %v2399
      %2432 = vst [vmem:[#allocation2 + $0x40] sm:$0xff] %v2400
      %2433 = vst [vmem:[#allocation2 + $0x48] sm:$0xff] %v2401
      %2434 = vst [vmem:[#allocation2 + $0x50] sm:$0xff] %v2402
      %2435 = vst [vmem:[#allocation2 + $0x58] sm:$0xff] %v2403
      %2436 = vst [vmem:[#allocation2 + $0x60] sm:$0xff] %v2404
      %2437 = vst [vmem:[#allocation2 + $0x68] sm:$0xff] %v2405
      %2438 = vst [vmem:[#allocation2 + $0x70] sm:$0xff] %v2406
      %2439 = vst [vmem:[#allocation2 + $0x78] sm:$0xff] %v2407
      %2440 = vst [vmem:[#allocation2 + $0x80] sm:$0xff] %v2408
      %2441 = vst [vmem:[#allocation2 + $0x88] sm:$0xff] %v2409
      %2442 = vst [vmem:[#allocation2 + $0x90] sm:$0xff] %v2410
      %2443 = vst [vmem:[#allocation2 + $0x98] sm:$0xff] %v2411
      %2444 = vst [vmem:[#allocation2 + $0xa0] sm:$0xff] %v2412
      %2445 = vst [vmem:[#allocation2 + $0xa8] sm:$0xff] %v2413
      %2446 = vst [vmem:[#allocation2 + $0xb0] sm:$0xff] %v2414
      %2447 = vst [vmem:[#allocation2 + $0xb8] sm:$0xff] %v2415
      %2448 = vst [vmem:[#allocation2 + $0xc0] sm:$0xff] %v2416
      %2449 = vst [vmem:[#allocation2 + $0xc8] sm:$0xff] %v2417
      %2450 = vst [vmem:[#allocation2 + $0xd0] sm:$0xff] %v2418
      %2451 = vst [vmem:[#allocation2 + $0xd8] sm:$0xff] %v2419
      %2452 = vst [vmem:[#allocation2 + $0xe0] sm:$0xff] %v2420
      %2453 = vst [vmem:[#allocation2 + $0xe8] sm:$0xff] %v2421
      %2454 = vst [vmem:[#allocation2 + $0xf0] sm:$0xff] %v2422
      %2455 = vst [vmem:[#allocation2 + $0xf8] sm:$0xff] %v2423
      %v2456 = vld [vmem:[%s2033] sm:$0xf]
      %v2457 = vld [vmem:[%s2033 + $0x4] sm:$0xf]
      %v2458 = vld [vmem:[%s2033 + $0x8] sm:$0x1]
      %v2459 = vld [vmem:[%s2033 + $0xc] sm:$0xf]
      %v2460 = vld [vmem:[%s2033 + $0x10] sm:$0xf]
      %v2461 = vld [vmem:[%s2033 + $0x14] sm:$0x1]
      %v2462 = vld [vmem:[%s2033 + $0x18] sm:$0xf]
      %v2463 = vld [vmem:[%s2033 + $0x1c] sm:$0xf]
      %v2464 = vld [vmem:[%s2033 + $0x20] sm:$0x1]
      %v2465 = vld [vmem:[%s2033 + $0x24] sm:$0xf]
      %v2466 = vld [vmem:[%s2033 + $0x28] sm:$0xf]
      %v2467 = vld [vmem:[%s2033 + $0x2c] sm:$0x1]
      %v2468 = vld [vmem:[%s2033 + $0x30] sm:$0xf]
      %v2469 = vld [vmem:[%s2033 + $0x34] sm:$0xf]
      %v2470 = vld [vmem:[%s2033 + $0x38] sm:$0x1]
      %v2471 = vld [vmem:[%s2033 + $0x3c] sm:$0xf]
      %v2472 = vld [vmem:[%s2033 + $0x40] sm:$0xf]
      %v2473 = vld [vmem:[%s2033 + $0x44] sm:$0x1]
      %v2474 = vld [vmem:[%s2033 + $0x48] sm:$0xf]
      %v2475 = vld [vmem:[%s2033 + $0x4c] sm:$0xf]
      %v2476 = vld [vmem:[%s2033 + $0x50] sm:$0x1]
      %v2477 = vld [vmem:[%s2033 + $0x54] sm:$0xf]
      %v2478 = vld [vmem:[%s2033 + $0x58] sm:$0xf]
      %v2479 = vld [vmem:[%s2033 + $0x5c] sm:$0x1]
      %v2480 = vld [vmem:[%s2033 + $0x60] sm:$0xf]
      %v2481 = vld [vmem:[%s2033 + $0x64] sm:$0xf]
      %v2482 = vld [vmem:[%s2033 + $0x68] sm:$0x1]
      %v2483 = vld [vmem:[%s2033 + $0x6c] sm:$0xf]
      %v2484 = vld [vmem:[%s2033 + $0x70] sm:$0xf]
      %v2485 = vld [vmem:[%s2033 + $0x74] sm:$0x1]
      %v2486 = vld [vmem:[%s2033 + $0x78] sm:$0xf]
      %v2487 = vld [vmem:[%s2033 + $0x7c] sm:$0xf]
      %v2488 = vld [vmem:[%s2033 + $0x80] sm:$0x1]
      %v2489 = vld [vmem:[%s2033 + $0x84] sm:$0xf]
      %v2490 = vld [vmem:[%s2033 + $0x88] sm:$0xf]
      %v2491 = vld [vmem:[%s2033 + $0x8c] sm:$0x1]
      %v2492 = vld [vmem:[%s2033 + $0x90] sm:$0xf]
      %v2493 = vld [vmem:[%s2033 + $0x94] sm:$0xf]
      %v2494 = vld [vmem:[%s2033 + $0x98] sm:$0x1]
      %v2495 = vld [vmem:[%s2033 + $0x9c] sm:$0xf]
      %v2496 = vld [vmem:[%s2033 + $0xa0] sm:$0xf]
      %v2497 = vld [vmem:[%s2033 + $0xa4] sm:$0x1]
      %v2498 = vld [vmem:[%s2033 + $0xa8] sm:$0xf]
      %v2499 = vld [vmem:[%s2033 + $0xac] sm:$0xf]
      %v2500 = vld [vmem:[%s2033 + $0xb0] sm:$0x1]
      %v2501 = vld [vmem:[%s2033 + $0xb4] sm:$0xf]
      %v2502 = vld [vmem:[%s2033 + $0xb8] sm:$0xf]
      %v2503 = vld [vmem:[%s2033 + $0xbc] sm:$0x1]
      %v2504 = vld [vmem:[#allocation2] sm:$0xff]
      %v2505 = vld [vmem:[#allocation2 + $0x8] sm:$0xff]
      %v2506 = vld [vmem:[#allocation2 + $0x10] sm:$0xff]
      %v2507 = vld [vmem:[#allocation2 + $0x18] sm:$0xff]
      %v2508 = vld [vmem:[#allocation2 + $0x20] sm:$0xff]
      %v2509 = vld [vmem:[#allocation2 + $0x28] sm:$0xff]
      %v2510 = vld [vmem:[#allocation2 + $0x30] sm:$0xff]
      %v2511 = vld [vmem:[#allocation2 + $0x38] sm:$0xff]
      %v2512 = vld [vmem:[#allocation2 + $0x40] sm:$0xff]
      %v2513 = vld [vmem:[#allocation2 + $0x48] sm:$0xff]
      %v2514 = vld [vmem:[#allocation2 + $0x50] sm:$0xff]
      %v2515 = vld [vmem:[#allocation2 + $0x58] sm:$0xff]
      %v2516 = vld [vmem:[#allocation2 + $0x60] sm:$0xff]
      %v2517 = vld [vmem:[#allocation2 + $0x68] sm:$0xff]
      %v2518 = vld [vmem:[#allocation2 + $0x70] sm:$0xff]
      %v2519 = vld [vmem:[#allocation2 + $0x78] sm:$0xff]
      %v2520 = vld [vmem:[#allocation2 + $0x80] sm:$0xff]
      %v2521 = vld [vmem:[#allocation2 + $0x88] sm:$0xff]
      %v2522 = vld [vmem:[#allocation2 + $0x90] sm:$0xff]
      %v2523 = vld [vmem:[#allocation2 + $0x98] sm:$0xff]
      %v2524 = vld [vmem:[#allocation2 + $0xa0] sm:$0xff]
      %v2525 = vld [vmem:[#allocation2 + $0xa8] sm:$0xff]
      %v2526 = vld [vmem:[#allocation2 + $0xb0] sm:$0xff]
      %v2527 = vld [vmem:[#allocation2 + $0xb8] sm:$0xff]
      %v2528 = vld [vmem:[#allocation2 + $0xc0] sm:$0xff]
      %v2529 = vld [vmem:[#allocation2 + $0xc8] sm:$0xff]
      %v2530 = vld [vmem:[#allocation2 + $0xd0] sm:$0xff]
      %v2531 = vld [vmem:[#allocation2 + $0xd8] sm:$0xff]
      %v2532 = vld [vmem:[#allocation2 + $0xe0] sm:$0xff]
      %v2533 = vld [vmem:[#allocation2 + $0xe8] sm:$0xff]
      %v2534 = vld [vmem:[#allocation2 + $0xf0] sm:$0xff]
      %v2535 = vld [vmem:[#allocation2 + $0xf8] sm:$0xff]
      %v2537 = vshrl.u32 %v2456, 16
      %v2539 = vrot.slane %v2537, 4
      %v2540 = vshll.u32 %v2456, 16
      %v2542 = vrot.slane %v2540, 5
      %v2543 = vor.u32 %v2539, %v2542
      %v2544 = vrot.slane %v2543, 4
      %v2546 = vshll.u32 %v2457, 16
      %v2548 = vrot.slane %v2546, 5
      %v2549 = vsel %vm753, %v2544, %v2548
      %v2550 = vshrl.u32 %v2457, 16
      %v2552 = vrot.slane %v2550, 4
      %v2553 = vor.u32 %v2552, %v2548
      %v2554 = vrot.slane %v2553, 4
      %v2556 = vshll.u32 %v2458, 16
      %v2558 = vrot.slane %v2556, 5
      %v2559 = vsel %vm753, %v2554, %v2558
      %v2561 = vshrl.u32 %v2459, 16
      %v2563 = vrot.slane %v2561, 4
      %v2564 = vshll.u32 %v2459, 16
      %v2566 = vrot.slane %v2564, 5
      %v2567 = vor.u32 %v2563, %v2566
      %v2568 = vrot.slane %v2567, 4
      %v2570 = vshll.u32 %v2460, 16
      %v2572 = vrot.slane %v2570, 5
      %v2573 = vsel %vm753, %v2568, %v2572
      %v2574 = vshrl.u32 %v2460, 16
      %v2576 = vrot.slane %v2574, 4
      %v2577 = vor.u32 %v2576, %v2572
      %v2578 = vrot.slane %v2577, 4
      %v2580 = vshll.u32 %v2461, 16
      %v2582 = vrot.slane %v2580, 5
      %v2583 = vsel %vm753, %v2578, %v2582
      %v2585 = vshrl.u32 %v2462, 16
      %v2587 = vrot.slane %v2585, 4
      %v2588 = vshll.u32 %v2462, 16
      %v2590 = vrot.slane %v2588, 5
      %v2591 = vor.u32 %v2587, %v2590
      %v2592 = vrot.slane %v2591, 4
      %v2594 = vshll.u32 %v2463, 16
      %v2596 = vrot.slane %v2594, 5
      %v2597 = vsel %vm753, %v2592, %v2596
      %v2598 = vshrl.u32 %v2463, 16
      %v2600 = vrot.slane %v2598, 4
      %v2601 = vor.u32 %v2600, %v2596
      %v2602 = vrot.slane %v2601, 4
      %v2604 = vshll.u32 %v2464, 16
      %v2606 = vrot.slane %v2604, 5
      %v2607 = vsel %vm753, %v2602, %v2606
      %v2609 = vshrl.u32 %v2465, 16
      %v2611 = vrot.slane %v2609, 4
      %v2612 = vshll.u32 %v2465, 16
      %v2614 = vrot.slane %v2612, 5
      %v2615 = vor.u32 %v2611, %v2614
      %v2616 = vrot.slane %v2615, 4
      %v2618 = vshll.u32 %v2466, 16
      %v2620 = vrot.slane %v2618, 5
      %v2621 = vsel %vm753, %v2616, %v2620
      %v2622 = vshrl.u32 %v2466, 16
      %v2624 = vrot.slane %v2622, 4
      %v2625 = vor.u32 %v2624, %v2620
      %v2626 = vrot.slane %v2625, 4
      %v2628 = vshll.u32 %v2467, 16
      %v2630 = vrot.slane %v2628, 5
      %v2631 = vsel %vm753, %v2626, %v2630
      %v2633 = vshrl.u32 %v2468, 16
      %v2635 = vrot.slane %v2633, 4
      %v2636 = vshll.u32 %v2468, 16
      %v2638 = vrot.slane %v2636, 5
      %v2639 = vor.u32 %v2635, %v2638
      %v2640 = vrot.slane %v2639, 4
      %v2642 = vshll.u32 %v2469, 16
      %v2644 = vrot.slane %v2642, 5
      %v2645 = vsel %vm753, %v2640, %v2644
      %v2646 = vshrl.u32 %v2469, 16
      %v2648 = vrot.slane %v2646, 4
      %v2649 = vor.u32 %v2648, %v2644
      %v2650 = vrot.slane %v2649, 4
      %v2652 = vshll.u32 %v2470, 16
      %v2654 = vrot.slane %v2652, 5
      %v2655 = vsel %vm753, %v2650, %v2654
      %v2657 = vshrl.u32 %v2471, 16
      %v2659 = vrot.slane %v2657, 4
      %v2660 = vshll.u32 %v2471, 16
      %v2662 = vrot.slane %v2660, 5
      %v2663 = vor.u32 %v2659, %v2662
      %v2664 = vrot.slane %v2663, 4
      %v2666 = vshll.u32 %v2472, 16
      %v2668 = vrot.slane %v2666, 5
      %v2669 = vsel %vm753, %v2664, %v2668
      %v2670 = vshrl.u32 %v2472, 16
      %v2672 = vrot.slane %v2670, 4
      %v2673 = vor.u32 %v2672, %v2668
      %v2674 = vrot.slane %v2673, 4
      %v2676 = vshll.u32 %v2473, 16
      %v2678 = vrot.slane %v2676, 5
      %v2679 = vsel %vm753, %v2674, %v2678
      %v2681 = vshrl.u32 %v2474, 16
      %v2683 = vrot.slane %v2681, 4
      %v2684 = vshll.u32 %v2474, 16
      %v2686 = vrot.slane %v2684, 5
      %v2687 = vor.u32 %v2683, %v2686
      %v2688 = vrot.slane %v2687, 4
      %v2690 = vshll.u32 %v2475, 16
      %v2692 = vrot.slane %v2690, 5
      %v2693 = vsel %vm753, %v2688, %v2692
      %v2694 = vshrl.u32 %v2475, 16
      %v2696 = vrot.slane %v2694, 4
      %v2697 = vor.u32 %v2696, %v2692
      %v2698 = vrot.slane %v2697, 4
      %v2700 = vshll.u32 %v2476, 16
      %v2702 = vrot.slane %v2700, 5
      %v2703 = vsel %vm753, %v2698, %v2702
      %v2705 = vshrl.u32 %v2477, 16
      %v2707 = vrot.slane %v2705, 4
      %v2708 = vshll.u32 %v2477, 16
      %v2710 = vrot.slane %v2708, 5
      %v2711 = vor.u32 %v2707, %v2710
      %v2712 = vrot.slane %v2711, 4
      %v2714 = vshll.u32 %v2478, 16
      %v2716 = vrot.slane %v2714, 5
      %v2717 = vsel %vm753, %v2712, %v2716
      %v2718 = vshrl.u32 %v2478, 16
      %v2720 = vrot.slane %v2718, 4
      %v2721 = vor.u32 %v2720, %v2716
      %v2722 = vrot.slane %v2721, 4
      %v2724 = vshll.u32 %v2479, 16
      %v2726 = vrot.slane %v2724, 5
      %v2727 = vsel %vm753, %v2722, %v2726
      %v2729 = vshrl.u32 %v2480, 16
      %v2731 = vrot.slane %v2729, 4
      %v2732 = vshll.u32 %v2480, 16
      %v2734 = vrot.slane %v2732, 5
      %v2735 = vor.u32 %v2731, %v2734
      %v2736 = vrot.slane %v2735, 4
      %v2738 = vshll.u32 %v2481, 16
      %v2740 = vrot.slane %v2738, 5
      %v2741 = vsel %vm753, %v2736, %v2740
      %v2742 = vshrl.u32 %v2481, 16
      %v2744 = vrot.slane %v2742, 4
      %v2745 = vor.u32 %v2744, %v2740
      %v2746 = vrot.slane %v2745, 4
      %v2748 = vshll.u32 %v2482, 16
      %v2750 = vrot.slane %v2748, 5
      %v2751 = vsel %vm753, %v2746, %v2750
      %v2753 = vshrl.u32 %v2483, 16
      %v2755 = vrot.slane %v2753, 4
      %v2756 = vshll.u32 %v2483, 16
      %v2758 = vrot.slane %v2756, 5
      %v2759 = vor.u32 %v2755, %v2758
      %v2760 = vrot.slane %v2759, 4
      %v2762 = vshll.u32 %v2484, 16
      %v2764 = vrot.slane %v2762, 5
      %v2765 = vsel %vm753, %v2760, %v2764
      %v2766 = vshrl.u32 %v2484, 16
      %v2768 = vrot.slane %v2766, 4
      %v2769 = vor.u32 %v2768, %v2764
      %v2770 = vrot.slane %v2769, 4
      %v2772 = vshll.u32 %v2485, 16
      %v2774 = vrot.slane %v2772, 5
      %v2775 = vsel %vm753, %v2770, %v2774
      %v2777 = vshrl.u32 %v2486, 16
      %v2779 = vrot.slane %v2777, 4
      %v2780 = vshll.u32 %v2486, 16
      %v2782 = vrot.slane %v2780, 5
      %v2783 = vor.u32 %v2779, %v2782
      %v2784 = vrot.slane %v2783, 4
      %v2786 = vshll.u32 %v2487, 16
      %v2788 = vrot.slane %v2786, 5
      %v2789 = vsel %vm753, %v2784, %v2788
      %v2790 = vshrl.u32 %v2487, 16
      %v2792 = vrot.slane %v2790, 4
      %v2793 = vor.u32 %v2792, %v2788
      %v2794 = vrot.slane %v2793, 4
      %v2796 = vshll.u32 %v2488, 16
      %v2798 = vrot.slane %v2796, 5
      %v2799 = vsel %vm753, %v2794, %v2798
      %v2801 = vshrl.u32 %v2489, 16
      %v2803 = vrot.slane %v2801, 4
      %v2804 = vshll.u32 %v2489, 16
      %v2806 = vrot.slane %v2804, 5
      %v2807 = vor.u32 %v2803, %v2806
      %v2808 = vrot.slane %v2807, 4
      %v2810 = vshll.u32 %v2490, 16
      %v2812 = vrot.slane %v2810, 5
      %v2813 = vsel %vm753, %v2808, %v2812
      %v2814 = vshrl.u32 %v2490, 16
      %v2816 = vrot.slane %v2814, 4
      %v2817 = vor.u32 %v2816, %v2812
      %v2818 = vrot.slane %v2817, 4
      %v2820 = vshll.u32 %v2491, 16
      %v2822 = vrot.slane %v2820, 5
      %v2823 = vsel %vm753, %v2818, %v2822
      %v2825 = vshrl.u32 %v2492, 16
      %v2827 = vrot.slane %v2825, 4
      %v2828 = vshll.u32 %v2492, 16
      %v2830 = vrot.slane %v2828, 5
      %v2831 = vor.u32 %v2827, %v2830
      %v2832 = vrot.slane %v2831, 4
      %v2834 = vshll.u32 %v2493, 16
      %v2836 = vrot.slane %v2834, 5
      %v2837 = vsel %vm753, %v2832, %v2836
      %v2838 = vshrl.u32 %v2493, 16
      %v2840 = vrot.slane %v2838, 4
      %v2841 = vor.u32 %v2840, %v2836
      %v2842 = vrot.slane %v2841, 4
      %v2844 = vshll.u32 %v2494, 16
      %v2846 = vrot.slane %v2844, 5
      %v2847 = vsel %vm753, %v2842, %v2846
      %v2849 = vshrl.u32 %v2495, 16
      %v2851 = vrot.slane %v2849, 4
      %v2852 = vshll.u32 %v2495, 16
      %v2854 = vrot.slane %v2852, 5
      %v2855 = vor.u32 %v2851, %v2854
      %v2856 = vrot.slane %v2855, 4
      %v2858 = vshll.u32 %v2496, 16
      %v2860 = vrot.slane %v2858, 5
      %v2861 = vsel %vm753, %v2856, %v2860
      %v2862 = vshrl.u32 %v2496, 16
      %v2864 = vrot.slane %v2862, 4
      %v2865 = vor.u32 %v2864, %v2860
      %v2866 = vrot.slane %v2865, 4
      %v2868 = vshll.u32 %v2497, 16
      %v2870 = vrot.slane %v2868, 5
      %v2871 = vsel %vm753, %v2866, %v2870
      %v2873 = vshrl.u32 %v2498, 16
      %v2875 = vrot.slane %v2873, 4
      %v2876 = vshll.u32 %v2498, 16
      %v2878 = vrot.slane %v2876, 5
      %v2879 = vor.u32 %v2875, %v2878
      %v2880 = vrot.slane %v2879, 4
      %v2882 = vshll.u32 %v2499, 16
      %v2884 = vrot.slane %v2882, 5
      %v2885 = vsel %vm753, %v2880, %v2884
      %v2886 = vshrl.u32 %v2499, 16
      %v2888 = vrot.slane %v2886, 4
      %v2889 = vor.u32 %v2888, %v2884
      %v2890 = vrot.slane %v2889, 4
      %v2892 = vshll.u32 %v2500, 16
      %v2894 = vrot.slane %v2892, 5
      %v2895 = vsel %vm753, %v2890, %v2894
      %v2897 = vshrl.u32 %v2501, 16
      %v2899 = vrot.slane %v2897, 4
      %v2900 = vshll.u32 %v2501, 16
      %v2902 = vrot.slane %v2900, 5
      %v2903 = vor.u32 %v2899, %v2902
      %v2904 = vrot.slane %v2903, 4
      %v2906 = vshll.u32 %v2502, 16
      %v2908 = vrot.slane %v2906, 5
      %v2909 = vsel %vm753, %v2904, %v2908
      %v2910 = vshrl.u32 %v2502, 16
      %v2912 = vrot.slane %v2910, 4
      %v2913 = vor.u32 %v2912, %v2908
      %v2914 = vrot.slane %v2913, 4
      %v2916 = vshll.u32 %v2503, 16
      %v2918 = vrot.slane %v2916, 5
      %v2919 = vsel %vm753, %v2914, %v2918
      %s2920 = scalar_lea.vmem %s1, 8
      %v2921 = vld [vmem:[%s2920] sm:$0x3]
      %v2922 = vunpack.c.l.b16 %v2549
      %v2923 = vunpack.c.l.b16 %v2559
      %v2924 = vunpack.c.l.b16 %v2573
      %v2925 = vunpack.c.l.b16 %v2583
      %v2926 = vunpack.c.l.b16 %v2597
      %v2927 = vunpack.c.l.b16 %v2607
      %v2928 = vunpack.c.l.b16 %v2621
      %v2929 = vunpack.c.l.b16 %v2631
      %v2930 = vunpack.c.l.b16 %v2645
      %v2931 = vunpack.c.l.b16 %v2655
      %v2932 = vunpack.c.l.b16 %v2669
      %v2933 = vunpack.c.l.b16 %v2679
      %v2934 = vunpack.c.l.b16 %v2693
      %v2935 = vunpack.c.l.b16 %v2703
      %v2936 = vunpack.c.l.b16 %v2717
      %v2937 = vunpack.c.l.b16 %v2727
      %v2938 = vunpack.c.l.b16 %v2741
      %v2939 = vunpack.c.l.b16 %v2751
      %v2940 = vunpack.c.l.b16 %v2765
      %v2941 = vunpack.c.l.b16 %v2775
      %v2942 = vunpack.c.l.b16 %v2789
      %v2943 = vunpack.c.l.b16 %v2799
      %v2944 = vunpack.c.l.b16 %v2813
      %v2945 = vunpack.c.l.b16 %v2823
      %v2946 = vunpack.c.l.b16 %v2837
      %v2947 = vunpack.c.l.b16 %v2847
      %v2948 = vunpack.c.l.b16 %v2861
      %v2949 = vunpack.c.l.b16 %v2871
      %v2950 = vunpack.c.l.b16 %v2885
      %v2951 = vunpack.c.l.b16 %v2895
      %v2952 = vunpack.c.l.b16 %v2909
      %v2953 = vunpack.c.l.b16 %v2919
      %v2954 = vpack.c.b16 %v2923, %v2922
      %v2955 = vpack.c.b16 %v2925, %v2924
      %v2956 = vpack.c.b16 %v2927, %v2926
      %v2957 = vpack.c.b16 %v2929, %v2928
      %v2958 = vpack.c.b16 %v2931, %v2930
      %v2959 = vpack.c.b16 %v2933, %v2932
      %v2960 = vpack.c.b16 %v2935, %v2934
      %v2961 = vpack.c.b16 %v2937, %v2936
      %v2962 = vpack.c.b16 %v2939, %v2938
      %v2963 = vpack.c.b16 %v2941, %v2940
      %v2964 = vpack.c.b16 %v2943, %v2942
      %v2965 = vpack.c.b16 %v2945, %v2944
      %v2966 = vpack.c.b16 %v2947, %v2946
      %v2967 = vpack.c.b16 %v2949, %v2948
      %v2968 = vpack.c.b16 %v2951, %v2950
      %v2969 = vpack.c.b16 %v2953, %v2952
      %v2971 = vsel %vm393, %v2954, 0
      %v2974 = vsel %vm393, %v2955, 0
      %v2977 = vsel %vm393, %v2956, 0
      %v2980 = vsel %vm393, %v2957, 0
      %v2983 = vsel %vm393, %v2958, 0
      %v2986 = vsel %vm393, %v2959, 0
      %v2989 = vsel %vm393, %v2960, 0
      %v2992 = vsel %vm393, %v2961, 0
      %v2995 = vsel %vm393, %v2962, 0
      %v2998 = vsel %vm393, %v2963, 0
      %v3001 = vsel %vm393, %v2964, 0
      %v3004 = vsel %vm393, %v2965, 0
      %v3007 = vsel %vm393, %v2966, 0
      %v3010 = vsel %vm393, %v2967, 0
      %v3013 = vsel %vm393, %v2968, 0
      %v3016 = vsel %vm393, %v2969, 0
      %v3019 = vsel %vm442, %v2921, 0
      %3021 = vmatprep.subr.bf16.mxu0 0
      %3022 = vmatpush1.bf16.msra.mxu0 %v3019
      %3023 = vmatprep.subr.bf16.mxu0 0
      %3024 = vmatpush1.bf16.msra.mxu0 0
      %3025 = vmatprep.subr.bf16.mxu0 0
      %3026 = vmatpush1.bf16.msra.mxu0 0
      %3027 = vmatprep.subr.bf16.mxu0 0
      %3028 = vmatpush1.bf16.msra.mxu0 0
      %3029 = vmatprep.subr.bf16.mxu0 0
      %3030 = vmatpush1.bf16.msra.mxu0 0
      %3031 = vmatprep.subr.bf16.mxu0 0
      %3032 = vmatpush1.bf16.msra.mxu0 0
      %3033 = vmatprep.subr.bf16.mxu0 0
      %3034 = vmatpush1.bf16.msra.mxu0 0
      %3035 = vmatprep.subr.bf16.mxu0 0
      %3036 = vmatpush1.bf16.msra.mxu0 0
      %3037 = vmatprep.subr.bf16.mxu0 0
      %3038 = vmatpush1.bf16.msra.mxu0 0
      %3039 = vmatprep.subr.bf16.mxu0 0
      %3040 = vmatpush1.bf16.msra.mxu0 0
      %3041 = vmatprep.subr.bf16.mxu0 0
      %3042 = vmatpush1.bf16.msra.mxu0 0
      %3043 = vmatprep.subr.bf16.mxu0 0
      %3044 = vmatpush1.bf16.msra.mxu0 0
      %3045 = vmatprep.subr.bf16.mxu0 0
      %3046 = vmatpush1.bf16.msra.mxu0 0
      %3047 = vmatprep.subr.bf16.mxu0 0
      %3048 = vmatpush1.bf16.msra.mxu0 0
      %3049 = vmatprep.subr.bf16.mxu0 0
      %3050 = vmatpush1.bf16.msra.mxu0 0
      %3051 = vmatprep.subr.bf16.mxu0 0
      %3052 = vmatpush1.bf16.msra.mxu0 0
      %3053 = vmatprep.mubr.bf16.mxu0 0
      %3054 = vmatmul.mubr.bf16.gmra.mrb[0].mxu0 %v2971
      %v3055 = vpop.f32.mrb[0].mxu0
      %v3056 = vadd.f32 0.0, %v3055
      %v3057 = vpop.f32.mrb[0].mxu0
      %v3058 = vpop.f32.mrb[0].mxu0
      %v3059 = vadd.f32 0.0, %v3058
      %v3060 = vpop.f32.mrb[0].mxu0
      %3061 = vmatprep.mubr.bf16.mxu0 0
      %3062 = vmatmul.mubr.bf16.gmra.mrb[0].mxu0 %v2974
      %v3063 = vpop.f32.mrb[0].mxu0
      %v3064 = vadd.f32 0.0, %v3063
      %v3065 = vpop.f32.mrb[0].mxu0
      %v3066 = vpop.f32.mrb[0].mxu0
      %v3067 = vadd.f32 0.0, %v3066
      %v3068 = vpop.f32.mrb[0].mxu0
      %3069 = vmatprep.mubr.bf16.mxu0 0
      %3070 = vmatmul.mubr.bf16.gmra.mrb[0].mxu0 %v2977
      %v3071 = vpop.f32.mrb[0].mxu0
      %v3072 = vadd.f32 0.0, %v3071
      %v3073 = vpop.f32.mrb[0].mxu0
      %v3074 = vpop.f32.mrb[0].mxu0
      %v3075 = vadd.f32 0.0, %v3074
      %v3076 = vpop.f32.mrb[0].mxu0
      %3077 = vmatprep.mubr.bf16.mxu0 0
      %3078 = vmatmul.mubr.bf16.gmra.mrb[0].mxu0 %v2980
      %v3079 = vpop.f32.mrb[0].mxu0
      %v3080 = vadd.f32 0.0, %v3079
      %v3081 = vpop.f32.mrb[0].mxu0
      %v3082 = vpop.f32.mrb[0].mxu0
      %v3083 = vadd.f32 0.0, %v3082
      %v3084 = vpop.f32.mrb[0].mxu0
      %3085 = vmatprep.mubr.bf16.mxu0 0
      %3086 = vmatmul.mubr.bf16.gmra.mrb[0].mxu0 %v2983
      %v3087 = vpop.f32.mrb[0].mxu0
      %v3088 = vadd.f32 0.0, %v3087
      %v3089 = vpop.f32.mrb[0].mxu0
      %v3090 = vpop.f32.mrb[0].mxu0
      %v3091 = vadd.f32 0.0, %v3090
      %v3092 = vpop.f32.mrb[0].mxu0
      %3093 = vmatprep.mubr.bf16.mxu0 0
      %3094 = vmatmul.mubr.bf16.gmra.mrb[0].mxu0 %v2986
      %v3095 = vpop.f32.mrb[0].mxu0
      %v3096 = vadd.f32 0.0, %v3095
      %v3097 = vpop.f32.mrb[0].mxu0
      %v3098 = vpop.f32.mrb[0].mxu0
      %v3099 = vadd.f32 0.0, %v3098
      %v3100 = vpop.f32.mrb[0].mxu0
      %3101 = vmatprep.mubr.bf16.mxu0 0
      %3102 = vmatmul.mubr.bf16.gmra.mrb[0].mxu0 %v2989
      %v3103 = vpop.f32.mrb[0].mxu0
      %v3104 = vadd.f32 0.0, %v3103
      %v3105 = vpop.f32.mrb[0].mxu0
      %v3106 = vpop.f32.mrb[0].mxu0
      %v3107 = vadd.f32 0.0, %v3106
      %v3108 = vpop.f32.mrb[0].mxu0
      %3109 = vmatprep.mubr.bf16.mxu0 0
      %3110 = vmatmul.mubr.bf16.gmra.mrb[0].mxu0 %v2992
      %v3111 = vpop.f32.mrb[0].mxu0
      %v3112 = vadd.f32 0.0, %v3111
      %v3113 = vpop.f32.mrb[0].mxu0
      %v3114 = vpop.f32.mrb[0].mxu0
      %v3115 = vadd.f32 0.0, %v3114
      %v3116 = vpop.f32.mrb[0].mxu0
      %3117 = vmatprep.mubr.bf16.mxu0 0
      %3118 = vmatmul.mubr.bf16.gmra.mrb[0].mxu0 %v2995
      %v3119 = vpop.f32.mrb[0].mxu0
      %v3120 = vadd.f32 0.0, %v3119
      %v3121 = vpop.f32.mrb[0].mxu0
      %v3122 = vpop.f32.mrb[0].mxu0
      %v3123 = vadd.f32 0.0, %v3122
      %v3124 = vpop.f32.mrb[0].mxu0
      %3125 = vmatprep.mubr.bf16.mxu0 0
      %3126 = vmatmul.mubr.bf16.gmra.mrb[0].mxu0 %v2998
      %v3127 = vpop.f32.mrb[0].mxu0
      %v3128 = vadd.f32 0.0, %v3127
      %v3129 = vpop.f32.mrb[0].mxu0
      %v3130 = vpop.f32.mrb[0].mxu0
      %v3131 = vadd.f32 0.0, %v3130
      %v3132 = vpop.f32.mrb[0].mxu0
      %3133 = vmatprep.mubr.bf16.mxu0 0
      %3134 = vmatmul.mubr.bf16.gmra.mrb[0].mxu0 %v3001
      %v3135 = vpop.f32.mrb[0].mxu0
      %v3136 = vadd.f32 0.0, %v3135
      %v3137 = vpop.f32.mrb[0].mxu0
      %v3138 = vpop.f32.mrb[0].mxu0
      %v3139 = vadd.f32 0.0, %v3138
      %v3140 = vpop.f32.mrb[0].mxu0
      %3141 = vmatprep.mubr.bf16.mxu0 0
      %3142 = vmatmul.mubr.bf16.gmra.mrb[0].mxu0 %v3004
      %v3143 = vpop.f32.mrb[0].mxu0
      %v3144 = vadd.f32 0.0, %v3143
      %v3145 = vpop.f32.mrb[0].mxu0
      %v3146 = vpop.f32.mrb[0].mxu0
      %v3147 = vadd.f32 0.0, %v3146
      %v3148 = vpop.f32.mrb[0].mxu0
      %3149 = vmatprep.mubr.bf16.mxu0 0
      %3150 = vmatmul.mubr.bf16.gmra.mrb[0].mxu0 %v3007
      %v3151 = vpop.f32.mrb[0].mxu0
      %v3152 = vadd.f32 0.0, %v3151
      %v3153 = vpop.f32.mrb[0].mxu0
      %v3154 = vpop.f32.mrb[0].mxu0
      %v3155 = vadd.f32 0.0, %v3154
      %v3156 = vpop.f32.mrb[0].mxu0
      %3157 = vmatprep.mubr.bf16.mxu0 0
      %3158 = vmatmul.mubr.bf16.gmra.mrb[0].mxu0 %v3010
      %v3159 = vpop.f32.mrb[0].mxu0
      %v3160 = vadd.f32 0.0, %v3159
      %v3161 = vpop.f32.mrb[0].mxu0
      %v3162 = vpop.f32.mrb[0].mxu0
      %v3163 = vadd.f32 0.0, %v3162
      %v3164 = vpop.f32.mrb[0].mxu0
      %3165 = vmatprep.mubr.bf16.mxu0 0
      %3166 = vmatmul.mubr.bf16.gmra.mrb[0].mxu0 %v3013
      %v3167 = vpop.f32.mrb[0].mxu0
      %v3168 = vadd.f32 0.0, %v3167
      %v3169 = vpop.f32.mrb[0].mxu0
      %v3170 = vpop.f32.mrb[0].mxu0
      %v3171 = vadd.f32 0.0, %v3170
      %v3172 = vpop.f32.mrb[0].mxu0
      %3173 = vmatprep.mubr.bf16.mxu0 0
      %3174 = vmatmul.mubr.bf16.gmra.mrb[0].mxu0 %v3016
      %v3175 = vpop.f32.mrb[0].mxu0
      %v3176 = vadd.f32 0.0, %v3175
      %v3177 = vpop.f32.mrb[0].mxu0
      %v3178 = vpop.f32.mrb[0].mxu0
      %v3179 = vadd.f32 0.0, %v3178
      %v3180 = vpop.f32.mrb[0].mxu0
      %3181 = vdwg.mxu0
      %v3182 = vadd.f32 %v2504, %v3056
      %v3183 = vadd.f32 %v2505, %v3059
      %v3184 = vadd.f32 %v2506, %v3064
      %v3185 = vadd.f32 %v2507, %v3067
      %v3186 = vadd.f32 %v2508, %v3072
      %v3187 = vadd.f32 %v2509, %v3075
      %v3188 = vadd.f32 %v2510, %v3080
      %v3189 = vadd.f32 %v2511, %v3083
      %v3190 = vadd.f32 %v2512, %v3088
      %v3191 = vadd.f32 %v2513, %v3091
      %v3192 = vadd.f32 %v2514, %v3096
      %v3193 = vadd.f32 %v2515, %v3099
      %v3194 = vadd.f32 %v2516, %v3104
      %v3195 = vadd.f32 %v2517, %v3107
      %v3196 = vadd.f32 %v2518, %v3112
      %v3197 = vadd.f32 %v2519, %v3115
      %v3198 = vadd.f32 %v2520, %v3120
      %v3199 = vadd.f32 %v2521, %v3123
      %v3200 = vadd.f32 %v2522, %v3128
      %v3201 = vadd.f32 %v2523, %v3131
      %v3202 = vadd.f32 %v2524, %v3136
      %v3203 = vadd.f32 %v2525, %v3139
      %v3204 = vadd.f32 %v2526, %v3144
      %v3205 = vadd.f32 %v2527, %v3147
      %v3206 = vadd.f32 %v2528, %v3152
      %v3207 = vadd.f32 %v2529, %v3155
      %v3208 = vadd.f32 %v2530, %v3160
      %v3209 = vadd.f32 %v2531, %v3163
      %v3210 = vadd.f32 %v2532, %v3168
      %v3211 = vadd.f32 %v2533, %v3171
      %v3212 = vadd.f32 %v2534, %v3176
      %v3213 = vadd.f32 %v2535, %v3179
      %3214 = vst [vmem:[#allocation2] sm:$0xff] %v3182
      %3215 = vst [vmem:[#allocation2 + $0x8] sm:$0xff] %v3183
      %3216 = vst [vmem:[#allocation2 + $0x10] sm:$0xff] %v3184
      %3217 = vst [vmem:[#allocation2 + $0x18] sm:$0xff] %v3185
      %3218 = vst [vmem:[#allocation2 + $0x20] sm:$0xff] %v3186
      %3219 = vst [vmem:[#allocation2 + $0x28] sm:$0xff] %v3187
      %3220 = vst [vmem:[#allocation2 + $0x30] sm:$0xff] %v3188
      %3221 = vst [vmem:[#allocation2 + $0x38] sm:$0xff] %v3189
      %3222 = vst [vmem:[#allocation2 + $0x40] sm:$0xff] %v3190
      %3223 = vst [vmem:[#allocation2 + $0x48] sm:$0xff] %v3191
      %3224 = vst [vmem:[#allocation2 + $0x50] sm:$0xff] %v3192
      %3225 = vst [vmem:[#allocation2 + $0x58] sm:$0xff] %v3193
      %3226 = vst [vmem:[#allocation2 + $0x60] sm:$0xff] %v3194
      %3227 = vst [vmem:[#allocation2 + $0x68] sm:$0xff] %v3195
      %3228 = vst [vmem:[#allocation2 + $0x70] sm:$0xff] %v3196
      %3229 = vst [vmem:[#allocation2 + $0x78] sm:$0xff] %v3197
      %3230 = vst [vmem:[#allocation2 + $0x80] sm:$0xff] %v3198
      %3231 = vst [vmem:[#allocation2 + $0x88] sm:$0xff] %v3199
      %3232 = vst [vmem:[#allocation2 + $0x90] sm:$0xff] %v3200
      %3233 = vst [vmem:[#allocation2 + $0x98] sm:$0xff] %v3201
      %3234 = vst [vmem:[#allocation2 + $0xa0] sm:$0xff] %v3202
      %3235 = vst [vmem:[#allocation2 + $0xa8] sm:$0xff] %v3203
      %3236 = vst [vmem:[#allocation2 + $0xb0] sm:$0xff] %v3204
      %3237 = vst [vmem:[#allocation2 + $0xb8] sm:$0xff] %v3205
      %3238 = vst [vmem:[#allocation2 + $0xc0] sm:$0xff] %v3206
      %3239 = vst [vmem:[#allocation2 + $0xc8] sm:$0xff] %v3207
      %3240 = vst [vmem:[#allocation2 + $0xd0] sm:$0xff] %v3208
      %3241 = vst [vmem:[#allocation2 + $0xd8] sm:$0xff] %v3209
      %3242 = vst [vmem:[#allocation2 + $0xe0] sm:$0xff] %v3210
      %3243 = vst [vmem:[#allocation2 + $0xe8] sm:$0xff] %v3211
      %3244 = vst [vmem:[#allocation2 + $0xf0] sm:$0xff] %v3212
      %3245 = vst [vmem:[#allocation2 + $0xf8] sm:$0xff] %v3213
      %v3246 = vld [vmem:[%s2033] sm:$0xe]
      %v3247 = vld [vmem:[%s2033 + $0x4] sm:$0xf]
      %v3248 = vld [vmem:[%s2033 + $0x8] sm:$0x1]
      %v3249 = vld [vmem:[%s2033 + $0xc] sm:$0xe]
      %v3250 = vld [vmem:[%s2033 + $0x10] sm:$0xf]
      %v3251 = vld [vmem:[%s2033 + $0x14] sm:$0x1]
      %v3252 = vld [vmem:[%s2033 + $0x18] sm:$0xe]
      %v3253 = vld [vmem:[%s2033 + $0x1c] sm:$0xf]
      %v3254 = vld [vmem:[%s2033 + $0x20] sm:$0x1]
      %v3255 = vld [vmem:[%s2033 + $0x24] sm:$0xe]
      %v3256 = vld [vmem:[%s2033 + $0x28] sm:$0xf]
      %v3257 = vld [vmem:[%s2033 + $0x2c] sm:$0x1]
      %v3258 = vld [vmem:[%s2033 + $0x30] sm:$0xe]
      %v3259 = vld [vmem:[%s2033 + $0x34] sm:$0xf]
      %v3260 = vld [vmem:[%s2033 + $0x38] sm:$0x1]
      %v3261 = vld [vmem:[%s2033 + $0x3c] sm:$0xe]
      %v3262 = vld [vmem:[%s2033 + $0x40] sm:$0xf]
      %v3263 = vld [vmem:[%s2033 + $0x44] sm:$0x1]
      %v3264 = vld [vmem:[%s2033 + $0x48] sm:$0xe]
      %v3265 = vld [vmem:[%s2033 + $0x4c] sm:$0xf]
      %v3266 = vld [vmem:[%s2033 + $0x50] sm:$0x1]
      %v3267 = vld [vmem:[%s2033 + $0x54] sm:$0xe]
      %v3268 = vld [vmem:[%s2033 + $0x58] sm:$0xf]
      %v3269 = vld [vmem:[%s2033 + $0x5c] sm:$0x1]
      %v3270 = vld [vmem:[%s2033 + $0x60] sm:$0xe]
      %v3271 = vld [vmem:[%s2033 + $0x64] sm:$0xf]
      %v3272 = vld [vmem:[%s2033 + $0x68] sm:$0x1]
      %v3273 = vld [vmem:[%s2033 + $0x6c] sm:$0xe]
      %v3274 = vld [vmem:[%s2033 + $0x70] sm:$0xf]
      %v3275 = vld [vmem:[%s2033 + $0x74] sm:$0x1]
      %v3276 = vld [vmem:[%s2033 + $0x78] sm:$0xe]
      %v3277 = vld [vmem:[%s2033 + $0x7c] sm:$0xf]
      %v3278 = vld [vmem:[%s2033 + $0x80] sm:$0x1]
      %v3279 = vld [vmem:[%s2033 + $0x84] sm:$0xe]
      %v3280 = vld [vmem:[%s2033 + $0x88] sm:$0xf]
      %v3281 = vld [vmem:[%s2033 + $0x8c] sm:$0x1]
      %v3282 = vld [vmem:[%s2033 + $0x90] sm:$0xe]
      %v3283 = vld [vmem:[%s2033 + $0x94] sm:$0xf]
      %v3284 = vld [vmem:[%s2033 + $0x98] sm:$0x1]
      %v3285 = vld [vmem:[%s2033 + $0x9c] sm:$0xe]
      %v3286 = vld [vmem:[%s2033 + $0xa0] sm:$0xf]
      %v3287 = vld [vmem:[%s2033 + $0xa4] sm:$0x1]
      %v3288 = vld [vmem:[%s2033 + $0xa8] sm:$0xe]
      %v3289 = vld [vmem:[%s2033 + $0xac] sm:$0xf]
      %v3290 = vld [vmem:[%s2033 + $0xb0] sm:$0x1]
      %v3291 = vld [vmem:[%s2033 + $0xb4] sm:$0xe]
      %v3292 = vld [vmem:[%s2033 + $0xb8] sm:$0xf]
      %v3293 = vld [vmem:[%s2033 + $0xbc] sm:$0x1]
      %v3294 = vld [vmem:[#allocation2] sm:$0xff]
      %v3295 = vld [vmem:[#allocation2 + $0x8] sm:$0xff]
      %v3296 = vld [vmem:[#allocation2 + $0x10] sm:$0xff]
      %v3297 = vld [vmem:[#allocation2 + $0x18] sm:$0xff]
      %v3298 = vld [vmem:[#allocation2 + $0x20] sm:$0xff]
      %v3299 = vld [vmem:[#allocation2 + $0x28] sm:$0xff]
      %v3300 = vld [vmem:[#allocation2 + $0x30] sm:$0xff]
      %v3301 = vld [vmem:[#allocation2 + $0x38] sm:$0xff]
      %v3302 = vld [vmem:[#allocation2 + $0x40] sm:$0xff]
      %v3303 = vld [vmem:[#allocation2 + $0x48] sm:$0xff]
      %v3304 = vld [vmem:[#allocation2 + $0x50] sm:$0xff]
      %v3305 = vld [vmem:[#allocation2 + $0x58] sm:$0xff]
      %v3306 = vld [vmem:[#allocation2 + $0x60] sm:$0xff]
      %v3307 = vld [vmem:[#allocation2 + $0x68] sm:$0xff]
      %v3308 = vld [vmem:[#allocation2 + $0x70] sm:$0xff]
      %v3309 = vld [vmem:[#allocation2 + $0x78] sm:$0xff]
      %v3310 = vld [vmem:[#allocation2 + $0x80] sm:$0xff]
      %v3311 = vld [vmem:[#allocation2 + $0x88] sm:$0xff]
      %v3312 = vld [vmem:[#allocation2 + $0x90] sm:$0xff]
      %v3313 = vld [vmem:[#allocation2 + $0x98] sm:$0xff]
      %v3314 = vld [vmem:[#allocation2 + $0xa0] sm:$0xff]
      %v3315 = vld [vmem:[#allocation2 + $0xa8] sm:$0xff]
      %v3316 = vld [vmem:[#allocation2 + $0xb0] sm:$0xff]
      %v3317 = vld [vmem:[#allocation2 + $0xb8] sm:$0xff]
      %v3318 = vld [vmem:[#allocation2 + $0xc0] sm:$0xff]
      %v3319 = vld [vmem:[#allocation2 + $0xc8] sm:$0xff]
      %v3320 = vld [vmem:[#allocation2 + $0xd0] sm:$0xff]
      %v3321 = vld [vmem:[#allocation2 + $0xd8] sm:$0xff]
      %v3322 = vld [vmem:[#allocation2 + $0xe0] sm:$0xff]
      %v3323 = vld [vmem:[#allocation2 + $0xe8] sm:$0xff]
      %v3324 = vld [vmem:[#allocation2 + $0xf0] sm:$0xff]
      %v3325 = vld [vmem:[#allocation2 + $0xf8] sm:$0xff]
      %v3374 = vrot.slane %v3246, 5
      %v3375 = vrot.slane %v3374, 4
      %v3376 = vrot.slane %v3247, 5
      %v3377 = vsel %vm1594, %v3375, %v3376
      %v3378 = vrot.slane %v3376, 4
      %v3379 = vrot.slane %v3248, 5
      %v3380 = vsel %vm1594, %v3378, %v3379
      %v3381 = vrot.slane %v3249, 5
      %v3382 = vrot.slane %v3381, 4
      %v3383 = vrot.slane %v3250, 5
      %v3384 = vsel %vm1594, %v3382, %v3383
      %v3385 = vrot.slane %v3383, 4
      %v3386 = vrot.slane %v3251, 5
      %v3387 = vsel %vm1594, %v3385, %v3386
      %v3388 = vrot.slane %v3252, 5
      %v3389 = vrot.slane %v3388, 4
      %v3390 = vrot.slane %v3253, 5
      %v3391 = vsel %vm1594, %v3389, %v3390
      %v3392 = vrot.slane %v3390, 4
      %v3393 = vrot.slane %v3254, 5
      %v3394 = vsel %vm1594, %v3392, %v3393
      %v3395 = vrot.slane %v3255, 5
      %v3396 = vrot.slane %v3395, 4
      %v3397 = vrot.slane %v3256, 5
      %v3398 = vsel %vm1594, %v3396, %v3397
      %v3399 = vrot.slane %v3397, 4
      %v3400 = vrot.slane %v3257, 5
      %v3401 = vsel %vm1594, %v3399, %v3400
      %v3402 = vrot.slane %v3258, 5
      %v3403 = vrot.slane %v3402, 4
      %v3404 = vrot.slane %v3259, 5
      %v3405 = vsel %vm1594, %v3403, %v3404
      %v3406 = vrot.slane %v3404, 4
      %v3407 = vrot.slane %v3260, 5
      %v3408 = vsel %vm1594, %v3406, %v3407
      %v3409 = vrot.slane %v3261, 5
      %v3410 = vrot.slane %v3409, 4
      %v3411 = vrot.slane %v3262, 5
      %v3412 = vsel %vm1594, %v3410, %v3411
      %v3413 = vrot.slane %v3411, 4
      %v3414 = vrot.slane %v3263, 5
      %v3415 = vsel %vm1594, %v3413, %v3414
      %v3416 = vrot.slane %v3264, 5
      %v3417 = vrot.slane %v3416, 4
      %v3418 = vrot.slane %v3265, 5
      %v3419 = vsel %vm1594, %v3417, %v3418
      %v3420 = vrot.slane %v3418, 4
      %v3421 = vrot.slane %v3266, 5
      %v3422 = vsel %vm1594, %v3420, %v3421
      %v3423 = vrot.slane %v3267, 5
      %v3424 = vrot.slane %v3423, 4
      %v3425 = vrot.slane %v3268, 5
      %v3426 = vsel %vm1594, %v3424, %v3425
      %v3427 = vrot.slane %v3425, 4
      %v3428 = vrot.slane %v3269, 5
      %v3429 = vsel %vm1594, %v3427, %v3428
      %v3430 = vrot.slane %v3270, 5
      %v3431 = vrot.slane %v3430, 4
      %v3432 = vrot.slane %v3271, 5
      %v3433 = vsel %vm1594, %v3431, %v3432
      %v3434 = vrot.slane %v3432, 4
      %v3435 = vrot.slane %v3272, 5
      %v3436 = vsel %vm1594, %v3434, %v3435
      %v3437 = vrot.slane %v3273, 5
      %v3438 = vrot.slane %v3437, 4
      %v3439 = vrot.slane %v3274, 5
      %v3440 = vsel %vm1594, %v3438, %v3439
      %v3441 = vrot.slane %v3439, 4
      %v3442 = vrot.slane %v3275, 5
      %v3443 = vsel %vm1594, %v3441, %v3442
      %v3444 = vrot.slane %v3276, 5
      %v3445 = vrot.slane %v3444, 4
      %v3446 = vrot.slane %v3277, 5
      %v3447 = vsel %vm1594, %v3445, %v3446
      %v3448 = vrot.slane %v3446, 4
      %v3449 = vrot.slane %v3278, 5
      %v3450 = vsel %vm1594, %v3448, %v3449
      %v3451 = vrot.slane %v3279, 5
      %v3452 = vrot.slane %v3451, 4
      %v3453 = vrot.slane %v3280, 5
      %v3454 = vsel %vm1594, %v3452, %v3453
      %v3455 = vrot.slane %v3453, 4
      %v3456 = vrot.slane %v3281, 5
      %v3457 = vsel %vm1594, %v3455, %v3456
      %v3458 = vrot.slane %v3282, 5
      %v3459 = vrot.slane %v3458, 4
      %v3460 = vrot.slane %v3283, 5
      %v3461 = vsel %vm1594, %v3459, %v3460
      %v3462 = vrot.slane %v3460, 4
      %v3463 = vrot.slane %v3284, 5
      %v3464 = vsel %vm1594, %v3462, %v3463
      %v3465 = vrot.slane %v3285, 5
      %v3466 = vrot.slane %v3465, 4
      %v3467 = vrot.slane %v3286, 5
      %v3468 = vsel %vm1594, %v3466, %v3467
      %v3469 = vrot.slane %v3467, 4
      %v3470 = vrot.slane %v3287, 5
      %v3471 = vsel %vm1594, %v3469, %v3470
      %v3472 = vrot.slane %v3288, 5
      %v3473 = vrot.slane %v3472, 4
      %v3474 = vrot.slane %v3289, 5
      %v3475 = vsel %vm1594, %v3473, %v3474
      %v3476 = vrot.slane %v3474, 4
      %v3477 = vrot.slane %v3290, 5
      %v3478 = vsel %vm1594, %v3476, %v3477
      %v3479 = vrot.slane %v3291, 5
      %v3480 = vrot.slane %v3479, 4
      %v3481 = vrot.slane %v3292, 5
      %v3482 = vsel %vm1594, %v3480, %v3481
      %v3483 = vrot.slane %v3481, 4
      %v3484 = vrot.slane %v3293, 5
      %v3485 = vsel %vm1594, %v3483, %v3484
      %s3486 = scalar_lea.vmem %s1, 10
      %v3487 = vld [vmem:[%s3486] sm:$0x3]
      %v3488 = vunpack.c.l.b16 %v3377
      %v3489 = vunpack.c.l.b16 %v3380
      %v3490 = vunpack.c.l.b16 %v3384
      %v3491 = vunpack.c.l.b16 %v3387
      %v3492 = vunpack.c.l.b16 %v3391
      %v3493 = vunpack.c.l.b16 %v3394
      %v3494 = vunpack.c.l.b16 %v3398
      %v3495 = vunpack.c.l.b16 %v3401
      %v3496 = vunpack.c.l.b16 %v3405
      %v3497 = vunpack.c.l.b16 %v3408
      %v3498 = vunpack.c.l.b16 %v3412
      %v3499 = vunpack.c.l.b16 %v3415
      %v3500 = vunpack.c.l.b16 %v3419
      %v3501 = vunpack.c.l.b16 %v3422
      %v3502 = vunpack.c.l.b16 %v3426
      %v3503 = vunpack.c.l.b16 %v3429
      %v3504 = vunpack.c.l.b16 %v3433
      %v3505 = vunpack.c.l.b16 %v3436
      %v3506 = vunpack.c.l.b16 %v3440
      %v3507 = vunpack.c.l.b16 %v3443
      %v3508 = vunpack.c.l.b16 %v3447
      %v3509 = vunpack.c.l.b16 %v3450
      %v3510 = vunpack.c.l.b16 %v3454
      %v3511 = vunpack.c.l.b16 %v3457
      %v3512 = vunpack.c.l.b16 %v3461
      %v3513 = vunpack.c.l.b16 %v3464
      %v3514 = vunpack.c.l.b16 %v3468
      %v3515 = vunpack.c.l.b16 %v3471
      %v3516 = vunpack.c.l.b16 %v3475
      %v3517 = vunpack.c.l.b16 %v3478
      %v3518 = vunpack.c.l.b16 %v3482
      %v3519 = vunpack.c.l.b16 %v3485
      %v3520 = vpack.c.b16 %v3489, %v3488
      %v3521 = vpack.c.b16 %v3491, %v3490
      %v3522 = vpack.c.b16 %v3493, %v3492
      %v3523 = vpack.c.b16 %v3495, %v3494
      %v3524 = vpack.c.b16 %v3497, %v3496
      %v3525 = vpack.c.b16 %v3499, %v3498
      %v3526 = vpack.c.b16 %v3501, %v3500
      %v3527 = vpack.c.b16 %v3503, %v3502
      %v3528 = vpack.c.b16 %v3505, %v3504
      %v3529 = vpack.c.b16 %v3507, %v3506
      %v3530 = vpack.c.b16 %v3509, %v3508
      %v3531 = vpack.c.b16 %v3511, %v3510
      %v3532 = vpack.c.b16 %v3513, %v3512
      %v3533 = vpack.c.b16 %v3515, %v3514
      %v3534 = vpack.c.b16 %v3517, %v3516
      %v3535 = vpack.c.b16 %v3519, %v3518
      %v3537 = vsel %vm393, %v3520, 0
      %v3540 = vsel %vm393, %v3521, 0
      %v3543 = vsel %vm393, %v3522, 0
      %v3546 = vsel %vm393, %v3523, 0
      %v3549 = vsel %vm393, %v3524, 0
      %v3552 = vsel %vm393, %v3525, 0
      %v3555 = vsel %vm393, %v3526, 0
      %v3558 = vsel %vm393, %v3527, 0
      %v3561 = vsel %vm393, %v3528, 0
      %v3564 = vsel %vm393, %v3529, 0
      %v3567 = vsel %vm393, %v3530, 0
      %v3570 = vsel %vm393, %v3531, 0
      %v3573 = vsel %vm393, %v3532, 0
      %v3576 = vsel %vm393, %v3533, 0
      %v3579 = vsel %vm393, %v3534, 0
      %v3582 = vsel %vm393, %v3535, 0
      %v3585 = vsel %vm442, %v3487, 0
      %3587 = vmatprep.subr.bf16.mxu0 0
      %3588 = vmatpush1.bf16.msra.mxu0 %v3585
      %3589 = vmatprep.subr.bf16.mxu0 0
      %3590 = vmatpush1.bf16.msra.mxu0 0
      %3591 = vmatprep.subr.bf16.mxu0 0
      %3592 = vmatpush1.bf16.msra.mxu0 0
      %3593 = vmatprep.subr.bf16.mxu0 0
      %3594 = vmatpush1.bf16.msra.mxu0 0
      %3595 = vmatprep.subr.bf16.mxu0 0
      %3596 = vmatpush1.bf16.msra.mxu0 0
      %3597 = vmatprep.subr.bf16.mxu0 0
      %3598 = vmatpush1.bf16.msra.mxu0 0
      %3599 = vmatprep.subr.bf16.mxu0 0
      %3600 = vmatpush1.bf16.msra.mxu0 0
      %3601 = vmatprep.subr.bf16.mxu0 0
      %3602 = vmatpush1.bf16.msra.mxu0 0
      %3603 = vmatprep.subr.bf16.mxu0 0
      %3604 = vmatpush1.bf16.msra.mxu0 0
      %3605 = vmatprep.subr.bf16.mxu0 0
      %3606 = vmatpush1.bf16.msra.mxu0 0
      %3607 = vmatprep.subr.bf16.mxu0 0
      %3608 = vmatpush1.bf16.msra.mxu0 0
      %3609 = vmatprep.subr.bf16.mxu0 0
      %3610 = vmatpush1.bf16.msra.mxu0 0
      %3611 = vmatprep.subr.bf16.mxu0 0
      %3612 = vmatpush1.bf16.msra.mxu0 0
      %3613 = vmatprep.subr.bf16.mxu0 0
      %3614 = vmatpush1.bf16.msra.mxu0 0
      %3615 = vmatprep.subr.bf16.mxu0 0
      %3616 = vmatpush1.bf16.msra.mxu0 0
      %3617 = vmatprep.subr.bf16.mxu0 0
      %3618 = vmatpush1.bf16.msra.mxu0 0
      %3619 = vmatprep.mubr.bf16.mxu0 0
      %3620 = vmatmul.mubr.bf16.gmra.mrb[0].mxu0 %v3537
      %v3621 = vpop.f32.mrb[0].mxu0
      %v3622 = vadd.f32 0.0, %v3621
      %v3623 = vpop.f32.mrb[0].mxu0
      %v3624 = vpop.f32.mrb[0].mxu0
      %v3625 = vadd.f32 0.0, %v3624
      %v3626 = vpop.f32.mrb[0].mxu0
      %3627 = vmatprep.mubr.bf16.mxu0 0
      %3628 = vmatmul.mubr.bf16.gmra.mrb[0].mxu0 %v3540
      %v3629 = vpop.f32.mrb[0].mxu0
      %v3630 = vadd.f32 0.0, %v3629
      %v3631 = vpop.f32.mrb[0].mxu0
      %v3632 = vpop.f32.mrb[0].mxu0
      %v3633 = vadd.f32 0.0, %v3632
      %v3634 = vpop.f32.mrb[0].mxu0
      %3635 = vmatprep.mubr.bf16.mxu0 0
      %3636 = vmatmul.mubr.bf16.gmra.mrb[0].mxu0 %v3543
      %v3637 = vpop.f32.mrb[0].mxu0
      %v3638 = vadd.f32 0.0, %v3637
      %v3639 = vpop.f32.mrb[0].mxu0
      %v3640 = vpop.f32.mrb[0].mxu0
      %v3641 = vadd.f32 0.0, %v3640
      %v3642 = vpop.f32.mrb[0].mxu0
      %3643 = vmatprep.mubr.bf16.mxu0 0
      %3644 = vmatmul.mubr.bf16.gmra.mrb[0].mxu0 %v3546
      %v3645 = vpop.f32.mrb[0].mxu0
      %v3646 = vadd.f32 0.0, %v3645
      %v3647 = vpop.f32.mrb[0].mxu0
      %v3648 = vpop.f32.mrb[0].mxu0
      %v3649 = vadd.f32 0.0, %v3648
      %v3650 = vpop.f32.mrb[0].mxu0
      %3651 = vmatprep.mubr.bf16.mxu0 0
      %3652 = vmatmul.mubr.bf16.gmra.mrb[0].mxu0 %v3549
      %v3653 = vpop.f32.mrb[0].mxu0
      %v3654 = vadd.f32 0.0, %v3653
      %v3655 = vpop.f32.mrb[0].mxu0
      %v3656 = vpop.f32.mrb[0].mxu0
      %v3657 = vadd.f32 0.0, %v3656
      %v3658 = vpop.f32.mrb[0].mxu0
      %3659 = vmatprep.mubr.bf16.mxu0 0
      %3660 = vmatmul.mubr.bf16.gmra.mrb[0].mxu0 %v3552
      %v3661 = vpop.f32.mrb[0].mxu0
      %v3662 = vadd.f32 0.0, %v3661
      %v3663 = vpop.f32.mrb[0].mxu0
      %v3664 = vpop.f32.mrb[0].mxu0
      %v3665 = vadd.f32 0.0, %v3664
      %v3666 = vpop.f32.mrb[0].mxu0
      %3667 = vmatprep.mubr.bf16.mxu0 0
      %3668 = vmatmul.mubr.bf16.gmra.mrb[0].mxu0 %v3555
      %v3669 = vpop.f32.mrb[0].mxu0
      %v3670 = vadd.f32 0.0, %v3669
      %v3671 = vpop.f32.mrb[0].mxu0
      %v3672 = vpop.f32.mrb[0].mxu0
      %v3673 = vadd.f32 0.0, %v3672
      %v3674 = vpop.f32.mrb[0].mxu0
      %3675 = vmatprep.mubr.bf16.mxu0 0
      %3676 = vmatmul.mubr.bf16.gmra.mrb[0].mxu0 %v3558
      %v3677 = vpop.f32.mrb[0].mxu0
      %v3678 = vadd.f32 0.0, %v3677
      %v3679 = vpop.f32.mrb[0].mxu0
      %v3680 = vpop.f32.mrb[0].mxu0
      %v3681 = vadd.f32 0.0, %v3680
      %v3682 = vpop.f32.mrb[0].mxu0
      %3683 = vmatprep.mubr.bf16.mxu0 0
      %3684 = vmatmul.mubr.bf16.gmra.mrb[0].mxu0 %v3561
      %v3685 = vpop.f32.mrb[0].mxu0
      %v3686 = vadd.f32 0.0, %v3685
      %v3687 = vpop.f32.mrb[0].mxu0
      %v3688 = vpop.f32.mrb[0].mxu0
      %v3689 = vadd.f32 0.0, %v3688
      %v3690 = vpop.f32.mrb[0].mxu0
      %3691 = vmatprep.mubr.bf16.mxu0 0
      %3692 = vmatmul.mubr.bf16.gmra.mrb[0].mxu0 %v3564
      %v3693 = vpop.f32.mrb[0].mxu0
      %v3694 = vadd.f32 0.0, %v3693
      %v3695 = vpop.f32.mrb[0].mxu0
      %v3696 = vpop.f32.mrb[0].mxu0
      %v3697 = vadd.f32 0.0, %v3696
      %v3698 = vpop.f32.mrb[0].mxu0
      %3699 = vmatprep.mubr.bf16.mxu0 0
      %3700 = vmatmul.mubr.bf16.gmra.mrb[0].mxu0 %v3567
      %v3701 = vpop.f32.mrb[0].mxu0
      %v3702 = vadd.f32 0.0, %v3701
      %v3703 = vpop.f32.mrb[0].mxu0
      %v3704 = vpop.f32.mrb[0].mxu0
      %v3705 = vadd.f32 0.0, %v3704
      %v3706 = vpop.f32.mrb[0].mxu0
      %3707 = vmatprep.mubr.bf16.mxu0 0
      %3708 = vmatmul.mubr.bf16.gmra.mrb[0].mxu0 %v3570
      %v3709 = vpop.f32.mrb[0].mxu0
      %v3710 = vadd.f32 0.0, %v3709
      %v3711 = vpop.f32.mrb[0].mxu0
      %v3712 = vpop.f32.mrb[0].mxu0
      %v3713 = vadd.f32 0.0, %v3712
      %v3714 = vpop.f32.mrb[0].mxu0
      %3715 = vmatprep.mubr.bf16.mxu0 0
      %3716 = vmatmul.mubr.bf16.gmra.mrb[0].mxu0 %v3573
      %v3717 = vpop.f32.mrb[0].mxu0
      %v3718 = vadd.f32 0.0, %v3717
      %v3719 = vpop.f32.mrb[0].mxu0
      %v3720 = vpop.f32.mrb[0].mxu0
      %v3721 = vadd.f32 0.0, %v3720
      %v3722 = vpop.f32.mrb[0].mxu0
      %3723 = vmatprep.mubr.bf16.mxu0 0
      %3724 = vmatmul.mubr.bf16.gmra.mrb[0].mxu0 %v3576
      %v3725 = vpop.f32.mrb[0].mxu0
      %v3726 = vadd.f32 0.0, %v3725
      %v3727 = vpop.f32.mrb[0].mxu0
      %v3728 = vpop.f32.mrb[0].mxu0
      %v3729 = vadd.f32 0.0, %v3728
      %v3730 = vpop.f32.mrb[0].mxu0
      %3731 = vmatprep.mubr.bf16.mxu0 0
      %3732 = vmatmul.mubr.bf16.gmra.mrb[0].mxu0 %v3579
      %v3733 = vpop.f32.mrb[0].mxu0
      %v3734 = vadd.f32 0.0, %v3733
      %v3735 = vpop.f32.mrb[0].mxu0
      %v3736 = vpop.f32.mrb[0].mxu0
      %v3737 = vadd.f32 0.0, %v3736
      %v3738 = vpop.f32.mrb[0].mxu0
      %3739 = vmatprep.mubr.bf16.mxu0 0
      %3740 = vmatmul.mubr.bf16.gmra.mrb[0].mxu0 %v3582
      %v3741 = vpop.f32.mrb[0].mxu0
      %v3742 = vadd.f32 0.0, %v3741
      %v3743 = vpop.f32.mrb[0].mxu0
      %v3744 = vpop.f32.mrb[0].mxu0
      %v3745 = vadd.f32 0.0, %v3744
      %v3746 = vpop.f32.mrb[0].mxu0
      %3747 = vdwg.mxu0
      %v3748 = vadd.f32 %v3294, %v3622
      %v3749 = vadd.f32 %v3295, %v3625
      %v3750 = vadd.f32 %v3296, %v3630
      %v3751 = vadd.f32 %v3297, %v3633
      %v3752 = vadd.f32 %v3298, %v3638
      %v3753 = vadd.f32 %v3299, %v3641
      %v3754 = vadd.f32 %v3300, %v3646
      %v3755 = vadd.f32 %v3301, %v3649
      %v3756 = vadd.f32 %v3302, %v3654
      %v3757 = vadd.f32 %v3303, %v3657
      %v3758 = vadd.f32 %v3304, %v3662
      %v3759 = vadd.f32 %v3305, %v3665
      %v3760 = vadd.f32 %v3306, %v3670
      %v3761 = vadd.f32 %v3307, %v3673
      %v3762 = vadd.f32 %v3308, %v3678
      %v3763 = vadd.f32 %v3309, %v3681
      %v3764 = vadd.f32 %v3310, %v3686
      %v3765 = vadd.f32 %v3311, %v3689
      %v3766 = vadd.f32 %v3312, %v3694
      %v3767 = vadd.f32 %v3313, %v3697
      %v3768 = vadd.f32 %v3314, %v3702
      %v3769 = vadd.f32 %v3315, %v3705
      %v3770 = vadd.f32 %v3316, %v3710
      %v3771 = vadd.f32 %v3317, %v3713
      %v3772 = vadd.f32 %v3318, %v3718
      %v3773 = vadd.f32 %v3319, %v3721
      %v3774 = vadd.f32 %v3320, %v3726
      %v3775 = vadd.f32 %v3321, %v3729
      %v3776 = vadd.f32 %v3322, %v3734
      %v3777 = vadd.f32 %v3323, %v3737
      %v3778 = vadd.f32 %v3324, %v3742
      %v3779 = vadd.f32 %v3325, %v3745
      %3780 = vst [vmem:[#allocation2] sm:$0xff] %v3748
      %3781 = vst [vmem:[#allocation2 + $0x8] sm:$0xff] %v3749
      %3782 = vst [vmem:[#allocation2 + $0x10] sm:$0xff] %v3750
      %3783 = vst [vmem:[#allocation2 + $0x18] sm:$0xff] %v3751
      %3784 = vst [vmem:[#allocation2 + $0x20] sm:$0xff] %v3752
      %3785 = vst [vmem:[#allocation2 + $0x28] sm:$0xff] %v3753
      %3786 = vst [vmem:[#allocation2 + $0x30] sm:$0xff] %v3754
      %3787 = vst [vmem:[#allocation2 + $0x38] sm:$0xff] %v3755
      %3788 = vst [vmem:[#allocation2 + $0x40] sm:$0xff] %v3756
      %3789 = vst [vmem:[#allocation2 + $0x48] sm:$0xff] %v3757
      %3790 = vst [vmem:[#allocation2 + $0x50] sm:$0xff] %v3758
      %3791 = vst [vmem:[#allocation2 + $0x58] sm:$0xff] %v3759
      %3792 = vst [vmem:[#allocation2 + $0x60] sm:$0xff] %v3760
      %3793 = vst [vmem:[#allocation2 + $0x68] sm:$0xff] %v3761
      %3794 = vst [vmem:[#allocation2 + $0x70] sm:$0xff] %v3762
      %3795 = vst [vmem:[#allocation2 + $0x78] sm:$0xff] %v3763
      %3796 = vst [vmem:[#allocation2 + $0x80] sm:$0xff] %v3764
      %3797 = vst [vmem:[#allocation2 + $0x88] sm:$0xff] %v3765
      %3798 = vst [vmem:[#allocation2 + $0x90] sm:$0xff] %v3766
      %3799 = vst [vmem:[#allocation2 + $0x98] sm:$0xff] %v3767
      %3800 = vst [vmem:[#allocation2 + $0xa0] sm:$0xff] %v3768
      %3801 = vst [vmem:[#allocation2 + $0xa8] sm:$0xff] %v3769
      %3802 = vst [vmem:[#allocation2 + $0xb0] sm:$0xff] %v3770
      %3803 = vst [vmem:[#allocation2 + $0xb8] sm:$0xff] %v3771
      %3804 = vst [vmem:[#allocation2 + $0xc0] sm:$0xff] %v3772
      %3805 = vst [vmem:[#allocation2 + $0xc8] sm:$0xff] %v3773
      %3806 = vst [vmem:[#allocation2 + $0xd0] sm:$0xff] %v3774
      %3807 = vst [vmem:[#allocation2 + $0xd8] sm:$0xff] %v3775
      %3808 = vst [vmem:[#allocation2 + $0xe0] sm:$0xff] %v3776
      %3809 = vst [vmem:[#allocation2 + $0xe8] sm:$0xff] %v3777
      %3810 = vst [vmem:[#allocation2 + $0xf0] sm:$0xff] %v3778
      %3811 = vst [vmem:[#allocation2 + $0xf8] sm:$0xff] %v3779
      %s3812 = scalar_lea.vmem %s203, 24
      %v3813 = vld [vmem:[%s3812] sm:$0xf]
      %v3814 = vld [vmem:[%s3812 + $0x4] sm:$0xf]
      %v3815 = vld [vmem:[%s3812 + $0xc] sm:$0xf]
      %v3816 = vld [vmem:[%s3812 + $0x10] sm:$0xf]
      %v3817 = vld [vmem:[%s3812 + $0x18] sm:$0xf]
      %v3818 = vld [vmem:[%s3812 + $0x1c] sm:$0xf]
      %v3819 = vld [vmem:[%s3812 + $0x24] sm:$0xf]
      %v3820 = vld [vmem:[%s3812 + $0x28] sm:$0xf]
      %v3821 = vld [vmem:[%s3812 + $0x30] sm:$0xf]
      %v3822 = vld [vmem:[%s3812 + $0x34] sm:$0xf]
      %v3823 = vld [vmem:[%s3812 + $0x3c] sm:$0xf]
      %v3824 = vld [vmem:[%s3812 + $0x40] sm:$0xf]
      %v3825 = vld [vmem:[%s3812 + $0x48] sm:$0xf]
      %v3826 = vld [vmem:[%s3812 + $0x4c] sm:$0xf]
      %v3827 = vld [vmem:[%s3812 + $0x54] sm:$0xf]
      %v3828 = vld [vmem:[%s3812 + $0x58] sm:$0xf]
      %v3829 = vld [vmem:[%s3812 + $0x60] sm:$0xf]
      %v3830 = vld [vmem:[%s3812 + $0x64] sm:$0xf]
      %v3831 = vld [vmem:[%s3812 + $0x6c] sm:$0xf]
      %v3832 = vld [vmem:[%s3812 + $0x70] sm:$0xf]
      %v3833 = vld [vmem:[%s3812 + $0x78] sm:$0xf]
      %v3834 = vld [vmem:[%s3812 + $0x7c] sm:$0xf]
      %v3835 = vld [vmem:[%s3812 + $0x84] sm:$0xf]
      %v3836 = vld [vmem:[%s3812 + $0x88] sm:$0xf]
      %v3837 = vld [vmem:[%s3812 + $0x90] sm:$0xf]
      %v3838 = vld [vmem:[%s3812 + $0x94] sm:$0xf]
      %v3839 = vld [vmem:[%s3812 + $0x9c] sm:$0xf]
      %v3840 = vld [vmem:[%s3812 + $0xa0] sm:$0xf]
      %v3841 = vld [vmem:[%s3812 + $0xa8] sm:$0xf]
      %v3842 = vld [vmem:[%s3812 + $0xac] sm:$0xf]
      %v3843 = vld [vmem:[%s3812 + $0xb4] sm:$0xf]
      %v3844 = vld [vmem:[%s3812 + $0xb8] sm:$0xf]
      %v3845 = vld [vmem:[#allocation2] sm:$0xff]
      %v3846 = vld [vmem:[#allocation2 + $0x8] sm:$0xff]
      %v3847 = vld [vmem:[#allocation2 + $0x10] sm:$0xff]
      %v3848 = vld [vmem:[#allocation2 + $0x18] sm:$0xff]
      %v3849 = vld [vmem:[#allocation2 + $0x20] sm:$0xff]
      %v3850 = vld [vmem:[#allocation2 + $0x28] sm:$0xff]
      %v3851 = vld [vmem:[#allocation2 + $0x30] sm:$0xff]
      %v3852 = vld [vmem:[#allocation2 + $0x38] sm:$0xff]
      %v3853 = vld [vmem:[#allocation2 + $0x40] sm:$0xff]
      %v3854 = vld [vmem:[#allocation2 + $0x48] sm:$0xff]
      %v3855 = vld [vmem:[#allocation2 + $0x50] sm:$0xff]
      %v3856 = vld [vmem:[#allocation2 + $0x58] sm:$0xff]
      %v3857 = vld [vmem:[#allocation2 + $0x60] sm:$0xff]
      %v3858 = vld [vmem:[#allocation2 + $0x68] sm:$0xff]
      %v3859 = vld [vmem:[#allocation2 + $0x70] sm:$0xff]
      %v3860 = vld [vmem:[#allocation2 + $0x78] sm:$0xff]
      %v3861 = vld [vmem:[#allocation2 + $0x80] sm:$0xff]
      %v3862 = vld [vmem:[#allocation2 + $0x88] sm:$0xff]
      %v3863 = vld [vmem:[#allocation2 + $0x90] sm:$0xff]
      %v3864 = vld [vmem:[#allocation2 + $0x98] sm:$0xff]
      %v3865 = vld [vmem:[#allocation2 + $0xa0] sm:$0xff]
      %v3866 = vld [vmem:[#allocation2 + $0xa8] sm:$0xff]
      %v3867 = vld [vmem:[#allocation2 + $0xb0] sm:$0xff]
      %v3868 = vld [vmem:[#allocation2 + $0xb8] sm:$0xff]
      %v3869 = vld [vmem:[#allocation2 + $0xc0] sm:$0xff]
      %v3870 = vld [vmem:[#allocation2 + $0xc8] sm:$0xff]
      %v3871 = vld [vmem:[#allocation2 + $0xd0] sm:$0xff]
      %v3872 = vld [vmem:[#allocation2 + $0xd8] sm:$0xff]
      %v3873 = vld [vmem:[#allocation2 + $0xe0] sm:$0xff]
      %v3874 = vld [vmem:[#allocation2 + $0xe8] sm:$0xff]
      %v3875 = vld [vmem:[#allocation2 + $0xf0] sm:$0xff]
      %v3876 = vld [vmem:[#allocation2 + $0xf8] sm:$0xff]
      %s3877 = scalar_lea.vmem %s1, 12
      %v3878 = vld [vmem:[%s3877] sm:$0x3]
      %v3911 = vunpack.c.l.b16 %v3813
      %v3912 = vunpack.c.l.b16 %v3814
      %v3913 = vunpack.c.l.b16 %v3815
      %v3914 = vunpack.c.l.b16 %v3816
      %v3915 = vunpack.c.l.b16 %v3817
      %v3916 = vunpack.c.l.b16 %v3818
      %v3917 = vunpack.c.l.b16 %v3819
      %v3918 = vunpack.c.l.b16 %v3820
      %v3919 = vunpack.c.l.b16 %v3821
      %v3920 = vunpack.c.l.b16 %v3822
      %v3921 = vunpack.c.l.b16 %v3823
      %v3922 = vunpack.c.l.b16 %v3824
      %v3923 = vunpack.c.l.b16 %v3825
      %v3924 = vunpack.c.l.b16 %v3826
      %v3925 = vunpack.c.l.b16 %v3827
      %v3926 = vunpack.c.l.b16 %v3828
      %v3927 = vunpack.c.l.b16 %v3829
      %v3928 = vunpack.c.l.b16 %v3830
      %v3929 = vunpack.c.l.b16 %v3831
      %v3930 = vunpack.c.l.b16 %v3832
      %v3931 = vunpack.c.l.b16 %v3833
      %v3932 = vunpack.c.l.b16 %v3834
      %v3933 = vunpack.c.l.b16 %v3835
      %v3934 = vunpack.c.l.b16 %v3836
      %v3935 = vunpack.c.l.b16 %v3837
      %v3936 = vunpack.c.l.b16 %v3838
      %v3937 = vunpack.c.l.b16 %v3839
      %v3938 = vunpack.c.l.b16 %v3840
      %v3939 = vunpack.c.l.b16 %v3841
      %v3940 = vunpack.c.l.b16 %v3842
      %v3941 = vunpack.c.l.b16 %v3843
      %v3942 = vunpack.c.l.b16 %v3844
      %v3943 = vpack.c.b16 %v3912, %v3911
      %v3944 = vpack.c.b16 %v3914, %v3913
      %v3945 = vpack.c.b16 %v3916, %v3915
      %v3946 = vpack.c.b16 %v3918, %v3917
      %v3947 = vpack.c.b16 %v3920, %v3919
      %v3948 = vpack.c.b16 %v3922, %v3921
      %v3949 = vpack.c.b16 %v3924, %v3923
      %v3950 = vpack.c.b16 %v3926, %v3925
      %v3951 = vpack.c.b16 %v3928, %v3927
      %v3952 = vpack.c.b16 %v3930, %v3929
      %v3953 = vpack.c.b16 %v3932, %v3931
      %v3954 = vpack.c.b16 %v3934, %v3933
      %v3955 = vpack.c.b16 %v3936, %v3935
      %v3956 = vpack.c.b16 %v3938, %v3937
      %v3957 = vpack.c.b16 %v3940, %v3939
      %v3958 = vpack.c.b16 %v3942, %v3941
      %v3960 = vsel %vm393, %v3943, 0
      %v3963 = vsel %vm393, %v3944, 0
      %v3966 = vsel %vm393, %v3945, 0
      %v3969 = vsel %vm393, %v3946, 0
      %v3972 = vsel %vm393, %v3947, 0
      %v3975 = vsel %vm393, %v3948, 0
      %v3978 = vsel %vm393, %v3949, 0
      %v3981 = vsel %vm393, %v3950, 0
      %v3984 = vsel %vm393, %v3951, 0
      %v3987 = vsel %vm393, %v3952, 0
      %v3990 = vsel %vm393, %v3953, 0
      %v3993 = vsel %vm393, %v3954, 0
      %v3996 = vsel %vm393, %v3955, 0
      %v3999 = vsel %vm393, %v3956, 0
      %v4002 = vsel %vm393, %v3957, 0
      %v4005 = vsel %vm393, %v3958, 0
      %v4008 = vsel %vm442, %v3878, 0
      %4010 = vmatprep.subr.bf16.mxu0 0
      %4011 = vmatpush1.bf16.msra.mxu0 %v4008
      %4012 = vmatprep.subr.bf16.mxu0 0
      %4013 = vmatpush1.bf16.msra.mxu0 0
      %4014 = vmatprep.subr.bf16.mxu0 0
      %4015 = vmatpush1.bf16.msra.mxu0 0
      %4016 = vmatprep.subr.bf16.mxu0 0
      %4017 = vmatpush1.bf16.msra.mxu0 0
      %4018 = vmatprep.subr.bf16.mxu0 0
      %4019 = vmatpush1.bf16.msra.mxu0 0
      %4020 = vmatprep.subr.bf16.mxu0 0
      %4021 = vmatpush1.bf16.msra.mxu0 0
      %4022 = vmatprep.subr.bf16.mxu0 0
      %4023 = vmatpush1.bf16.msra.mxu0 0
      %4024 = vmatprep.subr.bf16.mxu0 0
      %4025 = vmatpush1.bf16.msra.mxu0 0
      %4026 = vmatprep.subr.bf16.mxu0 0
      %4027 = vmatpush1.bf16.msra.mxu0 0
      %4028 = vmatprep.subr.bf16.mxu0 0
      %4029 = vmatpush1.bf16.msra.mxu0 0
      %4030 = vmatprep.subr.bf16.mxu0 0
      %4031 = vmatpush1.bf16.msra.mxu0 0
      %4032 = vmatprep.subr.bf16.mxu0 0
      %4033 = vmatpush1.bf16.msra.mxu0 0
      %4034 = vmatprep.subr.bf16.mxu0 0
      %4035 = vmatpush1.bf16.msra.mxu0 0
      %4036 = vmatprep.subr.bf16.mxu0 0
      %4037 = vmatpush1.bf16.msra.mxu0 0
      %4038 = vmatprep.subr.bf16.mxu0 0
      %4039 = vmatpush1.bf16.msra.mxu0 0
      %4040 = vmatprep.subr.bf16.mxu0 0
      %4041 = vmatpush1.bf16.msra.mxu0 0
      %4042 = vmatprep.mubr.bf16.mxu0 0
      %4043 = vmatmul.mubr.bf16.gmra.mrb[0].mxu0 %v3960
      %v4044 = vpop.f32.mrb[0].mxu0
      %v4045 = vadd.f32 0.0, %v4044
      %v4046 = vpop.f32.mrb[0].mxu0
      %v4047 = vpop.f32.mrb[0].mxu0
      %v4048 = vadd.f32 0.0, %v4047
      %v4049 = vpop.f32.mrb[0].mxu0
      %4050 = vmatprep.mubr.bf16.mxu0 0
      %4051 = vmatmul.mubr.bf16.gmra.mrb[0].mxu0 %v3963
      %v4052 = vpop.f32.mrb[0].mxu0
      %v4053 = vadd.f32 0.0, %v4052
      %v4054 = vpop.f32.mrb[0].mxu0
      %v4055 = vpop.f32.mrb[0].mxu0
      %v4056 = vadd.f32 0.0, %v4055
      %v4057 = vpop.f32.mrb[0].mxu0
      %4058 = vmatprep.mubr.bf16.mxu0 0
      %4059 = vmatmul.mubr.bf16.gmra.mrb[0].mxu0 %v3966
      %v4060 = vpop.f32.mrb[0].mxu0
      %v4061 = vadd.f32 0.0, %v4060
      %v4062 = vpop.f32.mrb[0].mxu0
      %v4063 = vpop.f32.mrb[0].mxu0
      %v4064 = vadd.f32 0.0, %v4063
      %v4065 = vpop.f32.mrb[0].mxu0
      %4066 = vmatprep.mubr.bf16.mxu0 0
      %4067 = vmatmul.mubr.bf16.gmra.mrb[0].mxu0 %v3969
      %v4068 = vpop.f32.mrb[0].mxu0
      %v4069 = vadd.f32 0.0, %v4068
      %v4070 = vpop.f32.mrb[0].mxu0
      %v4071 = vpop.f32.mrb[0].mxu0
      %v4072 = vadd.f32 0.0, %v4071
      %v4073 = vpop.f32.mrb[0].mxu0
      %4074 = vmatprep.mubr.bf16.mxu0 0
      %4075 = vmatmul.mubr.bf16.gmra.mrb[0].mxu0 %v3972
      %v4076 = vpop.f32.mrb[0].mxu0
      %v4077 = vadd.f32 0.0, %v4076
      %v4078 = vpop.f32.mrb[0].mxu0
      %v4079 = vpop.f32.mrb[0].mxu0
      %v4080 = vadd.f32 0.0, %v4079
      %v4081 = vpop.f32.mrb[0].mxu0
      %4082 = vmatprep.mubr.bf16.mxu0 0
      %4083 = vmatmul.mubr.bf16.gmra.mrb[0].mxu0 %v3975
      %v4084 = vpop.f32.mrb[0].mxu0
      %v4085 = vadd.f32 0.0, %v4084
      %v4086 = vpop.f32.mrb[0].mxu0
      %v4087 = vpop.f32.mrb[0].mxu0
      %v4088 = vadd.f32 0.0, %v4087
      %v4089 = vpop.f32.mrb[0].mxu0
      %4090 = vmatprep.mubr.bf16.mxu0 0
      %4091 = vmatmul.mubr.bf16.gmra.mrb[0].mxu0 %v3978
      %v4092 = vpop.f32.mrb[0].mxu0
      %v4093 = vadd.f32 0.0, %v4092
      %v4094 = vpop.f32.mrb[0].mxu0
      %v4095 = vpop.f32.mrb[0].mxu0
      %v4096 = vadd.f32 0.0, %v4095
      %v4097 = vpop.f32.mrb[0].mxu0
      %4098 = vmatprep.mubr.bf16.mxu0 0
      %4099 = vmatmul.mubr.bf16.gmra.mrb[0].mxu0 %v3981
      %v4100 = vpop.f32.mrb[0].mxu0
      %v4101 = vadd.f32 0.0, %v4100
      %v4102 = vpop.f32.mrb[0].mxu0
      %v4103 = vpop.f32.mrb[0].mxu0
      %v4104 = vadd.f32 0.0, %v4103
      %v4105 = vpop.f32.mrb[0].mxu0
      %4106 = vmatprep.mubr.bf16.mxu0 0
      %4107 = vmatmul.mubr.bf16.gmra.mrb[0].mxu0 %v3984
      %v4108 = vpop.f32.mrb[0].mxu0
      %v4109 = vadd.f32 0.0, %v4108
      %v4110 = vpop.f32.mrb[0].mxu0
      %v4111 = vpop.f32.mrb[0].mxu0
      %v4112 = vadd.f32 0.0, %v4111
      %v4113 = vpop.f32.mrb[0].mxu0
      %4114 = vmatprep.mubr.bf16.mxu0 0
      %4115 = vmatmul.mubr.bf16.gmra.mrb[0].mxu0 %v3987
      %v4116 = vpop.f32.mrb[0].mxu0
      %v4117 = vadd.f32 0.0, %v4116
      %v4118 = vpop.f32.mrb[0].mxu0
      %v4119 = vpop.f32.mrb[0].mxu0
      %v4120 = vadd.f32 0.0, %v4119
      %v4121 = vpop.f32.mrb[0].mxu0
      %4122 = vmatprep.mubr.bf16.mxu0 0
      %4123 = vmatmul.mubr.bf16.gmra.mrb[0].mxu0 %v3990
      %v4124 = vpop.f32.mrb[0].mxu0
      %v4125 = vadd.f32 0.0, %v4124
      %v4126 = vpop.f32.mrb[0].mxu0
      %v4127 = vpop.f32.mrb[0].mxu0
      %v4128 = vadd.f32 0.0, %v4127
      %v4129 = vpop.f32.mrb[0].mxu0
      %4130 = vmatprep.mubr.bf16.mxu0 0
      %4131 = vmatmul.mubr.bf16.gmra.mrb[0].mxu0 %v3993
      %v4132 = vpop.f32.mrb[0].mxu0
      %v4133 = vadd.f32 0.0, %v4132
      %v4134 = vpop.f32.mrb[0].mxu0
      %v4135 = vpop.f32.mrb[0].mxu0
      %v4136 = vadd.f32 0.0, %v4135
      %v4137 = vpop.f32.mrb[0].mxu0
      %4138 = vmatprep.mubr.bf16.mxu0 0
      %4139 = vmatmul.mubr.bf16.gmra.mrb[0].mxu0 %v3996
      %v4140 = vpop.f32.mrb[0].mxu0
      %v4141 = vadd.f32 0.0, %v4140
      %v4142 = vpop.f32.mrb[0].mxu0
      %v4143 = vpop.f32.mrb[0].mxu0
      %v4144 = vadd.f32 0.0, %v4143
      %v4145 = vpop.f32.mrb[0].mxu0
      %4146 = vmatprep.mubr.bf16.mxu0 0
      %4147 = vmatmul.mubr.bf16.gmra.mrb[0].mxu0 %v3999
      %v4148 = vpop.f32.mrb[0].mxu0
      %v4149 = vadd.f32 0.0, %v4148
      %v4150 = vpop.f32.mrb[0].mxu0
      %v4151 = vpop.f32.mrb[0].mxu0
      %v4152 = vadd.f32 0.0, %v4151
      %v4153 = vpop.f32.mrb[0].mxu0
      %4154 = vmatprep.mubr.bf16.mxu0 0
      %4155 = vmatmul.mubr.bf16.gmra.mrb[0].mxu0 %v4002
      %v4156 = vpop.f32.mrb[0].mxu0
      %v4157 = vadd.f32 0.0, %v4156
      %v4158 = vpop.f32.mrb[0].mxu0
      %v4159 = vpop.f32.mrb[0].mxu0
      %v4160 = vadd.f32 0.0, %v4159
      %v4161 = vpop.f32.mrb[0].mxu0
      %4162 = vmatprep.mubr.bf16.mxu0 0
      %4163 = vmatmul.mubr.bf16.gmra.mrb[0].mxu0 %v4005
      %v4164 = vpop.f32.mrb[0].mxu0
      %v4165 = vadd.f32 0.0, %v4164
      %v4166 = vpop.f32.mrb[0].mxu0
      %v4167 = vpop.f32.mrb[0].mxu0
      %v4168 = vadd.f32 0.0, %v4167
      %v4169 = vpop.f32.mrb[0].mxu0
      %4170 = vdwg.mxu0
      %v4171 = vadd.f32 %v3845, %v4045
      %v4172 = vadd.f32 %v3846, %v4048
      %v4173 = vadd.f32 %v3847, %v4053
      %v4174 = vadd.f32 %v3848, %v4056
      %v4175 = vadd.f32 %v3849, %v4061
      %v4176 = vadd.f32 %v3850, %v4064
      %v4177 = vadd.f32 %v3851, %v4069
      %v4178 = vadd.f32 %v3852, %v4072
      %v4179 = vadd.f32 %v3853, %v4077
      %v4180 = vadd.f32 %v3854, %v4080
      %v4181 = vadd.f32 %v3855, %v4085
      %v4182 = vadd.f32 %v3856, %v4088
      %v4183 = vadd.f32 %v3857, %v4093
      %v4184 = vadd.f32 %v3858, %v4096
      %v4185 = vadd.f32 %v3859, %v4101
      %v4186 = vadd.f32 %v3860, %v4104
      %v4187 = vadd.f32 %v3861, %v4109
      %v4188 = vadd.f32 %v3862, %v4112
      %v4189 = vadd.f32 %v3863, %v4117
      %v4190 = vadd.f32 %v3864, %v4120
      %v4191 = vadd.f32 %v3865, %v4125
      %v4192 = vadd.f32 %v3866, %v4128
      %v4193 = vadd.f32 %v3867, %v4133
      %v4194 = vadd.f32 %v3868, %v4136
      %v4195 = vadd.f32 %v3869, %v4141
      %v4196 = vadd.f32 %v3870, %v4144
      %v4197 = vadd.f32 %v3871, %v4149
      %v4198 = vadd.f32 %v3872, %v4152
      %v4199 = vadd.f32 %v3873, %v4157
      %v4200 = vadd.f32 %v3874, %v4160
      %v4201 = vadd.f32 %v3875, %v4165
      %v4202 = vadd.f32 %v3876, %v4168
      %4203 = vst [vmem:[#allocation2] sm:$0xff] %v4171
      %4204 = vst [vmem:[#allocation2 + $0x8] sm:$0xff] %v4172
      %4205 = vst [vmem:[#allocation2 + $0x10] sm:$0xff] %v4173
      %4206 = vst [vmem:[#allocation2 + $0x18] sm:$0xff] %v4174
      %4207 = vst [vmem:[#allocation2 + $0x20] sm:$0xff] %v4175
      %4208 = vst [vmem:[#allocation2 + $0x28] sm:$0xff] %v4176
      %4209 = vst [vmem:[#allocation2 + $0x30] sm:$0xff] %v4177
      %4210 = vst [vmem:[#allocation2 + $0x38] sm:$0xff] %v4178
      %4211 = vst [vmem:[#allocation2 + $0x40] sm:$0xff] %v4179
      %4212 = vst [vmem:[#allocation2 + $0x48] sm:$0xff] %v4180
      %4213 = vst [vmem:[#allocation2 + $0x50] sm:$0xff] %v4181
      %4214 = vst [vmem:[#allocation2 + $0x58] sm:$0xff] %v4182
      %4215 = vst [vmem:[#allocation2 + $0x60] sm:$0xff] %v4183
      %4216 = vst [vmem:[#allocation2 + $0x68] sm:$0xff] %v4184
      %4217 = vst [vmem:[#allocation2 + $0x70] sm:$0xff] %v4185
      %4218 = vst [vmem:[#allocation2 + $0x78] sm:$0xff] %v4186
      %4219 = vst [vmem:[#allocation2 + $0x80] sm:$0xff] %v4187
      %4220 = vst [vmem:[#allocation2 + $0x88] sm:$0xff] %v4188
      %4221 = vst [vmem:[#allocation2 + $0x90] sm:$0xff] %v4189
      %4222 = vst [vmem:[#allocation2 + $0x98] sm:$0xff] %v4190
      %4223 = vst [vmem:[#allocation2 + $0xa0] sm:$0xff] %v4191
      %4224 = vst [vmem:[#allocation2 + $0xa8] sm:$0xff] %v4192
      %4225 = vst [vmem:[#allocation2 + $0xb0] sm:$0xff] %v4193
      %4226 = vst [vmem:[#allocation2 + $0xb8] sm:$0xff] %v4194
      %4227 = vst [vmem:[#allocation2 + $0xc0] sm:$0xff] %v4195
      %4228 = vst [vmem:[#allocation2 + $0xc8] sm:$0xff] %v4196
      %4229 = vst [vmem:[#allocation2 + $0xd0] sm:$0xff] %v4197
      %4230 = vst [vmem:[#allocation2 + $0xd8] sm:$0xff] %v4198
      %4231 = vst [vmem:[#allocation2 + $0xe0] sm:$0xff] %v4199
      %4232 = vst [vmem:[#allocation2 + $0xe8] sm:$0xff] %v4200
      %4233 = vst [vmem:[#allocation2 + $0xf0] sm:$0xff] %v4201
      %4234 = vst [vmem:[#allocation2 + $0xf8] sm:$0xff] %v4202
      %v4235 = vld [vmem:[%s3812] sm:$0xf]
      %v4236 = vld [vmem:[%s3812 + $0x4] sm:$0xf]
      %v4237 = vld [vmem:[%s3812 + $0x8] sm:$0x1]
      %v4238 = vld [vmem:[%s3812 + $0xc] sm:$0xf]
      %v4239 = vld [vmem:[%s3812 + $0x10] sm:$0xf]
      %v4240 = vld [vmem:[%s3812 + $0x14] sm:$0x1]
      %v4241 = vld [vmem:[%s3812 + $0x18] sm:$0xf]
      %v4242 = vld [vmem:[%s3812 + $0x1c] sm:$0xf]
      %v4243 = vld [vmem:[%s3812 + $0x20] sm:$0x1]
      %v4244 = vld [vmem:[%s3812 + $0x24] sm:$0xf]
      %v4245 = vld [vmem:[%s3812 + $0x28] sm:$0xf]
      %v4246 = vld [vmem:[%s3812 + $0x2c] sm:$0x1]
      %v4247 = vld [vmem:[%s3812 + $0x30] sm:$0xf]
      %v4248 = vld [vmem:[%s3812 + $0x34] sm:$0xf]
      %v4249 = vld [vmem:[%s3812 + $0x38] sm:$0x1]
      %v4250 = vld [vmem:[%s3812 + $0x3c] sm:$0xf]
      %v4251 = vld [vmem:[%s3812 + $0x40] sm:$0xf]
      %v4252 = vld [vmem:[%s3812 + $0x44] sm:$0x1]
      %v4253 = vld [vmem:[%s3812 + $0x48] sm:$0xf]
      %v4254 = vld [vmem:[%s3812 + $0x4c] sm:$0xf]
      %v4255 = vld [vmem:[%s3812 + $0x50] sm:$0x1]
      %v4256 = vld [vmem:[%s3812 + $0x54] sm:$0xf]
      %v4257 = vld [vmem:[%s3812 + $0x58] sm:$0xf]
      %v4258 = vld [vmem:[%s3812 + $0x5c] sm:$0x1]
      %v4259 = vld [vmem:[%s3812 + $0x60] sm:$0xf]
      %v4260 = vld [vmem:[%s3812 + $0x64] sm:$0xf]
      %v4261 = vld [vmem:[%s3812 + $0x68] sm:$0x1]
      %v4262 = vld [vmem:[%s3812 + $0x6c] sm:$0xf]
      %v4263 = vld [vmem:[%s3812 + $0x70] sm:$0xf]
      %v4264 = vld [vmem:[%s3812 + $0x74] sm:$0x1]
      %v4265 = vld [vmem:[%s3812 + $0x78] sm:$0xf]
      %v4266 = vld [vmem:[%s3812 + $0x7c] sm:$0xf]
      %v4267 = vld [vmem:[%s3812 + $0x80] sm:$0x1]
      %v4268 = vld [vmem:[%s3812 + $0x84] sm:$0xf]
      %v4269 = vld [vmem:[%s3812 + $0x88] sm:$0xf]
      %v4270 = vld [vmem:[%s3812 + $0x8c] sm:$0x1]
      %v4271 = vld [vmem:[%s3812 + $0x90] sm:$0xf]
      %v4272 = vld [vmem:[%s3812 + $0x94] sm:$0xf]
      %v4273 = vld [vmem:[%s3812 + $0x98] sm:$0x1]
      %v4274 = vld [vmem:[%s3812 + $0x9c] sm:$0xf]
      %v4275 = vld [vmem:[%s3812 + $0xa0] sm:$0xf]
      %v4276 = vld [vmem:[%s3812 + $0xa4] sm:$0x1]
      %v4277 = vld [vmem:[%s3812 + $0xa8] sm:$0xf]
      %v4278 = vld [vmem:[%s3812 + $0xac] sm:$0xf]
      %v4279 = vld [vmem:[%s3812 + $0xb0] sm:$0x1]
      %v4280 = vld [vmem:[%s3812 + $0xb4] sm:$0xf]
      %v4281 = vld [vmem:[%s3812 + $0xb8] sm:$0xf]
      %v4282 = vld [vmem:[%s3812 + $0xbc] sm:$0x1]
      %v4283 = vld [vmem:[#allocation2] sm:$0xff]
      %v4284 = vld [vmem:[#allocation2 + $0x8] sm:$0xff]
      %v4285 = vld [vmem:[#allocation2 + $0x10] sm:$0xff]
      %v4286 = vld [vmem:[#allocation2 + $0x18] sm:$0xff]
      %v4287 = vld [vmem:[#allocation2 + $0x20] sm:$0xff]
      %v4288 = vld [vmem:[#allocation2 + $0x28] sm:$0xff]
      %v4289 = vld [vmem:[#allocation2 + $0x30] sm:$0xff]
      %v4290 = vld [vmem:[#allocation2 + $0x38] sm:$0xff]
      %v4291 = vld [vmem:[#allocation2 + $0x40] sm:$0xff]
      %v4292 = vld [vmem:[#allocation2 + $0x48] sm:$0xff]
      %v4293 = vld [vmem:[#allocation2 + $0x50] sm:$0xff]
      %v4294 = vld [vmem:[#allocation2 + $0x58] sm:$0xff]
      %v4295 = vld [vmem:[#allocation2 + $0x60] sm:$0xff]
      %v4296 = vld [vmem:[#allocation2 + $0x68] sm:$0xff]
      %v4297 = vld [vmem:[#allocation2 + $0x70] sm:$0xff]
      %v4298 = vld [vmem:[#allocation2 + $0x78] sm:$0xff]
      %v4299 = vld [vmem:[#allocation2 + $0x80] sm:$0xff]
      %v4300 = vld [vmem:[#allocation2 + $0x88] sm:$0xff]
      %v4301 = vld [vmem:[#allocation2 + $0x90] sm:$0xff]
      %v4302 = vld [vmem:[#allocation2 + $0x98] sm:$0xff]
      %v4303 = vld [vmem:[#allocation2 + $0xa0] sm:$0xff]
      %v4304 = vld [vmem:[#allocation2 + $0xa8] sm:$0xff]
      %v4305 = vld [vmem:[#allocation2 + $0xb0] sm:$0xff]
      %v4306 = vld [vmem:[#allocation2 + $0xb8] sm:$0xff]
      %v4307 = vld [vmem:[#allocation2 + $0xc0] sm:$0xff]
      %v4308 = vld [vmem:[#allocation2 + $0xc8] sm:$0xff]
      %v4309 = vld [vmem:[#allocation2 + $0xd0] sm:$0xff]
      %v4310 = vld [vmem:[#allocation2 + $0xd8] sm:$0xff]
      %v4311 = vld [vmem:[#allocation2 + $0xe0] sm:$0xff]
      %v4312 = vld [vmem:[#allocation2 + $0xe8] sm:$0xff]
      %v4313 = vld [vmem:[#allocation2 + $0xf0] sm:$0xff]
      %v4314 = vld [vmem:[#allocation2 + $0xf8] sm:$0xff]
      %v4316 = vshrl.u32 %v4235, 16
      %v4318 = vrot.slane %v4316, 4
      %v4319 = vshll.u32 %v4235, 16
      %v4321 = vrot.slane %v4319, 5
      %v4322 = vor.u32 %v4318, %v4321
      %v4323 = vrot.slane %v4322, 4
      %v4325 = vshll.u32 %v4236, 16
      %v4327 = vrot.slane %v4325, 5
      %v4328 = vsel %vm753, %v4323, %v4327
      %v4329 = vshrl.u32 %v4236, 16
      %v4331 = vrot.slane %v4329, 4
      %v4332 = vor.u32 %v4331, %v4327
      %v4333 = vrot.slane %v4332, 4
      %v4335 = vshll.u32 %v4237, 16
      %v4337 = vrot.slane %v4335, 5
      %v4338 = vsel %vm753, %v4333, %v4337
      %v4340 = vshrl.u32 %v4238, 16
      %v4342 = vrot.slane %v4340, 4
      %v4343 = vshll.u32 %v4238, 16
      %v4345 = vrot.slane %v4343, 5
      %v4346 = vor.u32 %v4342, %v4345
      %v4347 = vrot.slane %v4346, 4
      %v4349 = vshll.u32 %v4239, 16
      %v4351 = vrot.slane %v4349, 5
      %v4352 = vsel %vm753, %v4347, %v4351
      %v4353 = vshrl.u32 %v4239, 16
      %v4355 = vrot.slane %v4353, 4
      %v4356 = vor.u32 %v4355, %v4351
      %v4357 = vrot.slane %v4356, 4
      %v4359 = vshll.u32 %v4240, 16
      %v4361 = vrot.slane %v4359, 5
      %v4362 = vsel %vm753, %v4357, %v4361
      %v4364 = vshrl.u32 %v4241, 16
      %v4366 = vrot.slane %v4364, 4
      %v4367 = vshll.u32 %v4241, 16
      %v4369 = vrot.slane %v4367, 5
      %v4370 = vor.u32 %v4366, %v4369
      %v4371 = vrot.slane %v4370, 4
      %v4373 = vshll.u32 %v4242, 16
      %v4375 = vrot.slane %v4373, 5
      %v4376 = vsel %vm753, %v4371, %v4375
      %v4377 = vshrl.u32 %v4242, 16
      %v4379 = vrot.slane %v4377, 4
      %v4380 = vor.u32 %v4379, %v4375
      %v4381 = vrot.slane %v4380, 4
      %v4383 = vshll.u32 %v4243, 16
      %v4385 = vrot.slane %v4383, 5
      %v4386 = vsel %vm753, %v4381, %v4385
      %v4388 = vshrl.u32 %v4244, 16
      %v4390 = vrot.slane %v4388, 4
      %v4391 = vshll.u32 %v4244, 16
      %v4393 = vrot.slane %v4391, 5
      %v4394 = vor.u32 %v4390, %v4393
      %v4395 = vrot.slane %v4394, 4
      %v4397 = vshll.u32 %v4245, 16
      %v4399 = vrot.slane %v4397, 5
      %v4400 = vsel %vm753, %v4395, %v4399
      %v4401 = vshrl.u32 %v4245, 16
      %v4403 = vrot.slane %v4401, 4
      %v4404 = vor.u32 %v4403, %v4399
      %v4405 = vrot.slane %v4404, 4
      %v4407 = vshll.u32 %v4246, 16
      %v4409 = vrot.slane %v4407, 5
      %v4410 = vsel %vm753, %v4405, %v4409
      %v4412 = vshrl.u32 %v4247, 16
      %v4414 = vrot.slane %v4412, 4
      %v4415 = vshll.u32 %v4247, 16
      %v4417 = vrot.slane %v4415, 5
      %v4418 = vor.u32 %v4414, %v4417
      %v4419 = vrot.slane %v4418, 4
      %v4421 = vshll.u32 %v4248, 16
      %v4423 = vrot.slane %v4421, 5
      %v4424 = vsel %vm753, %v4419, %v4423
      %v4425 = vshrl.u32 %v4248, 16
      %v4427 = vrot.slane %v4425, 4
      %v4428 = vor.u32 %v4427, %v4423
      %v4429 = vrot.slane %v4428, 4
      %v4431 = vshll.u32 %v4249, 16
      %v4433 = vrot.slane %v4431, 5
      %v4434 = vsel %vm753, %v4429, %v4433
      %v4436 = vshrl.u32 %v4250, 16
      %v4438 = vrot.slane %v4436, 4
      %v4439 = vshll.u32 %v4250, 16
      %v4441 = vrot.slane %v4439, 5
      %v4442 = vor.u32 %v4438, %v4441
      %v4443 = vrot.slane %v4442, 4
      %v4445 = vshll.u32 %v4251, 16
      %v4447 = vrot.slane %v4445, 5
      %v4448 = vsel %vm753, %v4443, %v4447
      %v4449 = vshrl.u32 %v4251, 16
      %v4451 = vrot.slane %v4449, 4
      %v4452 = vor.u32 %v4451, %v4447
      %v4453 = vrot.slane %v4452, 4
      %v4455 = vshll.u32 %v4252, 16
      %v4457 = vrot.slane %v4455, 5
      %v4458 = vsel %vm753, %v4453, %v4457
      %v4460 = vshrl.u32 %v4253, 16
      %v4462 = vrot.slane %v4460, 4
      %v4463 = vshll.u32 %v4253, 16
      %v4465 = vrot.slane %v4463, 5
      %v4466 = vor.u32 %v4462, %v4465
      %v4467 = vrot.slane %v4466, 4
      %v4469 = vshll.u32 %v4254, 16
      %v4471 = vrot.slane %v4469, 5
      %v4472 = vsel %vm753, %v4467, %v4471
      %v4473 = vshrl.u32 %v4254, 16
      %v4475 = vrot.slane %v4473, 4
      %v4476 = vor.u32 %v4475, %v4471
      %v4477 = vrot.slane %v4476, 4
      %v4479 = vshll.u32 %v4255, 16
      %v4481 = vrot.slane %v4479, 5
      %v4482 = vsel %vm753, %v4477, %v4481
      %v4484 = vshrl.u32 %v4256, 16
      %v4486 = vrot.slane %v4484, 4
      %v4487 = vshll.u32 %v4256, 16
      %v4489 = vrot.slane %v4487, 5
      %v4490 = vor.u32 %v4486, %v4489
      %v4491 = vrot.slane %v4490, 4
      %v4493 = vshll.u32 %v4257, 16
      %v4495 = vrot.slane %v4493, 5
      %v4496 = vsel %vm753, %v4491, %v4495
      %v4497 = vshrl.u32 %v4257, 16
      %v4499 = vrot.slane %v4497, 4
      %v4500 = vor.u32 %v4499, %v4495
      %v4501 = vrot.slane %v4500, 4
      %v4503 = vshll.u32 %v4258, 16
      %v4505 = vrot.slane %v4503, 5
      %v4506 = vsel %vm753, %v4501, %v4505
      %v4508 = vshrl.u32 %v4259, 16
      %v4510 = vrot.slane %v4508, 4
      %v4511 = vshll.u32 %v4259, 16
      %v4513 = vrot.slane %v4511, 5
      %v4514 = vor.u32 %v4510, %v4513
      %v4515 = vrot.slane %v4514, 4
      %v4517 = vshll.u32 %v4260, 16
      %v4519 = vrot.slane %v4517, 5
      %v4520 = vsel %vm753, %v4515, %v4519
      %v4521 = vshrl.u32 %v4260, 16
      %v4523 = vrot.slane %v4521, 4
      %v4524 = vor.u32 %v4523, %v4519
      %v4525 = vrot.slane %v4524, 4
      %v4527 = vshll.u32 %v4261, 16
      %v4529 = vrot.slane %v4527, 5
      %v4530 = vsel %vm753, %v4525, %v4529
      %v4532 = vshrl.u32 %v4262, 16
      %v4534 = vrot.slane %v4532, 4
      %v4535 = vshll.u32 %v4262, 16
      %v4537 = vrot.slane %v4535, 5
      %v4538 = vor.u32 %v4534, %v4537
      %v4539 = vrot.slane %v4538, 4
      %v4541 = vshll.u32 %v4263, 16
      %v4543 = vrot.slane %v4541, 5
      %v4544 = vsel %vm753, %v4539, %v4543
      %v4545 = vshrl.u32 %v4263, 16
      %v4547 = vrot.slane %v4545, 4
      %v4548 = vor.u32 %v4547, %v4543
      %v4549 = vrot.slane %v4548, 4
      %v4551 = vshll.u32 %v4264, 16
      %v4553 = vrot.slane %v4551, 5
      %v4554 = vsel %vm753, %v4549, %v4553
      %v4556 = vshrl.u32 %v4265, 16
      %v4558 = vrot.slane %v4556, 4
      %v4559 = vshll.u32 %v4265, 16
      %v4561 = vrot.slane %v4559, 5
      %v4562 = vor.u32 %v4558, %v4561
      %v4563 = vrot.slane %v4562, 4
      %v4565 = vshll.u32 %v4266, 16
      %v4567 = vrot.slane %v4565, 5
      %v4568 = vsel %vm753, %v4563, %v4567
      %v4569 = vshrl.u32 %v4266, 16
      %v4571 = vrot.slane %v4569, 4
      %v4572 = vor.u32 %v4571, %v4567
      %v4573 = vrot.slane %v4572, 4
      %v4575 = vshll.u32 %v4267, 16
      %v4577 = vrot.slane %v4575, 5
      %v4578 = vsel %vm753, %v4573, %v4577
      %v4580 = vshrl.u32 %v4268, 16
      %v4582 = vrot.slane %v4580, 4
      %v4583 = vshll.u32 %v4268, 16
      %v4585 = vrot.slane %v4583, 5
      %v4586 = vor.u32 %v4582, %v4585
      %v4587 = vrot.slane %v4586, 4
      %v4589 = vshll.u32 %v4269, 16
      %v4591 = vrot.slane %v4589, 5
      %v4592 = vsel %vm753, %v4587, %v4591
      %v4593 = vshrl.u32 %v4269, 16
      %v4595 = vrot.slane %v4593, 4
      %v4596 = vor.u32 %v4595, %v4591
      %v4597 = vrot.slane %v4596, 4
      %v4599 = vshll.u32 %v4270, 16
      %v4601 = vrot.slane %v4599, 5
      %v4602 = vsel %vm753, %v4597, %v4601
      %v4604 = vshrl.u32 %v4271, 16
      %v4606 = vrot.slane %v4604, 4
      %v4607 = vshll.u32 %v4271, 16
      %v4609 = vrot.slane %v4607, 5
      %v4610 = vor.u32 %v4606, %v4609
      %v4611 = vrot.slane %v4610, 4
      %v4613 = vshll.u32 %v4272, 16
      %v4615 = vrot.slane %v4613, 5
      %v4616 = vsel %vm753, %v4611, %v4615
      %v4617 = vshrl.u32 %v4272, 16
      %v4619 = vrot.slane %v4617, 4
      %v4620 = vor.u32 %v4619, %v4615
      %v4621 = vrot.slane %v4620, 4
      %v4623 = vshll.u32 %v4273, 16
      %v4625 = vrot.slane %v4623, 5
      %v4626 = vsel %vm753, %v4621, %v4625
      %v4628 = vshrl.u32 %v4274, 16
      %v4630 = vrot.slane %v4628, 4
      %v4631 = vshll.u32 %v4274, 16
      %v4633 = vrot.slane %v4631, 5
      %v4634 = vor.u32 %v4630, %v4633
      %v4635 = vrot.slane %v4634, 4
      %v4637 = vshll.u32 %v4275, 16
      %v4639 = vrot.slane %v4637, 5
      %v4640 = vsel %vm753, %v4635, %v4639
      %v4641 = vshrl.u32 %v4275, 16
      %v4643 = vrot.slane %v4641, 4
      %v4644 = vor.u32 %v4643, %v4639
      %v4645 = vrot.slane %v4644, 4
      %v4647 = vshll.u32 %v4276, 16
      %v4649 = vrot.slane %v4647, 5
      %v4650 = vsel %vm753, %v4645, %v4649
      %v4652 = vshrl.u32 %v4277, 16
      %v4654 = vrot.slane %v4652, 4
      %v4655 = vshll.u32 %v4277, 16
      %v4657 = vrot.slane %v4655, 5
      %v4658 = vor.u32 %v4654, %v4657
      %v4659 = vrot.slane %v4658, 4
      %v4661 = vshll.u32 %v4278, 16
      %v4663 = vrot.slane %v4661, 5
      %v4664 = vsel %vm753, %v4659, %v4663
      %v4665 = vshrl.u32 %v4278, 16
      %v4667 = vrot.slane %v4665, 4
      %v4668 = vor.u32 %v4667, %v4663
      %v4669 = vrot.slane %v4668, 4
      %v4671 = vshll.u32 %v4279, 16
      %v4673 = vrot.slane %v4671, 5
      %v4674 = vsel %vm753, %v4669, %v4673
      %v4676 = vshrl.u32 %v4280, 16
      %v4678 = vrot.slane %v4676, 4
      %v4679 = vshll.u32 %v4280, 16
      %v4681 = vrot.slane %v4679, 5
      %v4682 = vor.u32 %v4678, %v4681
      %v4683 = vrot.slane %v4682, 4
      %v4685 = vshll.u32 %v4281, 16
      %v4687 = vrot.slane %v4685, 5
      %v4688 = vsel %vm753, %v4683, %v4687
      %v4689 = vshrl.u32 %v4281, 16
      %v4691 = vrot.slane %v4689, 4
      %v4692 = vor.u32 %v4691, %v4687
      %v4693 = vrot.slane %v4692, 4
      %v4695 = vshll.u32 %v4282, 16
      %v4697 = vrot.slane %v4695, 5
      %v4698 = vsel %vm753, %v4693, %v4697
      %s4699 = scalar_lea.vmem %s1, 14
      %v4700 = vld [vmem:[%s4699] sm:$0x3]
      %v4701 = vunpack.c.l.b16 %v4328
      %v4702 = vunpack.c.l.b16 %v4338
      %v4703 = vunpack.c.l.b16 %v4352
      %v4704 = vunpack.c.l.b16 %v4362
      %v4705 = vunpack.c.l.b16 %v4376
      %v4706 = vunpack.c.l.b16 %v4386
      %v4707 = vunpack.c.l.b16 %v4400
      %v4708 = vunpack.c.l.b16 %v4410
      %v4709 = vunpack.c.l.b16 %v4424
      %v4710 = vunpack.c.l.b16 %v4434
      %v4711 = vunpack.c.l.b16 %v4448
      %v4712 = vunpack.c.l.b16 %v4458
      %v4713 = vunpack.c.l.b16 %v4472
      %v4714 = vunpack.c.l.b16 %v4482
      %v4715 = vunpack.c.l.b16 %v4496
      %v4716 = vunpack.c.l.b16 %v4506
      %v4717 = vunpack.c.l.b16 %v4520
      %v4718 = vunpack.c.l.b16 %v4530
      %v4719 = vunpack.c.l.b16 %v4544
      %v4720 = vunpack.c.l.b16 %v4554
      %v4721 = vunpack.c.l.b16 %v4568
      %v4722 = vunpack.c.l.b16 %v4578
      %v4723 = vunpack.c.l.b16 %v4592
      %v4724 = vunpack.c.l.b16 %v4602
      %v4725 = vunpack.c.l.b16 %v4616
      %v4726 = vunpack.c.l.b16 %v4626
      %v4727 = vunpack.c.l.b16 %v4640
      %v4728 = vunpack.c.l.b16 %v4650
      %v4729 = vunpack.c.l.b16 %v4664
      %v4730 = vunpack.c.l.b16 %v4674
      %v4731 = vunpack.c.l.b16 %v4688
      %v4732 = vunpack.c.l.b16 %v4698
      %v4733 = vpack.c.b16 %v4702, %v4701
      %v4734 = vpack.c.b16 %v4704, %v4703
      %v4735 = vpack.c.b16 %v4706, %v4705
      %v4736 = vpack.c.b16 %v4708, %v4707
      %v4737 = vpack.c.b16 %v4710, %v4709
      %v4738 = vpack.c.b16 %v4712, %v4711
      %v4739 = vpack.c.b16 %v4714, %v4713
      %v4740 = vpack.c.b16 %v4716, %v4715
      %v4741 = vpack.c.b16 %v4718, %v4717
      %v4742 = vpack.c.b16 %v4720, %v4719
      %v4743 = vpack.c.b16 %v4722, %v4721
      %v4744 = vpack.c.b16 %v4724, %v4723
      %v4745 = vpack.c.b16 %v4726, %v4725
      %v4746 = vpack.c.b16 %v4728, %v4727
      %v4747 = vpack.c.b16 %v4730, %v4729
      %v4748 = vpack.c.b16 %v4732, %v4731
      %v4750 = vsel %vm393, %v4733, 0
      %v4753 = vsel %vm393, %v4734, 0
      %v4756 = vsel %vm393, %v4735, 0
      %v4759 = vsel %vm393, %v4736, 0
      %v4762 = vsel %vm393, %v4737, 0
      %v4765 = vsel %vm393, %v4738, 0
      %v4768 = vsel %vm393, %v4739, 0
      %v4771 = vsel %vm393, %v4740, 0
      %v4774 = vsel %vm393, %v4741, 0
      %v4777 = vsel %vm393, %v4742, 0
      %v4780 = vsel %vm393, %v4743, 0
      %v4783 = vsel %vm393, %v4744, 0
      %v4786 = vsel %vm393, %v4745, 0
      %v4789 = vsel %vm393, %v4746, 0
      %v4792 = vsel %vm393, %v4747, 0
      %v4795 = vsel %vm393, %v4748, 0
      %v4798 = vsel %vm442, %v4700, 0
      %4800 = vmatprep.subr.bf16.mxu0 0
      %4801 = vmatpush1.bf16.msra.mxu0 %v4798
      %4802 = vmatprep.subr.bf16.mxu0 0
      %4803 = vmatpush1.bf16.msra.mxu0 0
      %4804 = vmatprep.subr.bf16.mxu0 0
      %4805 = vmatpush1.bf16.msra.mxu0 0
      %4806 = vmatprep.subr.bf16.mxu0 0
      %4807 = vmatpush1.bf16.msra.mxu0 0
      %4808 = vmatprep.subr.bf16.mxu0 0
      %4809 = vmatpush1.bf16.msra.mxu0 0
      %4810 = vmatprep.subr.bf16.mxu0 0
      %4811 = vmatpush1.bf16.msra.mxu0 0
      %4812 = vmatprep.subr.bf16.mxu0 0
      %4813 = vmatpush1.bf16.msra.mxu0 0
      %4814 = vmatprep.subr.bf16.mxu0 0
      %4815 = vmatpush1.bf16.msra.mxu0 0
      %4816 = vmatprep.subr.bf16.mxu0 0
      %4817 = vmatpush1.bf16.msra.mxu0 0
      %4818 = vmatprep.subr.bf16.mxu0 0
      %4819 = vmatpush1.bf16.msra.mxu0 0
      %4820 = vmatprep.subr.bf16.mxu0 0
      %4821 = vmatpush1.bf16.msra.mxu0 0
      %4822 = vmatprep.subr.bf16.mxu0 0
      %4823 = vmatpush1.bf16.msra.mxu0 0
      %4824 = vmatprep.subr.bf16.mxu0 0
      %4825 = vmatpush1.bf16.msra.mxu0 0
      %4826 = vmatprep.subr.bf16.mxu0 0
      %4827 = vmatpush1.bf16.msra.mxu0 0
      %4828 = vmatprep.subr.bf16.mxu0 0
      %4829 = vmatpush1.bf16.msra.mxu0 0
      %4830 = vmatprep.subr.bf16.mxu0 0
      %4831 = vmatpush1.bf16.msra.mxu0 0
      %4832 = vmatprep.mubr.bf16.mxu0 0
      %4833 = vmatmul.mubr.bf16.gmra.mrb[0].mxu0 %v4750
      %v4834 = vpop.f32.mrb[0].mxu0
      %v4835 = vadd.f32 0.0, %v4834
      %v4836 = vpop.f32.mrb[0].mxu0
      %v4837 = vpop.f32.mrb[0].mxu0
      %v4838 = vadd.f32 0.0, %v4837
      %v4839 = vpop.f32.mrb[0].mxu0
      %4840 = vmatprep.mubr.bf16.mxu0 0
      %4841 = vmatmul.mubr.bf16.gmra.mrb[0].mxu0 %v4753
      %v4842 = vpop.f32.mrb[0].mxu0
      %v4843 = vadd.f32 0.0, %v4842
      %v4844 = vpop.f32.mrb[0].mxu0
      %v4845 = vpop.f32.mrb[0].mxu0
      %v4846 = vadd.f32 0.0, %v4845
      %v4847 = vpop.f32.mrb[0].mxu0
      %4848 = vmatprep.mubr.bf16.mxu0 0
      %4849 = vmatmul.mubr.bf16.gmra.mrb[0].mxu0 %v4756
      %v4850 = vpop.f32.mrb[0].mxu0
      %v4851 = vadd.f32 0.0, %v4850
      %v4852 = vpop.f32.mrb[0].mxu0
      %v4853 = vpop.f32.mrb[0].mxu0
      %v4854 = vadd.f32 0.0, %v4853
      %v4855 = vpop.f32.mrb[0].mxu0
      %4856 = vmatprep.mubr.bf16.mxu0 0
      %4857 = vmatmul.mubr.bf16.gmra.mrb[0].mxu0 %v4759
      %v4858 = vpop.f32.mrb[0].mxu0
      %v4859 = vadd.f32 0.0, %v4858
      %v4860 = vpop.f32.mrb[0].mxu0
      %v4861 = vpop.f32.mrb[0].mxu0
      %v4862 = vadd.f32 0.0, %v4861
      %v4863 = vpop.f32.mrb[0].mxu0
      %4864 = vmatprep.mubr.bf16.mxu0 0
      %4865 = vmatmul.mubr.bf16.gmra.mrb[0].mxu0 %v4762
      %v4866 = vpop.f32.mrb[0].mxu0
      %v4867 = vadd.f32 0.0, %v4866
      %v4868 = vpop.f32.mrb[0].mxu0
      %v4869 = vpop.f32.mrb[0].mxu0
      %v4870 = vadd.f32 0.0, %v4869
      %v4871 = vpop.f32.mrb[0].mxu0
      %4872 = vmatprep.mubr.bf16.mxu0 0
      %4873 = vmatmul.mubr.bf16.gmra.mrb[0].mxu0 %v4765
      %v4874 = vpop.f32.mrb[0].mxu0
      %v4875 = vadd.f32 0.0, %v4874
      %v4876 = vpop.f32.mrb[0].mxu0
      %v4877 = vpop.f32.mrb[0].mxu0
      %v4878 = vadd.f32 0.0, %v4877
      %v4879 = vpop.f32.mrb[0].mxu0
      %4880 = vmatprep.mubr.bf16.mxu0 0
      %4881 = vmatmul.mubr.bf16.gmra.mrb[0].mxu0 %v4768
      %v4882 = vpop.f32.mrb[0].mxu0
      %v4883 = vadd.f32 0.0, %v4882
      %v4884 = vpop.f32.mrb[0].mxu0
      %v4885 = vpop.f32.mrb[0].mxu0
      %v4886 = vadd.f32 0.0, %v4885
      %v4887 = vpop.f32.mrb[0].mxu0
      %4888 = vmatprep.mubr.bf16.mxu0 0
      %4889 = vmatmul.mubr.bf16.gmra.mrb[0].mxu0 %v4771
      %v4890 = vpop.f32.mrb[0].mxu0
      %v4891 = vadd.f32 0.0, %v4890
      %v4892 = vpop.f32.mrb[0].mxu0
      %v4893 = vpop.f32.mrb[0].mxu0
      %v4894 = vadd.f32 0.0, %v4893
      %v4895 = vpop.f32.mrb[0].mxu0
      %4896 = vmatprep.mubr.bf16.mxu0 0
      %4897 = vmatmul.mubr.bf16.gmra.mrb[0].mxu0 %v4774
      %v4898 = vpop.f32.mrb[0].mxu0
      %v4899 = vadd.f32 0.0, %v4898
      %v4900 = vpop.f32.mrb[0].mxu0
      %v4901 = vpop.f32.mrb[0].mxu0
      %v4902 = vadd.f32 0.0, %v4901
      %v4903 = vpop.f32.mrb[0].mxu0
      %4904 = vmatprep.mubr.bf16.mxu0 0
      %4905 = vmatmul.mubr.bf16.gmra.mrb[0].mxu0 %v4777
      %v4906 = vpop.f32.mrb[0].mxu0
      %v4907 = vadd.f32 0.0, %v4906
      %v4908 = vpop.f32.mrb[0].mxu0
      %v4909 = vpop.f32.mrb[0].mxu0
      %v4910 = vadd.f32 0.0, %v4909
      %v4911 = vpop.f32.mrb[0].mxu0
      %4912 = vmatprep.mubr.bf16.mxu0 0
      %4913 = vmatmul.mubr.bf16.gmra.mrb[0].mxu0 %v4780
      %v4914 = vpop.f32.mrb[0].mxu0
      %v4915 = vadd.f32 0.0, %v4914
      %v4916 = vpop.f32.mrb[0].mxu0
      %v4917 = vpop.f32.mrb[0].mxu0
      %v4918 = vadd.f32 0.0, %v4917
      %v4919 = vpop.f32.mrb[0].mxu0
      %4920 = vmatprep.mubr.bf16.mxu0 0
      %4921 = vmatmul.mubr.bf16.gmra.mrb[0].mxu0 %v4783
      %v4922 = vpop.f32.mrb[0].mxu0
      %v4923 = vadd.f32 0.0, %v4922
      %v4924 = vpop.f32.mrb[0].mxu0
      %v4925 = vpop.f32.mrb[0].mxu0
      %v4926 = vadd.f32 0.0, %v4925
      %v4927 = vpop.f32.mrb[0].mxu0
      %4928 = vmatprep.mubr.bf16.mxu0 0
      %4929 = vmatmul.mubr.bf16.gmra.mrb[0].mxu0 %v4786
      %v4930 = vpop.f32.mrb[0].mxu0
      %v4931 = vadd.f32 0.0, %v4930
      %v4932 = vpop.f32.mrb[0].mxu0
      %v4933 = vpop.f32.mrb[0].mxu0
      %v4934 = vadd.f32 0.0, %v4933
      %v4935 = vpop.f32.mrb[0].mxu0
      %4936 = vmatprep.mubr.bf16.mxu0 0
      %4937 = vmatmul.mubr.bf16.gmra.mrb[0].mxu0 %v4789
      %v4938 = vpop.f32.mrb[0].mxu0
      %v4939 = vadd.f32 0.0, %v4938
      %v4940 = vpop.f32.mrb[0].mxu0
      %v4941 = vpop.f32.mrb[0].mxu0
      %v4942 = vadd.f32 0.0, %v4941
      %v4943 = vpop.f32.mrb[0].mxu0
      %4944 = vmatprep.mubr.bf16.mxu0 0
      %4945 = vmatmul.mubr.bf16.gmra.mrb[0].mxu0 %v4792
      %v4946 = vpop.f32.mrb[0].mxu0
      %v4947 = vadd.f32 0.0, %v4946
      %v4948 = vpop.f32.mrb[0].mxu0
      %v4949 = vpop.f32.mrb[0].mxu0
      %v4950 = vadd.f32 0.0, %v4949
      %v4951 = vpop.f32.mrb[0].mxu0
      %4952 = vmatprep.mubr.bf16.mxu0 0
      %4953 = vmatmul.mubr.bf16.gmra.mrb[0].mxu0 %v4795
      %v4954 = vpop.f32.mrb[0].mxu0
      %v4955 = vadd.f32 0.0, %v4954
      %v4956 = vpop.f32.mrb[0].mxu0
      %v4957 = vpop.f32.mrb[0].mxu0
      %v4958 = vadd.f32 0.0, %v4957
      %v4959 = vpop.f32.mrb[0].mxu0
      %4960 = vdwg.mxu0
      %v4961 = vadd.f32 %v4283, %v4835
      %v4962 = vadd.f32 %v4284, %v4838
      %v4963 = vadd.f32 %v4285, %v4843
      %v4964 = vadd.f32 %v4286, %v4846
      %v4965 = vadd.f32 %v4287, %v4851
      %v4966 = vadd.f32 %v4288, %v4854
      %v4967 = vadd.f32 %v4289, %v4859
      %v4968 = vadd.f32 %v4290, %v4862
      %v4969 = vadd.f32 %v4291, %v4867
      %v4970 = vadd.f32 %v4292, %v4870
      %v4971 = vadd.f32 %v4293, %v4875
      %v4972 = vadd.f32 %v4294, %v4878
      %v4973 = vadd.f32 %v4295, %v4883
      %v4974 = vadd.f32 %v4296, %v4886
      %v4975 = vadd.f32 %v4297, %v4891
      %v4976 = vadd.f32 %v4298, %v4894
      %v4977 = vadd.f32 %v4299, %v4899
      %v4978 = vadd.f32 %v4300, %v4902
      %v4979 = vadd.f32 %v4301, %v4907
      %v4980 = vadd.f32 %v4302, %v4910
      %v4981 = vadd.f32 %v4303, %v4915
      %v4982 = vadd.f32 %v4304, %v4918
      %v4983 = vadd.f32 %v4305, %v4923
      %v4984 = vadd.f32 %v4306, %v4926
      %v4985 = vadd.f32 %v4307, %v4931
      %v4986 = vadd.f32 %v4308, %v4934
      %v4987 = vadd.f32 %v4309, %v4939
      %v4988 = vadd.f32 %v4310, %v4942
      %v4989 = vadd.f32 %v4311, %v4947
      %v4990 = vadd.f32 %v4312, %v4950
      %v4991 = vadd.f32 %v4313, %v4955
      %v4992 = vadd.f32 %v4314, %v4958
      %4993 = vst [vmem:[#allocation2] sm:$0xff] %v4961
      %4994 = vst [vmem:[#allocation2 + $0x8] sm:$0xff] %v4962
      %4995 = vst [vmem:[#allocation2 + $0x10] sm:$0xff] %v4963
      %4996 = vst [vmem:[#allocation2 + $0x18] sm:$0xff] %v4964
      %4997 = vst [vmem:[#allocation2 + $0x20] sm:$0xff] %v4965
      %4998 = vst [vmem:[#allocation2 + $0x28] sm:$0xff] %v4966
      %4999 = vst [vmem:[#allocation2 + $0x30] sm:$0xff] %v4967
      %5000 = vst [vmem:[#allocation2 + $0x38] sm:$0xff] %v4968
      %5001 = vst [vmem:[#allocation2 + $0x40] sm:$0xff] %v4969
      %5002 = vst [vmem:[#allocation2 + $0x48] sm:$0xff] %v4970
      %5003 = vst [vmem:[#allocation2 + $0x50] sm:$0xff] %v4971
      %5004 = vst [vmem:[#allocation2 + $0x58] sm:$0xff] %v4972
      %5005 = vst [vmem:[#allocation2 + $0x60] sm:$0xff] %v4973
      %5006 = vst [vmem:[#allocation2 + $0x68] sm:$0xff] %v4974
      %5007 = vst [vmem:[#allocation2 + $0x70] sm:$0xff] %v4975
      %5008 = vst [vmem:[#allocation2 + $0x78] sm:$0xff] %v4976
      %5009 = vst [vmem:[#allocation2 + $0x80] sm:$0xff] %v4977
      %5010 = vst [vmem:[#allocation2 + $0x88] sm:$0xff] %v4978
      %5011 = vst [vmem:[#allocation2 + $0x90] sm:$0xff] %v4979
      %5012 = vst [vmem:[#allocation2 + $0x98] sm:$0xff] %v4980
      %5013 = vst [vmem:[#allocation2 + $0xa0] sm:$0xff] %v4981
      %5014 = vst [vmem:[#allocation2 + $0xa8] sm:$0xff] %v4982
      %5015 = vst [vmem:[#allocation2 + $0xb0] sm:$0xff] %v4983
      %5016 = vst [vmem:[#allocation2 + $0xb8] sm:$0xff] %v4984
      %5017 = vst [vmem:[#allocation2 + $0xc0] sm:$0xff] %v4985
      %5018 = vst [vmem:[#allocation2 + $0xc8] sm:$0xff] %v4986
      %5019 = vst [vmem:[#allocation2 + $0xd0] sm:$0xff] %v4987
      %5020 = vst [vmem:[#allocation2 + $0xd8] sm:$0xff] %v4988
      %5021 = vst [vmem:[#allocation2 + $0xe0] sm:$0xff] %v4989
      %5022 = vst [vmem:[#allocation2 + $0xe8] sm:$0xff] %v4990
      %5023 = vst [vmem:[#allocation2 + $0xf0] sm:$0xff] %v4991
      %5024 = vst [vmem:[#allocation2 + $0xf8] sm:$0xff] %v4992
      %v5025 = vld [vmem:[%s3812] sm:$0xe]
      %v5026 = vld [vmem:[%s3812 + $0x4] sm:$0xf]
      %v5027 = vld [vmem:[%s3812 + $0x8] sm:$0x1]
      %v5028 = vld [vmem:[%s3812 + $0xc] sm:$0xe]
      %v5029 = vld [vmem:[%s3812 + $0x10] sm:$0xf]
      %v5030 = vld [vmem:[%s3812 + $0x14] sm:$0x1]
      %v5031 = vld [vmem:[%s3812 + $0x18] sm:$0xe]
      %v5032 = vld [vmem:[%s3812 + $0x1c] sm:$0xf]
      %v5033 = vld [vmem:[%s3812 + $0x20] sm:$0x1]
      %v5034 = vld [vmem:[%s3812 + $0x24] sm:$0xe]
      %v5035 = vld [vmem:[%s3812 + $0x28] sm:$0xf]
      %v5036 = vld [vmem:[%s3812 + $0x2c] sm:$0x1]
      %v5037 = vld [vmem:[%s3812 + $0x30] sm:$0xe]
      %v5038 = vld [vmem:[%s3812 + $0x34] sm:$0xf]
      %v5039 = vld [vmem:[%s3812 + $0x38] sm:$0x1]
      %v5040 = vld [vmem:[%s3812 + $0x3c] sm:$0xe]
      %v5041 = vld [vmem:[%s3812 + $0x40] sm:$0xf]
      %v5042 = vld [vmem:[%s3812 + $0x44] sm:$0x1]
      %v5043 = vld [vmem:[%s3812 + $0x48] sm:$0xe]
      %v5044 = vld [vmem:[%s3812 + $0x4c] sm:$0xf]
      %v5045 = vld [vmem:[%s3812 + $0x50] sm:$0x1]
      %v5046 = vld [vmem:[%s3812 + $0x54] sm:$0xe]
      %v5047 = vld [vmem:[%s3812 + $0x58] sm:$0xf]
      %v5048 = vld [vmem:[%s3812 + $0x5c] sm:$0x1]
      %v5049 = vld [vmem:[%s3812 + $0x60] sm:$0xe]
      %v5050 = vld [vmem:[%s3812 + $0x64] sm:$0xf]
      %v5051 = vld [vmem:[%s3812 + $0x68] sm:$0x1]
      %v5052 = vld [vmem:[%s3812 + $0x6c] sm:$0xe]
      %v5053 = vld [vmem:[%s3812 + $0x70] sm:$0xf]
      %v5054 = vld [vmem:[%s3812 + $0x74] sm:$0x1]
      %v5055 = vld [vmem:[%s3812 + $0x78] sm:$0xe]
      %v5056 = vld [vmem:[%s3812 + $0x7c] sm:$0xf]
      %v5057 = vld [vmem:[%s3812 + $0x80] sm:$0x1]
      %v5058 = vld [vmem:[%s3812 + $0x84] sm:$0xe]
      %v5059 = vld [vmem:[%s3812 + $0x88] sm:$0xf]
      %v5060 = vld [vmem:[%s3812 + $0x8c] sm:$0x1]
      %v5061 = vld [vmem:[%s3812 + $0x90] sm:$0xe]
      %v5062 = vld [vmem:[%s3812 + $0x94] sm:$0xf]
      %v5063 = vld [vmem:[%s3812 + $0x98] sm:$0x1]
      %v5064 = vld [vmem:[%s3812 + $0x9c] sm:$0xe]
      %v5065 = vld [vmem:[%s3812 + $0xa0] sm:$0xf]
      %v5066 = vld [vmem:[%s3812 + $0xa4] sm:$0x1]
      %v5067 = vld [vmem:[%s3812 + $0xa8] sm:$0xe]
      %v5068 = vld [vmem:[%s3812 + $0xac] sm:$0xf]
      %v5069 = vld [vmem:[%s3812 + $0xb0] sm:$0x1]
      %v5070 = vld [vmem:[%s3812 + $0xb4] sm:$0xe]
      %v5071 = vld [vmem:[%s3812 + $0xb8] sm:$0xf]
      %v5072 = vld [vmem:[%s3812 + $0xbc] sm:$0x1]
      %v5073 = vld [vmem:[#allocation2] sm:$0xff]
      %v5074 = vld [vmem:[#allocation2 + $0x8] sm:$0xff]
      %v5075 = vld [vmem:[#allocation2 + $0x10] sm:$0xff]
      %v5076 = vld [vmem:[#allocation2 + $0x18] sm:$0xff]
      %v5077 = vld [vmem:[#allocation2 + $0x20] sm:$0xff]
      %v5078 = vld [vmem:[#allocation2 + $0x28] sm:$0xff]
      %v5079 = vld [vmem:[#allocation2 + $0x30] sm:$0xff]
      %v5080 = vld [vmem:[#allocation2 + $0x38] sm:$0xff]
      %v5081 = vld [vmem:[#allocation2 + $0x40] sm:$0xff]
      %v5082 = vld [vmem:[#allocation2 + $0x48] sm:$0xff]
      %v5083 = vld [vmem:[#allocation2 + $0x50] sm:$0xff]
      %v5084 = vld [vmem:[#allocation2 + $0x58] sm:$0xff]
      %v5085 = vld [vmem:[#allocation2 + $0x60] sm:$0xff]
      %v5086 = vld [vmem:[#allocation2 + $0x68] sm:$0xff]
      %v5087 = vld [vmem:[#allocation2 + $0x70] sm:$0xff]
      %v5088 = vld [vmem:[#allocation2 + $0x78] sm:$0xff]
      %v5089 = vld [vmem:[#allocation2 + $0x80] sm:$0xff]
      %v5090 = vld [vmem:[#allocation2 + $0x88] sm:$0xff]
      %v5091 = vld [vmem:[#allocation2 + $0x90] sm:$0xff]
      %v5092 = vld [vmem:[#allocation2 + $0x98] sm:$0xff]
      %v5093 = vld [vmem:[#allocation2 + $0xa0] sm:$0xff]
      %v5094 = vld [vmem:[#allocation2 + $0xa8] sm:$0xff]
      %v5095 = vld [vmem:[#allocation2 + $0xb0] sm:$0xff]
      %v5096 = vld [vmem:[#allocation2 + $0xb8] sm:$0xff]
      %v5097 = vld [vmem:[#allocation2 + $0xc0] sm:$0xff]
      %v5098 = vld [vmem:[#allocation2 + $0xc8] sm:$0xff]
      %v5099 = vld [vmem:[#allocation2 + $0xd0] sm:$0xff]
      %v5100 = vld [vmem:[#allocation2 + $0xd8] sm:$0xff]
      %v5101 = vld [vmem:[#allocation2 + $0xe0] sm:$0xff]
      %v5102 = vld [vmem:[#allocation2 + $0xe8] sm:$0xff]
      %v5103 = vld [vmem:[#allocation2 + $0xf0] sm:$0xff]
      %v5104 = vld [vmem:[#allocation2 + $0xf8] sm:$0xff]
      %v5153 = vrot.slane %v5025, 5
      %v5154 = vrot.slane %v5153, 4
      %v5155 = vrot.slane %v5026, 5
      %v5156 = vsel %vm1594, %v5154, %v5155
      %v5157 = vrot.slane %v5155, 4
      %v5158 = vrot.slane %v5027, 5
      %v5159 = vsel %vm1594, %v5157, %v5158
      %v5160 = vrot.slane %v5028, 5
      %v5161 = vrot.slane %v5160, 4
      %v5162 = vrot.slane %v5029, 5
      %v5163 = vsel %vm1594, %v5161, %v5162
      %v5164 = vrot.slane %v5162, 4
      %v5165 = vrot.slane %v5030, 5
      %v5166 = vsel %vm1594, %v5164, %v5165
      %v5167 = vrot.slane %v5031, 5
      %v5168 = vrot.slane %v5167, 4
      %v5169 = vrot.slane %v5032, 5
      %v5170 = vsel %vm1594, %v5168, %v5169
      %v5171 = vrot.slane %v5169, 4
      %v5172 = vrot.slane %v5033, 5
      %v5173 = vsel %vm1594, %v5171, %v5172
      %v5174 = vrot.slane %v5034, 5
      %v5175 = vrot.slane %v5174, 4
      %v5176 = vrot.slane %v5035, 5
      %v5177 = vsel %vm1594, %v5175, %v5176
      %v5178 = vrot.slane %v5176, 4
      %v5179 = vrot.slane %v5036, 5
      %v5180 = vsel %vm1594, %v5178, %v5179
      %v5181 = vrot.slane %v5037, 5
      %v5182 = vrot.slane %v5181, 4
      %v5183 = vrot.slane %v5038, 5
      %v5184 = vsel %vm1594, %v5182, %v5183
      %v5185 = vrot.slane %v5183, 4
      %v5186 = vrot.slane %v5039, 5
      %v5187 = vsel %vm1594, %v5185, %v5186
      %v5188 = vrot.slane %v5040, 5
      %v5189 = vrot.slane %v5188, 4
      %v5190 = vrot.slane %v5041, 5
      %v5191 = vsel %vm1594, %v5189, %v5190
      %v5192 = vrot.slane %v5190, 4
      %v5193 = vrot.slane %v5042, 5
      %v5194 = vsel %vm1594, %v5192, %v5193
      %v5195 = vrot.slane %v5043, 5
      %v5196 = vrot.slane %v5195, 4
      %v5197 = vrot.slane %v5044, 5
      %v5198 = vsel %vm1594, %v5196, %v5197
      %v5199 = vrot.slane %v5197, 4
      %v5200 = vrot.slane %v5045, 5
      %v5201 = vsel %vm1594, %v5199, %v5200
      %v5202 = vrot.slane %v5046, 5
      %v5203 = vrot.slane %v5202, 4
      %v5204 = vrot.slane %v5047, 5
      %v5205 = vsel %vm1594, %v5203, %v5204
      %v5206 = vrot.slane %v5204, 4
      %v5207 = vrot.slane %v5048, 5
      %v5208 = vsel %vm1594, %v5206, %v5207
      %v5209 = vrot.slane %v5049, 5
      %v5210 = vrot.slane %v5209, 4
      %v5211 = vrot.slane %v5050, 5
      %v5212 = vsel %vm1594, %v5210, %v5211
      %v5213 = vrot.slane %v5211, 4
      %v5214 = vrot.slane %v5051, 5
      %v5215 = vsel %vm1594, %v5213, %v5214
      %v5216 = vrot.slane %v5052, 5
      %v5217 = vrot.slane %v5216, 4
      %v5218 = vrot.slane %v5053, 5
      %v5219 = vsel %vm1594, %v5217, %v5218
      %v5220 = vrot.slane %v5218, 4
      %v5221 = vrot.slane %v5054, 5
      %v5222 = vsel %vm1594, %v5220, %v5221
      %v5223 = vrot.slane %v5055, 5
      %v5224 = vrot.slane %v5223, 4
      %v5225 = vrot.slane %v5056, 5
      %v5226 = vsel %vm1594, %v5224, %v5225
      %v5227 = vrot.slane %v5225, 4
      %v5228 = vrot.slane %v5057, 5
      %v5229 = vsel %vm1594, %v5227, %v5228
      %v5230 = vrot.slane %v5058, 5
      %v5231 = vrot.slane %v5230, 4
      %v5232 = vrot.slane %v5059, 5
      %v5233 = vsel %vm1594, %v5231, %v5232
      %v5234 = vrot.slane %v5232, 4
      %v5235 = vrot.slane %v5060, 5
      %v5236 = vsel %vm1594, %v5234, %v5235
      %v5237 = vrot.slane %v5061, 5
      %v5238 = vrot.slane %v5237, 4
      %v5239 = vrot.slane %v5062, 5
      %v5240 = vsel %vm1594, %v5238, %v5239
      %v5241 = vrot.slane %v5239, 4
      %v5242 = vrot.slane %v5063, 5
      %v5243 = vsel %vm1594, %v5241, %v5242
      %v5244 = vrot.slane %v5064, 5
      %v5245 = vrot.slane %v5244, 4
      %v5246 = vrot.slane %v5065, 5
      %v5247 = vsel %vm1594, %v5245, %v5246
      %v5248 = vrot.slane %v5246, 4
      %v5249 = vrot.slane %v5066, 5
      %v5250 = vsel %vm1594, %v5248, %v5249
      %v5251 = vrot.slane %v5067, 5
      %v5252 = vrot.slane %v5251, 4
      %v5253 = vrot.slane %v5068, 5
      %v5254 = vsel %vm1594, %v5252, %v5253
      %v5255 = vrot.slane %v5253, 4
      %v5256 = vrot.slane %v5069, 5
      %v5257 = vsel %vm1594, %v5255, %v5256
      %v5258 = vrot.slane %v5070, 5
      %v5259 = vrot.slane %v5258, 4
      %v5260 = vrot.slane %v5071, 5
      %v5261 = vsel %vm1594, %v5259, %v5260
      %v5262 = vrot.slane %v5260, 4
      %v5263 = vrot.slane %v5072, 5
      %v5264 = vsel %vm1594, %v5262, %v5263
      %s5265 = scalar_lea.vmem %s1, 16
      %v5266 = vld [vmem:[%s5265] sm:$0x3]
      %v5267 = vunpack.c.l.b16 %v5156
      %v5268 = vunpack.c.l.b16 %v5159
      %v5269 = vunpack.c.l.b16 %v5163
      %v5270 = vunpack.c.l.b16 %v5166
      %v5271 = vunpack.c.l.b16 %v5170
      %v5272 = vunpack.c.l.b16 %v5173
      %v5273 = vunpack.c.l.b16 %v5177
      %v5274 = vunpack.c.l.b16 %v5180
      %v5275 = vunpack.c.l.b16 %v5184
      %v5276 = vunpack.c.l.b16 %v5187
      %v5277 = vunpack.c.l.b16 %v5191
      %v5278 = vunpack.c.l.b16 %v5194
      %v5279 = vunpack.c.l.b16 %v5198
      %v5280 = vunpack.c.l.b16 %v5201
      %v5281 = vunpack.c.l.b16 %v5205
      %v5282 = vunpack.c.l.b16 %v5208
      %v5283 = vunpack.c.l.b16 %v5212
      %v5284 = vunpack.c.l.b16 %v5215
      %v5285 = vunpack.c.l.b16 %v5219
      %v5286 = vunpack.c.l.b16 %v5222
      %v5287 = vunpack.c.l.b16 %v5226
      %v5288 = vunpack.c.l.b16 %v5229
      %v5289 = vunpack.c.l.b16 %v5233
      %v5290 = vunpack.c.l.b16 %v5236
      %v5291 = vunpack.c.l.b16 %v5240
      %v5292 = vunpack.c.l.b16 %v5243
      %v5293 = vunpack.c.l.b16 %v5247
      %v5294 = vunpack.c.l.b16 %v5250
      %v5295 = vunpack.c.l.b16 %v5254
      %v5296 = vunpack.c.l.b16 %v5257
      %v5297 = vunpack.c.l.b16 %v5261
      %v5298 = vunpack.c.l.b16 %v5264
      %v5299 = vpack.c.b16 %v5268, %v5267
      %v5300 = vpack.c.b16 %v5270, %v5269
      %v5301 = vpack.c.b16 %v5272, %v5271
      %v5302 = vpack.c.b16 %v5274, %v5273
      %v5303 = vpack.c.b16 %v5276, %v5275
      %v5304 = vpack.c.b16 %v5278, %v5277
      %v5305 = vpack.c.b16 %v5280, %v5279
      %v5306 = vpack.c.b16 %v5282, %v5281
      %v5307 = vpack.c.b16 %v5284, %v5283
      %v5308 = vpack.c.b16 %v5286, %v5285
      %v5309 = vpack.c.b16 %v5288, %v5287
      %v5310 = vpack.c.b16 %v5290, %v5289
      %v5311 = vpack.c.b16 %v5292, %v5291
      %v5312 = vpack.c.b16 %v5294, %v5293
      %v5313 = vpack.c.b16 %v5296, %v5295
      %v5314 = vpack.c.b16 %v5298, %v5297
      %v5316 = vsel %vm393, %v5299, 0
      %v5319 = vsel %vm393, %v5300, 0
      %v5322 = vsel %vm393, %v5301, 0
      %v5325 = vsel %vm393, %v5302, 0
      %v5328 = vsel %vm393, %v5303, 0
      %v5331 = vsel %vm393, %v5304, 0
      %v5334 = vsel %vm393, %v5305, 0
      %v5337 = vsel %vm393, %v5306, 0
      %v5340 = vsel %vm393, %v5307, 0
      %v5343 = vsel %vm393, %v5308, 0
      %v5346 = vsel %vm393, %v5309, 0
      %v5349 = vsel %vm393, %v5310, 0
      %v5352 = vsel %vm393, %v5311, 0
      %v5355 = vsel %vm393, %v5312, 0
      %v5358 = vsel %vm393, %v5313, 0
      %v5361 = vsel %vm393, %v5314, 0
      %v5364 = vsel %vm442, %v5266, 0
      %5366 = vmatprep.subr.bf16.mxu0 0
      %5367 = vmatpush1.bf16.msra.mxu0 %v5364
      %5368 = vmatprep.subr.bf16.mxu0 0
      %5369 = vmatpush1.bf16.msra.mxu0 0
      %5370 = vmatprep.subr.bf16.mxu0 0
      %5371 = vmatpush1.bf16.msra.mxu0 0
      %5372 = vmatprep.subr.bf16.mxu0 0
      %5373 = vmatpush1.bf16.msra.mxu0 0
      %5374 = vmatprep.subr.bf16.mxu0 0
      %5375 = vmatpush1.bf16.msra.mxu0 0
      %5376 = vmatprep.subr.bf16.mxu0 0
      %5377 = vmatpush1.bf16.msra.mxu0 0
      %5378 = vmatprep.subr.bf16.mxu0 0
      %5379 = vmatpush1.bf16.msra.mxu0 0
      %5380 = vmatprep.subr.bf16.mxu0 0
      %5381 = vmatpush1.bf16.msra.mxu0 0
      %5382 = vmatprep.subr.bf16.mxu0 0
      %5383 = vmatpush1.bf16.msra.mxu0 0
      %5384 = vmatprep.subr.bf16.mxu0 0
      %5385 = vmatpush1.bf16.msra.mxu0 0
      %5386 = vmatprep.subr.bf16.mxu0 0
      %5387 = vmatpush1.bf16.msra.mxu0 0
      %5388 = vmatprep.subr.bf16.mxu0 0
      %5389 = vmatpush1.bf16.msra.mxu0 0
      %5390 = vmatprep.subr.bf16.mxu0 0
      %5391 = vmatpush1.bf16.msra.mxu0 0
      %5392 = vmatprep.subr.bf16.mxu0 0
      %5393 = vmatpush1.bf16.msra.mxu0 0
      %5394 = vmatprep.subr.bf16.mxu0 0
      %5395 = vmatpush1.bf16.msra.mxu0 0
      %5396 = vmatprep.subr.bf16.mxu0 0
      %5397 = vmatpush1.bf16.msra.mxu0 0
      %5398 = vmatprep.mubr.bf16.mxu0 0
      %5399 = vmatmul.mubr.bf16.gmra.mrb[0].mxu0 %v5316
      %v5400 = vpop.f32.mrb[0].mxu0
      %v5401 = vadd.f32 0.0, %v5400
      %v5402 = vpop.f32.mrb[0].mxu0
      %v5403 = vpop.f32.mrb[0].mxu0
      %v5404 = vadd.f32 0.0, %v5403
      %v5405 = vpop.f32.mrb[0].mxu0
      %5406 = vmatprep.mubr.bf16.mxu0 0
      %5407 = vmatmul.mubr.bf16.gmra.mrb[0].mxu0 %v5319
      %v5408 = vpop.f32.mrb[0].mxu0
      %v5409 = vadd.f32 0.0, %v5408
      %v5410 = vpop.f32.mrb[0].mxu0
      %v5411 = vpop.f32.mrb[0].mxu0
      %v5412 = vadd.f32 0.0, %v5411
      %v5413 = vpop.f32.mrb[0].mxu0
      %5414 = vmatprep.mubr.bf16.mxu0 0
      %5415 = vmatmul.mubr.bf16.gmra.mrb[0].mxu0 %v5322
      %v5416 = vpop.f32.mrb[0].mxu0
      %v5417 = vadd.f32 0.0, %v5416
      %v5418 = vpop.f32.mrb[0].mxu0
      %v5419 = vpop.f32.mrb[0].mxu0
      %v5420 = vadd.f32 0.0, %v5419
      %v5421 = vpop.f32.mrb[0].mxu0
      %5422 = vmatprep.mubr.bf16.mxu0 0
      %5423 = vmatmul.mubr.bf16.gmra.mrb[0].mxu0 %v5325
      %v5424 = vpop.f32.mrb[0].mxu0
      %v5425 = vadd.f32 0.0, %v5424
      %v5426 = vpop.f32.mrb[0].mxu0
      %v5427 = vpop.f32.mrb[0].mxu0
      %v5428 = vadd.f32 0.0, %v5427
      %v5429 = vpop.f32.mrb[0].mxu0
      %5430 = vmatprep.mubr.bf16.mxu0 0
      %5431 = vmatmul.mubr.bf16.gmra.mrb[0].mxu0 %v5328
      %v5432 = vpop.f32.mrb[0].mxu0
      %v5433 = vadd.f32 0.0, %v5432
      %v5434 = vpop.f32.mrb[0].mxu0
      %v5435 = vpop.f32.mrb[0].mxu0
      %v5436 = vadd.f32 0.0, %v5435
      %v5437 = vpop.f32.mrb[0].mxu0
      %5438 = vmatprep.mubr.bf16.mxu0 0
      %5439 = vmatmul.mubr.bf16.gmra.mrb[0].mxu0 %v5331
      %v5440 = vpop.f32.mrb[0].mxu0
      %v5441 = vadd.f32 0.0, %v5440
      %v5442 = vpop.f32.mrb[0].mxu0
      %v5443 = vpop.f32.mrb[0].mxu0
      %v5444 = vadd.f32 0.0, %v5443
      %v5445 = vpop.f32.mrb[0].mxu0
      %5446 = vmatprep.mubr.bf16.mxu0 0
      %5447 = vmatmul.mubr.bf16.gmra.mrb[0].mxu0 %v5334
      %v5448 = vpop.f32.mrb[0].mxu0
      %v5449 = vadd.f32 0.0, %v5448
      %v5450 = vpop.f32.mrb[0].mxu0
      %v5451 = vpop.f32.mrb[0].mxu0
      %v5452 = vadd.f32 0.0, %v5451
      %v5453 = vpop.f32.mrb[0].mxu0
      %5454 = vmatprep.mubr.bf16.mxu0 0
      %5455 = vmatmul.mubr.bf16.gmra.mrb[0].mxu0 %v5337
      %v5456 = vpop.f32.mrb[0].mxu0
      %v5457 = vadd.f32 0.0, %v5456
      %v5458 = vpop.f32.mrb[0].mxu0
      %v5459 = vpop.f32.mrb[0].mxu0
      %v5460 = vadd.f32 0.0, %v5459
      %v5461 = vpop.f32.mrb[0].mxu0
      %5462 = vmatprep.mubr.bf16.mxu0 0
      %5463 = vmatmul.mubr.bf16.gmra.mrb[0].mxu0 %v5340
      %v5464 = vpop.f32.mrb[0].mxu0
      %v5465 = vadd.f32 0.0, %v5464
      %v5466 = vpop.f32.mrb[0].mxu0
      %v5467 = vpop.f32.mrb[0].mxu0
      %v5468 = vadd.f32 0.0, %v5467
      %v5469 = vpop.f32.mrb[0].mxu0
      %5470 = vmatprep.mubr.bf16.mxu0 0
      %5471 = vmatmul.mubr.bf16.gmra.mrb[0].mxu0 %v5343
      %v5472 = vpop.f32.mrb[0].mxu0
      %v5473 = vadd.f32 0.0, %v5472
      %v5474 = vpop.f32.mrb[0].mxu0
      %v5475 = vpop.f32.mrb[0].mxu0
      %v5476 = vadd.f32 0.0, %v5475
      %v5477 = vpop.f32.mrb[0].mxu0
      %5478 = vmatprep.mubr.bf16.mxu0 0
      %5479 = vmatmul.mubr.bf16.gmra.mrb[0].mxu0 %v5346
      %v5480 = vpop.f32.mrb[0].mxu0
      %v5481 = vadd.f32 0.0, %v5480
      %v5482 = vpop.f32.mrb[0].mxu0
      %v5483 = vpop.f32.mrb[0].mxu0
      %v5484 = vadd.f32 0.0, %v5483
      %v5485 = vpop.f32.mrb[0].mxu0
      %5486 = vmatprep.mubr.bf16.mxu0 0
      %5487 = vmatmul.mubr.bf16.gmra.mrb[0].mxu0 %v5349
      %v5488 = vpop.f32.mrb[0].mxu0
      %v5489 = vadd.f32 0.0, %v5488
      %v5490 = vpop.f32.mrb[0].mxu0
      %v5491 = vpop.f32.mrb[0].mxu0
      %v5492 = vadd.f32 0.0, %v5491
      %v5493 = vpop.f32.mrb[0].mxu0
      %5494 = vmatprep.mubr.bf16.mxu0 0
      %5495 = vmatmul.mubr.bf16.gmra.mrb[0].mxu0 %v5352
      %v5496 = vpop.f32.mrb[0].mxu0
      %v5497 = vadd.f32 0.0, %v5496
      %v5498 = vpop.f32.mrb[0].mxu0
      %v5499 = vpop.f32.mrb[0].mxu0
      %v5500 = vadd.f32 0.0, %v5499
      %v5501 = vpop.f32.mrb[0].mxu0
      %5502 = vmatprep.mubr.bf16.mxu0 0
      %5503 = vmatmul.mubr.bf16.gmra.mrb[0].mxu0 %v5355
      %v5504 = vpop.f32.mrb[0].mxu0
      %v5505 = vadd.f32 0.0, %v5504
      %v5506 = vpop.f32.mrb[0].mxu0
      %v5507 = vpop.f32.mrb[0].mxu0
      %v5508 = vadd.f32 0.0, %v5507
      %v5509 = vpop.f32.mrb[0].mxu0
      %5510 = vmatprep.mubr.bf16.mxu0 0
      %5511 = vmatmul.mubr.bf16.gmra.mrb[0].mxu0 %v5358
      %v5512 = vpop.f32.mrb[0].mxu0
      %v5513 = vadd.f32 0.0, %v5512
      %v5514 = vpop.f32.mrb[0].mxu0
      %v5515 = vpop.f32.mrb[0].mxu0
      %v5516 = vadd.f32 0.0, %v5515
      %v5517 = vpop.f32.mrb[0].mxu0
      %5518 = vmatprep.mubr.bf16.mxu0 0
      %5519 = vmatmul.mubr.bf16.gmra.mrb[0].mxu0 %v5361
      %v5520 = vpop.f32.mrb[0].mxu0
      %v5521 = vadd.f32 0.0, %v5520
      %v5522 = vpop.f32.mrb[0].mxu0
      %v5523 = vpop.f32.mrb[0].mxu0
      %v5524 = vadd.f32 0.0, %v5523
      %v5525 = vpop.f32.mrb[0].mxu0
      %5526 = vdwg.mxu0
      %v5527 = vadd.f32 %v5073, %v5401
      %v5528 = vadd.f32 %v5074, %v5404
      %v5529 = vadd.f32 %v5075, %v5409
      %v5530 = vadd.f32 %v5076, %v5412
      %v5531 = vadd.f32 %v5077, %v5417
      %v5532 = vadd.f32 %v5078, %v5420
      %v5533 = vadd.f32 %v5079, %v5425
      %v5534 = vadd.f32 %v5080, %v5428
      %v5535 = vadd.f32 %v5081, %v5433
      %v5536 = vadd.f32 %v5082, %v5436
      %v5537 = vadd.f32 %v5083, %v5441
      %v5538 = vadd.f32 %v5084, %v5444
      %v5539 = vadd.f32 %v5085, %v5449
      %v5540 = vadd.f32 %v5086, %v5452
      %v5541 = vadd.f32 %v5087, %v5457
      %v5542 = vadd.f32 %v5088, %v5460
      %v5543 = vadd.f32 %v5089, %v5465
      %v5544 = vadd.f32 %v5090, %v5468
      %v5545 = vadd.f32 %v5091, %v5473
      %v5546 = vadd.f32 %v5092, %v5476
      %v5547 = vadd.f32 %v5093, %v5481
      %v5548 = vadd.f32 %v5094, %v5484
      %v5549 = vadd.f32 %v5095, %v5489
      %v5550 = vadd.f32 %v5096, %v5492
      %v5551 = vadd.f32 %v5097, %v5497
      %v5552 = vadd.f32 %v5098, %v5500
      %v5553 = vadd.f32 %v5099, %v5505
      %v5554 = vadd.f32 %v5100, %v5508
      %v5555 = vadd.f32 %v5101, %v5513
      %v5556 = vadd.f32 %v5102, %v5516
      %v5557 = vadd.f32 %v5103, %v5521
      %v5558 = vadd.f32 %v5104, %v5524
      %5559 = vst [vmem:[#allocation2] sm:$0xff] %v5527
      %5560 = vst [vmem:[#allocation2 + $0x8] sm:$0xff] %v5528
      %5561 = vst [vmem:[#allocation2 + $0x10] sm:$0xff] %v5529
      %5562 = vst [vmem:[#allocation2 + $0x18] sm:$0xff] %v5530
      %5563 = vst [vmem:[#allocation2 + $0x20] sm:$0xff] %v5531
      %5564 = vst [vmem:[#allocation2 + $0x28] sm:$0xff] %v5532
      %5565 = vst [vmem:[#allocation2 + $0x30] sm:$0xff] %v5533
      %5566 = vst [vmem:[#allocation2 + $0x38] sm:$0xff] %v5534
      %5567 = vst [vmem:[#allocation2 + $0x40] sm:$0xff] %v5535
      %5568 = vst [vmem:[#allocation2 + $0x48] sm:$0xff] %v5536
      %5569 = vst [vmem:[#allocation2 + $0x50] sm:$0xff] %v5537
      %5570 = vst [vmem:[#allocation2 + $0x58] sm:$0xff] %v5538
      %5571 = vst [vmem:[#allocation2 + $0x60] sm:$0xff] %v5539
      %5572 = vst [vmem:[#allocation2 + $0x68] sm:$0xff] %v5540
      %5573 = vst [vmem:[#allocation2 + $0x70] sm:$0xff] %v5541
      %5574 = vst [vmem:[#allocation2 + $0x78] sm:$0xff] %v5542
      %5575 = vst [vmem:[#allocation2 + $0x80] sm:$0xff] %v5543
      %5576 = vst [vmem:[#allocation2 + $0x88] sm:$0xff] %v5544
      %5577 = vst [vmem:[#allocation2 + $0x90] sm:$0xff] %v5545
      %5578 = vst [vmem:[#allocation2 + $0x98] sm:$0xff] %v5546
      %5579 = vst [vmem:[#allocation2 + $0xa0] sm:$0xff] %v5547
      %5580 = vst [vmem:[#allocation2 + $0xa8] sm:$0xff] %v5548
      %5581 = vst [vmem:[#allocation2 + $0xb0] sm:$0xff] %v5549
      %5582 = vst [vmem:[#allocation2 + $0xb8] sm:$0xff] %v5550
      %5583 = vst [vmem:[#allocation2 + $0xc0] sm:$0xff] %v5551
      %5584 = vst [vmem:[#allocation2 + $0xc8] sm:$0xff] %v5552
      %5585 = vst [vmem:[#allocation2 + $0xd0] sm:$0xff] %v5553
      %5586 = vst [vmem:[#allocation2 + $0xd8] sm:$0xff] %v5554
      %5587 = vst [vmem:[#allocation2 + $0xe0] sm:$0xff] %v5555
      %5588 = vst [vmem:[#allocation2 + $0xe8] sm:$0xff] %v5556
      %5589 = vst [vmem:[#allocation2 + $0xf0] sm:$0xff] %v5557
      %5590 = vst [vmem:[#allocation2 + $0xf8] sm:$0xff] %v5558
      %v5591 = vld [vmem:[#allocation2] sm:$0xff]
      %v5592 = vld [vmem:[#allocation2 + $0x8] sm:$0xff]
      %v5593 = vld [vmem:[#allocation2 + $0x10] sm:$0xff]
      %v5594 = vld [vmem:[#allocation2 + $0x18] sm:$0xff]
      %v5595 = vld [vmem:[#allocation2 + $0x20] sm:$0xff]
      %v5596 = vld [vmem:[#allocation2 + $0x28] sm:$0xff]
      %v5597 = vld [vmem:[#allocation2 + $0x30] sm:$0xff]
      %v5598 = vld [vmem:[#allocation2 + $0x38] sm:$0xff]
      %v5599 = vld [vmem:[#allocation2 + $0x40] sm:$0xff]
      %v5600 = vld [vmem:[#allocation2 + $0x48] sm:$0xff]
      %v5601 = vld [vmem:[#allocation2 + $0x50] sm:$0xff]
      %v5602 = vld [vmem:[#allocation2 + $0x58] sm:$0xff]
      %v5603 = vld [vmem:[#allocation2 + $0x60] sm:$0xff]
      %v5604 = vld [vmem:[#allocation2 + $0x68] sm:$0xff]
      %v5605 = vld [vmem:[#allocation2 + $0x70] sm:$0xff]
      %v5606 = vld [vmem:[#allocation2 + $0x78] sm:$0xff]
      %v5607 = vld [vmem:[#allocation2 + $0x80] sm:$0xff]
      %v5608 = vld [vmem:[#allocation2 + $0x88] sm:$0xff]
      %v5609 = vld [vmem:[#allocation2 + $0x90] sm:$0xff]
      %v5610 = vld [vmem:[#allocation2 + $0x98] sm:$0xff]
      %v5611 = vld [vmem:[#allocation2 + $0xa0] sm:$0xff]
      %v5612 = vld [vmem:[#allocation2 + $0xa8] sm:$0xff]
      %v5613 = vld [vmem:[#allocation2 + $0xb0] sm:$0xff]
      %v5614 = vld [vmem:[#allocation2 + $0xb8] sm:$0xff]
      %v5615 = vld [vmem:[#allocation2 + $0xc0] sm:$0xff]
      %v5616 = vld [vmem:[#allocation2 + $0xc8] sm:$0xff]
      %v5617 = vld [vmem:[#allocation2 + $0xd0] sm:$0xff]
      %v5618 = vld [vmem:[#allocation2 + $0xd8] sm:$0xff]
      %v5619 = vld [vmem:[#allocation2 + $0xe0] sm:$0xff]
      %v5620 = vld [vmem:[#allocation2 + $0xe8] sm:$0xff]
      %v5621 = vld [vmem:[#allocation2 + $0xf0] sm:$0xff]
      %v5622 = vld [vmem:[#allocation2 + $0xf8] sm:$0xff]
      %v5623 = vpack.c.bf16 %v5592, %v5591
      %v5624 = vpack.c.bf16 %v5594, %v5593
      %v5625 = vpack.c.bf16 %v5596, %v5595
      %v5626 = vpack.c.bf16 %v5598, %v5597
      %v5627 = vpack.c.bf16 %v5600, %v5599
      %v5628 = vpack.c.bf16 %v5602, %v5601
      %v5629 = vpack.c.bf16 %v5604, %v5603
      %v5630 = vpack.c.bf16 %v5606, %v5605
      %v5631 = vpack.c.bf16 %v5608, %v5607
      %v5632 = vpack.c.bf16 %v5610, %v5609
      %v5633 = vpack.c.bf16 %v5612, %v5611
      %v5634 = vpack.c.bf16 %v5614, %v5613
      %v5635 = vpack.c.bf16 %v5616, %v5615
      %v5636 = vpack.c.bf16 %v5618, %v5617
      %v5637 = vpack.c.bf16 %v5620, %v5619
      %v5638 = vpack.c.bf16 %v5622, %v5621
      %v5655 = vunpack.c.l.b16 %v5623
      %v5656 = vunpack.c.h.b16 %v5623
      %v5657 = vunpack.c.l.b16 %v5624
      %v5658 = vunpack.c.h.b16 %v5624
      %v5659 = vunpack.c.l.b16 %v5625
      %v5660 = vunpack.c.h.b16 %v5625
      %v5661 = vunpack.c.l.b16 %v5626
      %v5662 = vunpack.c.h.b16 %v5626
      %v5663 = vunpack.c.l.b16 %v5627
      %v5664 = vunpack.c.h.b16 %v5627
      %v5665 = vunpack.c.l.b16 %v5628
      %v5666 = vunpack.c.h.b16 %v5628
      %v5667 = vunpack.c.l.b16 %v5629
      %v5668 = vunpack.c.h.b16 %v5629
      %v5669 = vunpack.c.l.b16 %v5630
      %v5670 = vunpack.c.h.b16 %v5630
      %v5671 = vunpack.c.l.b16 %v5631
      %v5672 = vunpack.c.h.b16 %v5631
      %v5673 = vunpack.c.l.b16 %v5632
      %v5674 = vunpack.c.h.b16 %v5632
      %v5675 = vunpack.c.l.b16 %v5633
      %v5676 = vunpack.c.h.b16 %v5633
      %v5677 = vunpack.c.l.b16 %v5634
      %v5678 = vunpack.c.h.b16 %v5634
      %v5679 = vunpack.c.l.b16 %v5635
      %v5680 = vunpack.c.h.b16 %v5635
      %v5681 = vunpack.c.l.b16 %v5636
      %v5682 = vunpack.c.h.b16 %v5636
      %v5683 = vunpack.c.l.b16 %v5637
      %v5684 = vunpack.c.h.b16 %v5637
      %v5685 = vunpack.c.l.b16 %v5638
      %v5686 = vunpack.c.h.b16 %v5638
      %v5687 = vpack.c.b16 %v5655, %v5655
      %v5688 = vpack.c.b16 %v5656, %v5656
      %v5689 = vpack.c.b16 %v5657, %v5657
      %v5690 = vpack.c.b16 %v5658, %v5658
      %v5691 = vpack.c.b16 %v5659, %v5659
      %v5692 = vpack.c.b16 %v5660, %v5660
      %v5693 = vpack.c.b16 %v5661, %v5661
      %v5694 = vpack.c.b16 %v5662, %v5662
      %v5695 = vpack.c.b16 %v5663, %v5663
      %v5696 = vpack.c.b16 %v5664, %v5664
      %v5697 = vpack.c.b16 %v5665, %v5665
      %v5698 = vpack.c.b16 %v5666, %v5666
      %v5699 = vpack.c.b16 %v5667, %v5667
      %v5700 = vpack.c.b16 %v5668, %v5668
      %v5701 = vpack.c.b16 %v5669, %v5669
      %v5702 = vpack.c.b16 %v5670, %v5670
      %v5703 = vpack.c.b16 %v5671, %v5671
      %v5704 = vpack.c.b16 %v5672, %v5672
      %v5705 = vpack.c.b16 %v5673, %v5673
      %v5706 = vpack.c.b16 %v5674, %v5674
      %v5707 = vpack.c.b16 %v5675, %v5675
      %v5708 = vpack.c.b16 %v5676, %v5676
      %v5709 = vpack.c.b16 %v5677, %v5677
      %v5710 = vpack.c.b16 %v5678, %v5678
      %v5711 = vpack.c.b16 %v5679, %v5679
      %v5712 = vpack.c.b16 %v5680, %v5680
      %v5713 = vpack.c.b16 %v5681, %v5681
      %v5714 = vpack.c.b16 %v5682, %v5682
      %v5715 = vpack.c.b16 %v5683, %v5683
      %v5716 = vpack.c.b16 %v5684, %v5684
      %v5717 = vpack.c.b16 %v5685, %v5685
      %v5718 = vpack.c.b16 %v5686, %v5686
      %5751 = vst [vmem:[%s208] sm:$0xf] %v5687
      %5752 = vst [vmem:[%s208 + $0x4] sm:$0xf] %v5688
      %5753 = vst [vmem:[%s208 + $0x8] sm:$0xf] %v5689
      %5754 = vst [vmem:[%s208 + $0xc] sm:$0xf] %v5690
      %5755 = vst [vmem:[%s208 + $0x10] sm:$0xf] %v5691
      %5756 = vst [vmem:[%s208 + $0x14] sm:$0xf] %v5692
      %5757 = vst [vmem:[%s208 + $0x18] sm:$0xf] %v5693
      %5758 = vst [vmem:[%s208 + $0x1c] sm:$0xf] %v5694
      %5759 = vst [vmem:[%s208 + $0x20] sm:$0xf] %v5695
      %5760 = vst [vmem:[%s208 + $0x24] sm:$0xf] %v5696
      %5761 = vst [vmem:[%s208 + $0x28] sm:$0xf] %v5697
      %5762 = vst [vmem:[%s208 + $0x2c] sm:$0xf] %v5698
      %5763 = vst [vmem:[%s208 + $0x30] sm:$0xf] %v5699
      %5764 = vst [vmem:[%s208 + $0x34] sm:$0xf] %v5700
      %5765 = vst [vmem:[%s208 + $0x38] sm:$0xf] %v5701
      %5766 = vst [vmem:[%s208 + $0x3c] sm:$0xf] %v5702
      %5767 = vst [vmem:[%s208 + $0x40] sm:$0xf] %v5703
      %5768 = vst [vmem:[%s208 + $0x44] sm:$0xf] %v5704
      %5769 = vst [vmem:[%s208 + $0x48] sm:$0xf] %v5705
      %5770 = vst [vmem:[%s208 + $0x4c] sm:$0xf] %v5706
      %5771 = vst [vmem:[%s208 + $0x50] sm:$0xf] %v5707
      %5772 = vst [vmem:[%s208 + $0x54] sm:$0xf] %v5708
      %5773 = vst [vmem:[%s208 + $0x58] sm:$0xf] %v5709
      %5774 = vst [vmem:[%s208 + $0x5c] sm:$0xf] %v5710
      %5775 = vst [vmem:[%s208 + $0x60] sm:$0xf] %v5711
      %5776 = vst [vmem:[%s208 + $0x64] sm:$0xf] %v5712
      %5777 = vst [vmem:[%s208 + $0x68] sm:$0xf] %v5713
      %5778 = vst [vmem:[%s208 + $0x6c] sm:$0xf] %v5714
      %5779 = vst [vmem:[%s208 + $0x70] sm:$0xf] %v5715
      %5780 = vst [vmem:[%s208 + $0x74] sm:$0xf] %v5716
      %5781 = vst [vmem:[%s208 + $0x78] sm:$0xf] %v5717
      %5782 = vst [vmem:[%s208 + $0x7c] sm:$0xf] %v5718
      %v5783 = vadd.f32 %v5591, %v5592
      %v5784 = vadd.f32 %v5783, %v5593
      %v5785 = vadd.f32 %v5784, %v5594
      %v5786 = vadd.f32 %v5785, %v5595
      %v5787 = vadd.f32 %v5786, %v5596
      %v5788 = vadd.f32 %v5787, %v5597
      %v5789 = vadd.f32 %v5788, %v5598
      %v5790 = vadd.f32 %v5789, %v5599
      %v5791 = vadd.f32 %v5790, %v5600
      %v5792 = vadd.f32 %v5791, %v5601
      %v5793 = vadd.f32 %v5792, %v5602
      %v5794 = vadd.f32 %v5793, %v5603
      %v5795 = vadd.f32 %v5794, %v5604
      %v5796 = vadd.f32 %v5795, %v5605
      %v5797 = vadd.f32 %v5796, %v5606
      %v5798 = vadd.f32 %v5797, %v5607
      %v5799 = vadd.f32 %v5798, %v5608
      %v5800 = vadd.f32 %v5799, %v5609
      %v5801 = vadd.f32 %v5800, %v5610
      %v5802 = vadd.f32 %v5801, %v5611
      %v5803 = vadd.f32 %v5802, %v5612
      %v5804 = vadd.f32 %v5803, %v5613
      %v5805 = vadd.f32 %v5804, %v5614
      %v5806 = vadd.f32 %v5805, %v5615
      %v5807 = vadd.f32 %v5806, %v5616
      %v5808 = vadd.f32 %v5807, %v5617
      %v5809 = vadd.f32 %v5808, %v5618
      %v5810 = vadd.f32 %v5809, %v5619
      %v5811 = vadd.f32 %v5810, %v5620
      %v5812 = vadd.f32 %v5811, %v5621
      %v5813 = vadd.f32 %v5812, %v5622
      %v5814 = vrot.slane %v5813, 4
      %v5815 = vadd.f32 %v5813, %v5814
      %v5816 = vrot.slane %v5815, 2
      %v5817 = vadd.f32 %v5815, %v5816
      %v5818 = vrot.slane %v5817, 1
      %v5819 = vadd.f32 %v5817, %v5818
      %5820 = vst [vmem:[%s211] sm:$0x1] %v5819
      %v5821 = vmul.f32 %v5591, %v5591
      %v5822 = vmul.f32 %v5592, %v5592
      %v5823 = vmul.f32 %v5593, %v5593
      %v5824 = vmul.f32 %v5594, %v5594
      %v5825 = vmul.f32 %v5595, %v5595
      %v5826 = vmul.f32 %v5596, %v5596
      %v5827 = vmul.f32 %v5597, %v5597
      %v5828 = vmul.f32 %v5598, %v5598
      %v5829 = vmul.f32 %v5599, %v5599
      %v5830 = vmul.f32 %v5600, %v5600
      %v5831 = vmul.f32 %v5601, %v5601
      %v5832 = vmul.f32 %v5602, %v5602
      %v5833 = vmul.f32 %v5603, %v5603
      %v5834 = vmul.f32 %v5604, %v5604
      %v5835 = vmul.f32 %v5605, %v5605
      %v5836 = vmul.f32 %v5606, %v5606
      %v5837 = vmul.f32 %v5607, %v5607
      %v5838 = vmul.f32 %v5608, %v5608
      %v5839 = vmul.f32 %v5609, %v5609
      %v5840 = vmul.f32 %v5610, %v5610
      %v5841 = vmul.f32 %v5611, %v5611
      %v5842 = vmul.f32 %v5612, %v5612
      %v5843 = vmul.f32 %v5613, %v5613
      %v5844 = vmul.f32 %v5614, %v5614
      %v5845 = vmul.f32 %v5615, %v5615
      %v5846 = vmul.f32 %v5616, %v5616
      %v5847 = vmul.f32 %v5617, %v5617
      %v5848 = vmul.f32 %v5618, %v5618
      %v5849 = vmul.f32 %v5619, %v5619
      %v5850 = vmul.f32 %v5620, %v5620
      %v5851 = vmul.f32 %v5621, %v5621
      %v5852 = vmul.f32 %v5622, %v5622
      %v5853 = vadd.f32 %v5821, %v5822
      %v5854 = vadd.f32 %v5853, %v5823
      %v5855 = vadd.f32 %v5854, %v5824
      %v5856 = vadd.f32 %v5855, %v5825
      %v5857 = vadd.f32 %v5856, %v5826
      %v5858 = vadd.f32 %v5857, %v5827
      %v5859 = vadd.f32 %v5858, %v5828
      %v5860 = vadd.f32 %v5859, %v5829
      %v5861 = vadd.f32 %v5860, %v5830
      %v5862 = vadd.f32 %v5861, %v5831
      %v5863 = vadd.f32 %v5862, %v5832
      %v5864 = vadd.f32 %v5863, %v5833
      %v5865 = vadd.f32 %v5864, %v5834
      %v5866 = vadd.f32 %v5865, %v5835
      %v5867 = vadd.f32 %v5866, %v5836
      %v5868 = vadd.f32 %v5867, %v5837
      %v5869 = vadd.f32 %v5868, %v5838
      %v5870 = vadd.f32 %v5869, %v5839
      %v5871 = vadd.f32 %v5870, %v5840
      %v5872 = vadd.f32 %v5871, %v5841
      %v5873 = vadd.f32 %v5872, %v5842
      %v5874 = vadd.f32 %v5873, %v5843
      %v5875 = vadd.f32 %v5874, %v5844
      %v5876 = vadd.f32 %v5875, %v5845
      %v5877 = vadd.f32 %v5876, %v5846
      %v5878 = vadd.f32 %v5877, %v5847
      %v5879 = vadd.f32 %v5878, %v5848
      %v5880 = vadd.f32 %v5879, %v5849
      %v5881 = vadd.f32 %v5880, %v5850
      %v5882 = vadd.f32 %v5881, %v5851
      %v5883 = vadd.f32 %v5882, %v5852
      %v5884 = vrot.slane %v5883, 4
      %v5885 = vadd.f32 %v5883, %v5884
      %v5886 = vrot.slane %v5885, 2
      %v5887 = vadd.f32 %v5885, %v5886
      %v5888 = vrot.slane %v5887, 1
      %v5889 = vadd.f32 %v5887, %v5888
      %5890 = vst [vmem:[%s214] sm:$0x1] %v5889
      %p5891 = scmp.lt.s32.totalorder %s16, 1
      %s5892 = scalar_select %p5891, %s16, 1
      %s5893 = smul.addr %s5892, 32
      %s5894 = smul.addr %s5893, 4
      %s5895 = scalar_lea.vmem %s2, %s5894
      %p5896 = scmp.lt.s32.totalorder %s16, 1
      %s5897 = scalar_select %p5896, %s16, 1
      %s5898 = scalar_lea.vmem %s3, %s5897
      %p5899 = scmp.lt.s32.totalorder %s16, 1
      %s5900 = scalar_select %p5899, %s16, 1
      %s5901 = scalar_lea.vmem %s4, %s5900
      // Predicated region
      $region29: #{discriminator_block.2} parent=27 // pred_check
        %p5902 = pneg %p81
      $region30: #{discriminator_block.2} parent=27 // pred_check_branch
        %5904 = sbr.rel (%p5902) target = $region32
      $region31: #{discriminator_block.2} parent=27 // pred_region
        _
      $region32: #{discriminator_block.2} parent=27 // pred_fallthru
        _
      // Predicated region
      $region33: #{discriminator_block.2} parent=27 // pred_check
        %p5905 = pneg %p107
      $region34: #{discriminator_block.2} parent=27 // pred_check_branch
        %5907 = sbr.rel (%p5905) target = $region36
      $region35: #{discriminator_block.2} parent=27 // pred_region
        _
      $region36: #{discriminator_block.2} parent=27 // pred_fallthru
        _
      // Predicated region
      $region37: #{discriminator_block.2} parent=27 // pred_check
        %p5908 = pneg %p133
      $region38: #{discriminator_block.2} parent=27 // pred_check_branch
        %5910 = sbr.rel (%p5908) target = $region40
      $region39: #{discriminator_block.2} parent=27 // pred_region
        _
      $region40: #{discriminator_block.2} parent=27 // pred_fallthru
        _
    $region28: #{discriminator_block.2} parent=5 // pred_fallthru
      _
    %p5911 = scmp.le.s32.totalorder 2, %s11
    // Predicated region
    $region41: #{discriminator_block.2} parent=5 // pred_check
      %p5912 = pneg %p5911
    $region42: #{discriminator_block.2} parent=5 // pred_check_branch
      %5914 = sbr.rel (%p5912) target = $region44
    $region43: #{discriminator_block.2} parent=5 // pred_region
      %s5915 = ssub.s32 %s11, 2
      // Predicated region
      $region45: #{discriminator_block.2} parent=43 // pred_check
        %p5916 = pneg %p87
      $region46: #{discriminator_block.2} parent=43 // pred_check_branch
        %5918 = sbr.rel (%p5916) target = $region48
      $region47: #{discriminator_block.2} parent=43 // pred_region
        %p5919 = scmp.lt.s32.totalorder %s17, 1
        %s5920 = scalar_select %p5919, %s17, 1
        %s5921 = smul.addr %s5920, 32
        %s5922 = smul.addr %s5921, 4
        %s5923 = scalar_lea.vmem %s2, %s5922
      $region48: #{discriminator_block.2} parent=43 // pred_fallthru
        _
      // Predicated region
      $region49: #{discriminator_block.2} parent=43 // pred_check
        %p5924 = pneg %p113
      $region50: #{discriminator_block.2} parent=43 // pred_check_branch
        %5926 = sbr.rel (%p5924) target = $region52
      $region51: #{discriminator_block.2} parent=43 // pred_region
        %p5927 = scmp.lt.s32.totalorder %s17, 1
        %s5928 = scalar_select %p5927, %s17, 1
        %s5929 = scalar_lea.vmem %s3, %s5928
      $region52: #{discriminator_block.2} parent=43 // pred_fallthru
        _
      // Predicated region
      $region53: #{discriminator_block.2} parent=43 // pred_check
        %p5930 = pneg %p139
      $region54: #{discriminator_block.2} parent=43 // pred_check_branch
        %5932 = sbr.rel (%p5930) target = $region56
      $region55: #{discriminator_block.2} parent=43 // pred_region
        %p5933 = scmp.lt.s32.totalorder %s17, 1
        %s5934 = scalar_select %p5933, %s17, 1
        %s5935 = scalar_lea.vmem %s4, %s5934
      $region56: #{discriminator_block.2} parent=43 // pred_fallthru
        _
    $region44: #{discriminator_block.2} parent=5 // pred_fallthru
      _
  $region6: #{discriminator_block.2} parent=0 // loop_footer
    %s15 = sadd.s32 1, %s11
  $region7: #{discriminator_block.2} parent=0 // loop_footer_branch
    %10 = sbr.rel target = $region3
  $region8: #{discriminator_block.2} parent=0 // loop_exit
    _

</llo_original>
